<compile_context>
chip_gen: v6e
topology: v6e:2x2x1
jax: 0.10.0
libtpu: 0.0.40
codegen_flags: <defaults>
</compile_context>

<pallas_src>
import jax
import jax.numpy as jnp
from jax.experimental import pallas as pl
from jax.experimental.pallas import tpu as pltpu

IMG_C, IMG_H, IMG_W = 4, 16, 16
LATENT = 32
GENES = 128
_MATMUL_DTYPE = jnp.bfloat16   # MXU operand dtype; accumulation is f32.


# ---------------------------------------------------------------------------
# Parameter init (PyTorch-style layouts)
# ---------------------------------------------------------------------------
def init_params(key):
    ks = jax.random.split(key, 18)
    n = lambda k, shp: (0.1 * jax.random.normal(k, shp)).astype(jnp.float32)
    return {
        # image encoder
        "enc_c1_w": n(ks[0], (8, IMG_C, 3, 3)), "enc_c1_b": n(ks[1], (8,)),
        "enc_c2_w": n(ks[2], (16, 8, 3, 3)),    "enc_c2_b": n(ks[3], (16,)),
        "fc_mu_w": n(ks[4], (16 * 4 * 4, LATENT)), "fc_mu_b": n(ks[5], (LATENT,)),
        "fc_lv_w": n(ks[6], (16 * 4 * 4, LATENT)), "fc_lv_b": n(ks[7], (LATENT,)),
        # image decoder (ConvTranspose2d weight layout: (in, out, kh, kw))
        "dec_t1_w": n(ks[8], (LATENT, 16, 4, 4)), "dec_t1_b": n(ks[9], (16,)),
        "dec_t2_w": n(ks[10], (16, 8, 4, 4)),     "dec_t2_b": n(ks[11], (8,)),
        "dec_t3_w": n(ks[12], (8, IMG_C, 4, 4)),  "dec_t3_b": n(ks[13], (IMG_C,)),
        # genes decoder
        "g_fc1_w": n(ks[14], (LATENT, 64)),  "g_fc1_b": n(ks[15], (64,)),
        "g_fc2_w": n(ks[16], (64, GENES)),   "g_fc2_b": n(ks[17], (GENES,)),
    }


# ---------------------------------------------------------------------------
# One-time, weight-only preprocessing: fold each conv / convT into a 2-D matmul
# ---------------------------------------------------------------------------
def _conv2d_as_matrix(w, b, stride, pad, in_shape):
    """conv(x).reshape(B,-1) == x.reshape(B,-1) @ M + bias_row  (NCHW flatten)."""
    Cin, H, W = in_shape
    basis = jnp.eye(Cin * H * W, dtype=jnp.float32).reshape(Cin * H * W, Cin, H, W)
    resp = jax.lax.conv_general_dilated(
        basis, w.astype(jnp.float32),
        window_strides=(stride, stride),
        padding=[(pad, pad), (pad, pad)],
        dimension_numbers=("NCHW", "OIHW", "NCHW"))
    Cout, OH, OW = resp.shape[1:]
    M = resp.reshape(Cin * H * W, Cout * OH * OW)
    bias_row = jnp.repeat(b, OH * OW).reshape(1, Cout * OH * OW)
    return M, bias_row, (Cout, OH, OW)


def _convT2d_as_matrix(w, b, stride, pad, in_shape):
    """Same for PyTorch ConvTranspose2d (weight (Cin,Cout,kh,kw), output_padding=0)."""
    Cin, H, W = in_shape
    kh = w.shape[2]
    wc = jnp.flip(w, axis=(2, 3)).transpose(1, 0, 2, 3)   # (Cout, Cin, kh, kw)
    basis = jnp.eye(Cin * H * W, dtype=jnp.float32).reshape(Cin * H * W, Cin, H, W)
    resp = jax.lax.conv_general_dilated(
        basis, wc.astype(jnp.float32),
        window_strides=(1, 1),
        padding=[(kh - 1 - pad, kh - 1 - pad)] * 2,
        lhs_dilation=(stride, stride),
        dimension_numbers=("NCHW", "OIHW", "NCHW"))
    Cout, OH, OW = resp.shape[1:]
    M = resp.reshape(Cin * H * W, Cout * OH * OW)
    bias_row = jnp.repeat(b, OH * OW).reshape(1, Cout * OH * OW)
    return M, bias_row, (Cout, OH, OW)


def _quant_int8_per_col(m):
    """Symmetric per-output-column int8 quantization; scale goes to the epilogue."""
    amax = jnp.max(jnp.abs(m), axis=0, keepdims=True)            # (1, N)
    scale = jnp.maximum(amax, 1e-8) / 127.0
    q = jnp.clip(jnp.round(m / scale), -127.0, 127.0).astype(jnp.int8)
    return q, scale.astype(jnp.float32)


def prepare_params(p):
    """Fold every layer into matmul operands (int8 for the two ~1 MiB ones)."""
    m1, b1, s1 = _conv2d_as_matrix(p["enc_c1_w"], p["enc_c1_b"], 2, 1,
                                   (IMG_C, IMG_H, IMG_W))
    m2, b2, _ = _conv2d_as_matrix(p["enc_c2_w"], p["enc_c2_b"], 2, 1, s1)
    # dec_t1 acts on a 1x1 spatial input -> plain linear z @ w.reshape(32, 256).
    kh, kw = p["dec_t1_w"].shape[2], p["dec_t1_w"].shape[3]
    d1 = p["dec_t1_w"].reshape(LATENT, -1)
    d1_b = jnp.repeat(p["dec_t1_b"], kh * kw).reshape(1, -1)
    d2, d2_b, sd2 = _convT2d_as_matrix(p["dec_t2_w"], p["dec_t2_b"], 2, 1, (16, 4, 4))
    d3, d3_b, _ = _convT2d_as_matrix(p["dec_t3_w"], p["dec_t3_b"], 2, 1, sd2)

    # fc_mu / fc_lv merged: one (256, 64) weight, one (1, 64) bias, one dot.
    mulv_w = jnp.concatenate([p["fc_mu_w"], p["fc_lv_w"]], axis=1)
    mulv_b = jnp.concatenate([p["fc_mu_b"], p["fc_lv_b"]]).reshape(1, -1)

    # The two ~1 MiB folded weights go to int8 (halves dominant weight DMA).
    enc1_q, enc1_s = _quant_int8_per_col(m1)        # (1024, 512) int8
    dec3_q, dec3_s = _quant_int8_per_col(d3)        # (512, 1024) int8

    w = lambda m: m.astype(_MATMUL_DTYPE)
    f32 = lambda v: v.astype(jnp.float32)
    return {
        "enc1_wq": enc1_q, "enc1_s": enc1_s, "enc1_b": f32(b1),
        "enc2_w": w(m2), "enc2_b": f32(b2),
        "mulv_w": w(mulv_w), "mulv_b": f32(mulv_b),
        "dec1_w": w(d1), "dec1_b": f32(d1_b),
        "dec2_w": w(d2), "dec2_b": f32(d2_b),
        "dec3_wq": dec3_q, "dec3_s": dec3_s, "dec3_b": f32(d3_b),
        "g1_w": w(p["g_fc1_w"]), "g1_b": f32(p["g_fc1_b"].reshape(1, -1)),
        "g2_w": w(p["g_fc2_w"]), "g2_b": f32(p["g_fc2_b"].reshape(1, -1)),
    }


# ---------------------------------------------------------------------------
# The single fused Pallas kernel (no grid: everything VMEM-resident once)
# ---------------------------------------------------------------------------
def _dvcca_fused_kernel(
    x1_ref, eps_ref,
    enc1_wq_ref, enc1_s_ref, enc1_b_ref,
    enc2_w_ref, enc2_b_ref,
    mulv_w_ref, mulv_b_ref,
    dec1_w_ref, dec1_b_ref, dec2_w_ref, dec2_b_ref,
    dec3_wq_ref, dec3_s_ref, dec3_b_ref,
    g1_w_ref, g1_b_ref, g2_w_ref, g2_b_ref,
    x1r_ref, x2r_ref, mulv_ref,
):
    def dense(x_bf16, w_bf16, b_f32, act=None, out_dtype=jnp.float32, scale=None):
        # bf16 operands -> MXU, f32 accumulation, f32 epilogue (v5e-safe:
        # bias / scale / relu / sigmoid all stay f32 on the VPU/EUP).
        y = jnp.dot(x_bf16, w_bf16, preferred_element_type=jnp.float32)
        if scale is not None:
            y = y * scale                      # per-output-column dequant scale
        y = y + b_f32
        if act == "relu":
            y = jnp.maximum(y, 0.0)
        elif act == "sigmoid":
            y = jax.nn.sigmoid(y)
        return y.astype(out_dtype)

    x1 = x1_ref[...]                                        # (B, 1024) bf16
    eps = eps_ref[...]                                      # (B, 64)   f32

    # ---- image encoder (convs folded to dense layers, NCHW-flat order) ----
    h = dense(x1, enc1_wq_ref[...].astype(_MATMUL_DTYPE),   # int8 -> bf16 (exact)
              enc1_b_ref[...], "relu", _MATMUL_DTYPE, scale=enc1_s_ref[...])
    h = dense(h, enc2_w_ref[...], enc2_b_ref[...], "relu", _MATMUL_DTYPE)
    mulv = dense(h, mulv_w_ref[...], mulv_b_ref[...])       # (B, 64) f32 = [mu | logvar]
    mu = mulv[:, :LATENT]
    log_var = mulv[:, LATENT:]

    # ---- reparameterize twice, sharing one exp(0.5*logvar) ----
    std = jnp.exp(0.5 * log_var)
    z1 = (mu + eps[:, :LATENT] * std).astype(_MATMUL_DTYPE)
    z2 = (mu + eps[:, LATENT:] * std).astype(_MATMUL_DTYPE)

    # ---- image decoder ----
    d = dense(z1, dec1_w_ref[...], dec1_b_ref[...], "relu", _MATMUL_DTYPE)   # ConvT@1x1 == linear
    d = dense(d, dec2_w_ref[...], dec2_b_ref[...], "relu", _MATMUL_DTYPE)
    d = dense(d, dec3_wq_ref[...].astype(_MATMUL_DTYPE),
              dec3_b_ref[...], "sigmoid", jnp.float32, scale=dec3_s_ref[...])  # (B, 1024)

    # ---- genes decoder ----
    g = dense(z2, g1_w_ref[...], g1_b_ref[...], "relu", _MATMUL_DTYPE)
    g = dense(g, g2_w_ref[...], g2_b_ref[...], "sigmoid", jnp.float32)         # (B, 128)

    # Lane-dense stores: 1024-, 128- and 64-lane unmasked vst.
    x1r_ref[...] = d
    x2r_ref[...] = g
    mulv_ref[...] = mulv


def dvcca_forward(prep, x, eps1, eps2):
    """x = (x1, x2); training-mode forward (eps supplied for reparameterize)."""
    x1, _x2 = x
    B = x1.shape[0]
    # NCHW row-major flatten matches the folded weights; bf16 halves input DMA
    # and removes the in-kernel cast (the first dot needs bf16 anyway).
    x1_flat = x1.reshape(B, -1).astype(_MATMUL_DTYPE)
    eps = jnp.concatenate([eps1, eps2], axis=-1)            # (B, 64) f32, one DMA

    args = (
        x1_flat, eps,
        prep["enc1_wq"], prep["enc1_s"], prep["enc1_b"],
        prep["enc2_w"], prep["enc2_b"],
        prep["mulv_w"], prep["mulv_b"],
        prep["dec1_w"], prep["dec1_b"], prep["dec2_w"], prep["dec2_b"],
        prep["dec3_wq"], prep["dec3_s"], prep["dec3_b"],
        prep["g1_w"], prep["g1_b"], prep["g2_w"], prep["g2_b"],
    )
    out_shapes = (
        jax.ShapeDtypeStruct((B, IMG_C * IMG_H * IMG_W), jnp.float32),  # x1r flat
        jax.ShapeDtypeStruct((B, GENES), jnp.float32),                  # x2r
        jax.ShapeDtypeStruct((B, 2 * LATENT), jnp.float32),             # packed mu|logvar
    )
    vmem = pl.BlockSpec(memory_space=pltpu.MemorySpace.VMEM)
    x1r_flat, x2r, mulv = pl.pallas_call(
        _dvcca_fused_kernel,
        out_shape=out_shapes,
        in_specs=[vmem] * len(args),
        out_specs=(vmem, vmem, vmem),
    )(*args)

    x1r = x1r_flat.reshape(B, IMG_C, IMG_H, IMG_W)   # row-major => free reshape
    mu = mulv[:, :LATENT]
    log_var = mulv[:, LATENT:]
    return x1r, x2r, mu, log_var


# ---------------------------------------------------------------------------
# Pure-JAX reference (original PyTorch-layout weights) for correctness check
# ---------------------------------------------------------------------------
def _ref_conv(x, w, b, stride, pad):
    y = jax.lax.conv_general_dilated(
        x, w, (stride, stride), [(pad, pad), (pad, pad)],
        dimension_numbers=("NCHW", "OIHW", "NCHW"))
    return y + b.reshape(1, -1, 1, 1)


def _ref_convT(x, w, b, stride, pad):
    kh = w.shape[2]
    wc = jnp.flip(w, axis=(2, 3)).transpose(1, 0, 2, 3)
    y = jax.lax.conv_general_dilated(
        x, wc, (1, 1), [(kh - 1 - pad, kh - 1 - pad)] * 2,
        lhs_dilation=(stride, stride),
        dimension_numbers=("NCHW", "OIHW", "NCHW"))
    return y + b.reshape(1, -1, 1, 1)


def reference_forward(p, x, eps1, eps2):
    x1, _x2 = x
    B = x1.shape[0]
    h = jax.nn.relu(_ref_conv(x1, p["enc_c1_w"], p["enc_c1_b"], 2, 1))
    h = jax.nn.relu(_ref_conv(h, p["enc_c2_w"], p["enc_c2_b"], 2, 1))
    h = h.reshape(B, -1)
    mu = h @ p["fc_mu_w"] + p["fc_mu_b"]
    log_var = h @ p["fc_lv_w"] + p["fc_lv_b"]
    std = jnp.exp(0.5 * log_var)
    z1 = mu + eps1 * std
    z2 = mu + eps2 * std
    d = jax.nn.relu(_ref_convT(z1[:, :, None, None], p["dec_t1_w"], p["dec_t1_b"], 1, 0))
    d = jax.nn.relu(_ref_convT(d, p["dec_t2_w"], p["dec_t2_b"], 2, 1))
    x1r = jax.nn.sigmoid(_ref_convT(d, p["dec_t3_w"], p["dec_t3_b"], 2, 1))
    g = jax.nn.relu(z2 @ p["g_fc1_w"] + p["g_fc1_b"])
    x2r = jax.nn.sigmoid(g @ p["g_fc2_w"] + p["g_fc2_b"])
    return x1r, x2r, mu, log_var


if __name__ == "__main__":
    key = jax.random.PRNGKey(0)
    kp, kx1, kx2, ke1, ke2 = jax.random.split(key, 5)

    params = init_params(kp)
    prep = prepare_params(params)        # one-time weight folding + int8 quant

    B = 2
    x1 = jax.random.normal(kx1, (B, IMG_C, IMG_H, IMG_W), dtype=jnp.float32)
    x2 = jax.random.normal(kx2, (B, GENES), dtype=jnp.float32)   # unused by forward
    eps1 = jax.random.normal(ke1, (B, LATENT), dtype=jnp.float32)
    eps2 = jax.random.normal(ke2, (B, LATENT), dtype=jnp.float32)

    fwd = jax.jit(dvcca_forward)
    x1r, x2r, mu, log_var = fwd(prep, (x1, x2), eps1, eps2)
    jax.block_until_ready((x1r, x2r, mu, log_var))

    assert x1r.shape == (B, IMG_C, IMG_H, IMG_W)
    assert x2r.shape == (B, GENES)
    assert mu.shape == (B, LATENT) and log_var.shape == (B, LATENT)

    # Correctness vs. pure-JAX reference (loose tolerance: bf16 matmul operands
    # + int8 per-column weights for the two large folded convs).
    r1, r2, rmu, rlv = jax.jit(reference_forward)(params, (x1, x2), eps1, eps2)
    assert bool(jnp.allclose(x1r, r1, atol=5e-2, rtol=5e-2))
    assert bool(jnp.allclose(x2r, r2, atol=5e-2, rtol=5e-2))
    assert bool(jnp.allclose(mu, rmu, atol=5e-2, rtol=5e-2))
    assert bool(jnp.allclose(log_var, rlv, atol=5e-2, rtol=5e-2))

    print("KERNEL_OK")
</pallas_src>

<mosaic_0001>
module attributes {stable_mosaic.version = 11 : i64} {
  func.func @_dvcca_fused_kernel(%arg0: memref<2x1024xbf16, #tpu.memory_space<vmem>>, %arg1: memref<2x64xf32, #tpu.memory_space<vmem>>, %arg2: memref<1024x512xi8, #tpu.memory_space<vmem>>, %arg3: memref<1x512xf32, #tpu.memory_space<vmem>>, %arg4: memref<1x512xf32, #tpu.memory_space<vmem>>, %arg5: memref<512x256xbf16, #tpu.memory_space<vmem>>, %arg6: memref<1x256xf32, #tpu.memory_space<vmem>>, %arg7: memref<256x64xbf16, #tpu.memory_space<vmem>>, %arg8: memref<1x64xf32, #tpu.memory_space<vmem>>, %arg9: memref<32x256xbf16, #tpu.memory_space<vmem>>, %arg10: memref<1x256xf32, #tpu.memory_space<vmem>>, %arg11: memref<256x512xbf16, #tpu.memory_space<vmem>>, %arg12: memref<1x512xf32, #tpu.memory_space<vmem>>, %arg13: memref<512x1024xi8, #tpu.memory_space<vmem>>, %arg14: memref<1x1024xf32, #tpu.memory_space<vmem>>, %arg15: memref<1x1024xf32, #tpu.memory_space<vmem>>, %arg16: memref<32x64xbf16, #tpu.memory_space<vmem>>, %arg17: memref<1x64xf32, #tpu.memory_space<vmem>>, %arg18: memref<64x128xbf16, #tpu.memory_space<vmem>>, %arg19: memref<1x128xf32, #tpu.memory_space<vmem>>, %arg20: memref<2x1024xf32, #tpu.memory_space<vmem>>, %arg21: memref<2x128xf32, #tpu.memory_space<vmem>>, %arg22: memref<2x64xf32, #tpu.memory_space<vmem>>) attributes {dimension_semantics = [], scalar_prefetch = 0 : i64, scratch_operands = 0 : i64, tpu.core_type = #tpu.core_type<tc>} {
    %c0 = arith.constant 0 : index
    %c0_0 = arith.constant 0 : index
    %0 = vector.load %arg0[%c0, %c0_0] : memref<2x1024xbf16, #tpu.memory_space<vmem>>, vector<2x1024xbf16>
    %c0_1 = arith.constant 0 : index
    %c0_2 = arith.constant 0 : index
    %1 = vector.load %arg1[%c0_1, %c0_2] : memref<2x64xf32, #tpu.memory_space<vmem>>, vector<2x64xf32>
    %c0_3 = arith.constant 0 : index
    %c0_4 = arith.constant 0 : index
    %2 = vector.load %arg2[%c0_3, %c0_4] : memref<1024x512xi8, #tpu.memory_space<vmem>>, vector<1024x512xi8>
    %3 = arith.sitofp %2 : vector<1024x512xi8> to vector<1024x512xbf16>
    %c0_5 = arith.constant 0 : index
    %c0_6 = arith.constant 0 : index
    %4 = vector.load %arg4[%c0_5, %c0_6] : memref<1x512xf32, #tpu.memory_space<vmem>>, vector<1x512xf32>
    %c0_7 = arith.constant 0 : index
    %c0_8 = arith.constant 0 : index
    %5 = vector.load %arg3[%c0_7, %c0_8] : memref<1x512xf32, #tpu.memory_space<vmem>>, vector<1x512xf32>
    %cst = arith.constant dense<0.000000e+00> : vector<2x512xf32>
    %6 = tpu.matmul %0, %3, %cst {dimension_numbers = #tpu.dot_dimension_numbers<[1], [0], [0], [1], [0, 0, 1, 1], [], []>} : vector<2x1024xbf16>, vector<1024x512xbf16>, vector<2x512xf32> -> vector<2x512xf32>
    %7 = vector.broadcast %5 : vector<1x512xf32> to vector<2x512xf32>
    %8 = arith.mulf %6, %7 : vector<2x512xf32>
    %9 = vector.broadcast %4 : vector<1x512xf32> to vector<2x512xf32>
    %10 = arith.addf %8, %9 : vector<2x512xf32>
    %cst_9 = arith.constant 0.000000e+00 : f32
    %11 = vector.broadcast %cst_9 : f32 to vector<2x512xf32>
    %12 = arith.maximumf %10, %11 : vector<2x512xf32>
    %13 = arith.truncf %12 : vector<2x512xf32> to vector<2x512xbf16>
    %c0_10 = arith.constant 0 : index
    %c0_11 = arith.constant 0 : index
    %14 = vector.load %arg5[%c0_10, %c0_11] : memref<512x256xbf16, #tpu.memory_space<vmem>>, vector<512x256xbf16>
    %c0_12 = arith.constant 0 : index
    %c0_13 = arith.constant 0 : index
    %15 = vector.load %arg6[%c0_12, %c0_13] : memref<1x256xf32, #tpu.memory_space<vmem>>, vector<1x256xf32>
    %cst_14 = arith.constant dense<0.000000e+00> : vector<2x256xf32>
    %16 = tpu.matmul %13, %14, %cst_14 {dimension_numbers = #tpu.dot_dimension_numbers<[1], [0], [0], [1], [0, 0, 1, 1], [], []>} : vector<2x512xbf16>, vector<512x256xbf16>, vector<2x256xf32> -> vector<2x256xf32>
    %17 = vector.broadcast %15 : vector<1x256xf32> to vector<2x256xf32>
    %18 = arith.addf %16, %17 : vector<2x256xf32>
    %cst_15 = arith.constant 0.000000e+00 : f32
    %19 = vector.broadcast %cst_15 : f32 to vector<2x256xf32>
    %20 = arith.maximumf %18, %19 : vector<2x256xf32>
    %21 = arith.truncf %20 : vector<2x256xf32> to vector<2x256xbf16>
    %c0_16 = arith.constant 0 : index
    %c0_17 = arith.constant 0 : index
    %22 = vector.load %arg7[%c0_16, %c0_17] : memref<256x64xbf16, #tpu.memory_space<vmem>>, vector<256x64xbf16>
    %c0_18 = arith.constant 0 : index
    %c0_19 = arith.constant 0 : index
    %23 = vector.load %arg8[%c0_18, %c0_19] : memref<1x64xf32, #tpu.memory_space<vmem>>, vector<1x64xf32>
    %cst_20 = arith.constant dense<0.000000e+00> : vector<2x64xf32>
    %24 = tpu.matmul %21, %22, %cst_20 {dimension_numbers = #tpu.dot_dimension_numbers<[1], [0], [0], [1], [0, 0, 1, 1], [], []>} : vector<2x256xbf16>, vector<256x64xbf16>, vector<2x64xf32> -> vector<2x64xf32>
    %25 = vector.broadcast %23 : vector<1x64xf32> to vector<2x64xf32>
    %26 = arith.addf %24, %25 : vector<2x64xf32>
    %27 = vector.extract_strided_slice %26 {offsets = [0, 0], sizes = [2, 32], strides = [1, 1]} : vector<2x64xf32> to vector<2x32xf32>
    %28 = vector.extract_strided_slice %26 {offsets = [0, 32], sizes = [2, 32], strides = [1, 1]} : vector<2x64xf32> to vector<2x32xf32>
    %cst_21 = arith.constant 5.000000e-01 : f32
    %29 = vector.broadcast %cst_21 : f32 to vector<2x32xf32>
    %30 = arith.mulf %29, %28 : vector<2x32xf32>
    %31 = math.exp %30 : vector<2x32xf32>
    %32 = vector.extract_strided_slice %1 {offsets = [0, 0], sizes = [2, 32], strides = [1, 1]} : vector<2x64xf32> to vector<2x32xf32>
    %33 = arith.mulf %32, %31 : vector<2x32xf32>
    %34 = arith.addf %27, %33 : vector<2x32xf32>
    %35 = arith.truncf %34 : vector<2x32xf32> to vector<2x32xbf16>
    %36 = vector.extract_strided_slice %1 {offsets = [0, 32], sizes = [2, 32], strides = [1, 1]} : vector<2x64xf32> to vector<2x32xf32>
    %37 = arith.mulf %36, %31 : vector<2x32xf32>
    %38 = arith.addf %27, %37 : vector<2x32xf32>
    %39 = arith.truncf %38 : vector<2x32xf32> to vector<2x32xbf16>
    %c0_22 = arith.constant 0 : index
    %c0_23 = arith.constant 0 : index
    %40 = vector.load %arg9[%c0_22, %c0_23] : memref<32x256xbf16, #tpu.memory_space<vmem>>, vector<32x256xbf16>
    %c0_24 = arith.constant 0 : index
    %c0_25 = arith.constant 0 : index
    %41 = vector.load %arg10[%c0_24, %c0_25] : memref<1x256xf32, #tpu.memory_space<vmem>>, vector<1x256xf32>
    %cst_26 = arith.constant dense<0.000000e+00> : vector<2x256xf32>
    %42 = tpu.matmul %35, %40, %cst_26 {dimension_numbers = #tpu.dot_dimension_numbers<[1], [0], [0], [1], [0, 0, 1, 1], [], []>} : vector<2x32xbf16>, vector<32x256xbf16>, vector<2x256xf32> -> vector<2x256xf32>
    %43 = vector.broadcast %41 : vector<1x256xf32> to vector<2x256xf32>
    %44 = arith.addf %42, %43 : vector<2x256xf32>
    %cst_27 = arith.constant 0.000000e+00 : f32
    %45 = vector.broadcast %cst_27 : f32 to vector<2x256xf32>
    %46 = arith.maximumf %44, %45 : vector<2x256xf32>
    %47 = arith.truncf %46 : vector<2x256xf32> to vector<2x256xbf16>
    %c0_28 = arith.constant 0 : index
    %c0_29 = arith.constant 0 : index
    %48 = vector.load %arg11[%c0_28, %c0_29] : memref<256x512xbf16, #tpu.memory_space<vmem>>, vector<256x512xbf16>
    %c0_30 = arith.constant 0 : index
    %c0_31 = arith.constant 0 : index
    %49 = vector.load %arg12[%c0_30, %c0_31] : memref<1x512xf32, #tpu.memory_space<vmem>>, vector<1x512xf32>
    %cst_32 = arith.constant dense<0.000000e+00> : vector<2x512xf32>
    %50 = tpu.matmul %47, %48, %cst_32 {dimension_numbers = #tpu.dot_dimension_numbers<[1], [0], [0], [1], [0, 0, 1, 1], [], []>} : vector<2x256xbf16>, vector<256x512xbf16>, vector<2x512xf32> -> vector<2x512xf32>
    %51 = vector.broadcast %49 : vector<1x512xf32> to vector<2x512xf32>
    %52 = arith.addf %50, %51 : vector<2x512xf32>
    %cst_33 = arith.constant 0.000000e+00 : f32
    %53 = vector.broadcast %cst_33 : f32 to vector<2x512xf32>
    %54 = arith.maximumf %52, %53 : vector<2x512xf32>
    %55 = arith.truncf %54 : vector<2x512xf32> to vector<2x512xbf16>
    %c0_34 = arith.constant 0 : index
    %c0_35 = arith.constant 0 : index
    %56 = vector.load %arg13[%c0_34, %c0_35] : memref<512x1024xi8, #tpu.memory_space<vmem>>, vector<512x1024xi8>
    %57 = arith.sitofp %56 : vector<512x1024xi8> to vector<512x1024xbf16>
    %c0_36 = arith.constant 0 : index
    %c0_37 = arith.constant 0 : index
    %58 = vector.load %arg15[%c0_36, %c0_37] : memref<1x1024xf32, #tpu.memory_space<vmem>>, vector<1x1024xf32>
    %c0_38 = arith.constant 0 : index
    %c0_39 = arith.constant 0 : index
    %59 = vector.load %arg14[%c0_38, %c0_39] : memref<1x1024xf32, #tpu.memory_space<vmem>>, vector<1x1024xf32>
    %cst_40 = arith.constant dense<0.000000e+00> : vector<2x1024xf32>
    %60 = tpu.matmul %55, %57, %cst_40 {dimension_numbers = #tpu.dot_dimension_numbers<[1], [0], [0], [1], [0, 0, 1, 1], [], []>} : vector<2x512xbf16>, vector<512x1024xbf16>, vector<2x1024xf32> -> vector<2x1024xf32>
    %61 = vector.broadcast %59 : vector<1x1024xf32> to vector<2x1024xf32>
    %62 = arith.mulf %60, %61 : vector<2x1024xf32>
    %63 = vector.broadcast %58 : vector<1x1024xf32> to vector<2x1024xf32>
    %64 = arith.addf %62, %63 : vector<2x1024xf32>
    %65 = arith.negf %64 : vector<2x1024xf32>
    %66 = math.exp %65 : vector<2x1024xf32>
    %cst_41 = arith.constant 1.000000e+00 : f32
    %67 = vector.broadcast %cst_41 : f32 to vector<2x1024xf32>
    %68 = arith.addf %67, %66 : vector<2x1024xf32>
    %69 = arith.divf %67, %68 : vector<2x1024xf32>
    %c0_42 = arith.constant 0 : index
    %c0_43 = arith.constant 0 : index
    %70 = vector.load %arg16[%c0_42, %c0_43] : memref<32x64xbf16, #tpu.memory_space<vmem>>, vector<32x64xbf16>
    %c0_44 = arith.constant 0 : index
    %c0_45 = arith.constant 0 : index
    %71 = vector.load %arg17[%c0_44, %c0_45] : memref<1x64xf32, #tpu.memory_space<vmem>>, vector<1x64xf32>
    %cst_46 = arith.constant dense<0.000000e+00> : vector<2x64xf32>
    %72 = tpu.matmul %39, %70, %cst_46 {dimension_numbers = #tpu.dot_dimension_numbers<[1], [0], [0], [1], [0, 0, 1, 1], [], []>} : vector<2x32xbf16>, vector<32x64xbf16>, vector<2x64xf32> -> vector<2x64xf32>
    %73 = vector.broadcast %71 : vector<1x64xf32> to vector<2x64xf32>
    %74 = arith.addf %72, %73 : vector<2x64xf32>
    %cst_47 = arith.constant 0.000000e+00 : f32
    %75 = vector.broadcast %cst_47 : f32 to vector<2x64xf32>
    %76 = arith.maximumf %74, %75 : vector<2x64xf32>
    %77 = arith.truncf %76 : vector<2x64xf32> to vector<2x64xbf16>
    %c0_48 = arith.constant 0 : index
    %c0_49 = arith.constant 0 : index
    %78 = vector.load %arg18[%c0_48, %c0_49] : memref<64x128xbf16, #tpu.memory_space<vmem>>, vector<64x128xbf16>
    %c0_50 = arith.constant 0 : index
    %c0_51 = arith.constant 0 : index
    %79 = vector.load %arg19[%c0_50, %c0_51] : memref<1x128xf32, #tpu.memory_space<vmem>>, vector<1x128xf32>
    %cst_52 = arith.constant dense<0.000000e+00> : vector<2x128xf32>
    %80 = tpu.matmul %77, %78, %cst_52 {dimension_numbers = #tpu.dot_dimension_numbers<[1], [0], [0], [1], [0, 0, 1, 1], [], []>} : vector<2x64xbf16>, vector<64x128xbf16>, vector<2x128xf32> -> vector<2x128xf32>
    %81 = vector.broadcast %79 : vector<1x128xf32> to vector<2x128xf32>
    %82 = arith.addf %80, %81 : vector<2x128xf32>
    %83 = arith.negf %82 : vector<2x128xf32>
    %84 = math.exp %83 : vector<2x128xf32>
    %cst_53 = arith.constant 1.000000e+00 : f32
    %85 = vector.broadcast %cst_53 : f32 to vector<2x128xf32>
    %86 = arith.addf %85, %84 : vector<2x128xf32>
    %87 = arith.divf %85, %86 : vector<2x128xf32>
    %c0_54 = arith.constant 0 : index
    %c0_55 = arith.constant 0 : index
    %88 = vector.load %arg20[%c0_54, %c0_55] : memref<2x1024xf32, #tpu.memory_space<vmem>>, vector<2x1024xf32>
    tpu.vector_store %arg20[%c0_54, %c0_55], %69 {strides = array<i32>} : memref<2x1024xf32, #tpu.memory_space<vmem>>, vector<2x1024xf32>,
    %c0_56 = arith.constant 0 : index
    %c0_57 = arith.constant 0 : index
    %89 = vector.load %arg21[%c0_56, %c0_57] : memref<2x128xf32, #tpu.memory_space<vmem>>, vector<2x128xf32>
    tpu.vector_store %arg21[%c0_56, %c0_57], %87 {strides = array<i32>} : memref<2x128xf32, #tpu.memory_space<vmem>>, vector<2x128xf32>,
    %c0_58 = arith.constant 0 : index
    %c0_59 = arith.constant 0 : index
    %90 = vector.load %arg22[%c0_58, %c0_59] : memref<2x64xf32, #tpu.memory_space<vmem>>, vector<2x64xf32>
    tpu.vector_store %arg22[%c0_58, %c0_59], %26 {strides = array<i32>} : memref<2x64xf32, #tpu.memory_space<vmem>>, vector<2x64xf32>,
    return
  }
}

</mosaic_0001>

<llo_original>
// kernel: dvcca_forward.1
$region0: #{dvcca_forward.1}
  #allocation0 [shape = 'u32[]', space=smem, size = 0x4, offset = 0x4, fixed_abs, tag = 'smem constant byte address 0x4 - core index']
  #allocation1 [shape = 'u32[144,128]{1,0:T(1,128)}', space=vmem, size = 0x12000, scoped, tag = 'internal scratch']
  %s0 = inlined_call_operand.vmem [shape: bf16[2,1024], index: 0, kind: input, shape index: {}]
  %s1 = inlined_call_operand.vmem [shape: f32[2,64], index: 1, kind: input, shape index: {}]
  %s2 = inlined_call_operand.hbm [shape: s8[1024,512], index: 2, kind: input, shape index: {}]
  %s3 = inlined_call_operand.vmem [shape: f32[1,512], index: 3, kind: input, shape index: {}]
  %s4 = inlined_call_operand.vmem [shape: f32[1,512], index: 4, kind: input, shape index: {}]
  %s5 = inlined_call_operand.hbm [shape: bf16[512,256], index: 5, kind: input, shape index: {}]
  %s6 = inlined_call_operand.vmem [shape: f32[1,256], index: 6, kind: input, shape index: {}]
  %s7 = inlined_call_operand.vmem [shape: bf16[256,64], index: 7, kind: input, shape index: {}]
  %s8 = inlined_call_operand.vmem [shape: f32[1,64], index: 8, kind: input, shape index: {}]
  %s9 = inlined_call_operand.vmem [shape: bf16[32,256], index: 9, kind: input, shape index: {}]
  %s10 = inlined_call_operand.vmem [shape: f32[1,256], index: 10, kind: input, shape index: {}]
  %s11 = inlined_call_operand.hbm [shape: bf16[256,512], index: 11, kind: input, shape index: {}]
  %s12 = inlined_call_operand.vmem [shape: f32[1,512], index: 12, kind: input, shape index: {}]
  %s13 = inlined_call_operand.hbm [shape: s8[512,1024], index: 13, kind: input, shape index: {}]
  %s14 = inlined_call_operand.vmem [shape: f32[1,1024], index: 14, kind: input, shape index: {}]
  %s15 = inlined_call_operand.vmem [shape: f32[1,1024], index: 15, kind: input, shape index: {}]
  %s16 = inlined_call_operand.vmem [shape: bf16[32,64], index: 16, kind: input, shape index: {}]
  %s17 = inlined_call_operand.vmem [shape: f32[1,64], index: 17, kind: input, shape index: {}]
  %s18 = inlined_call_operand.vmem [shape: bf16[64,128], index: 18, kind: input, shape index: {}]
  %s19 = inlined_call_operand.vmem [shape: f32[1,128], index: 19, kind: input, shape index: {}]
  %s20 = inlined_call_operand.vmem [shape: f32[2,1024], index: 20, kind: output, shape index: {0}]
  %s21 = inlined_call_operand.hbm [shape: f32[2,128], index: 21, kind: output, shape index: {1}]
  %s22 = inlined_call_operand.vmem [shape: f32[2,64], index: 22, kind: output, shape index: {2}]
  %23 = xla_tuple %s20, %s21, %s22
  %s24 = sld [smem:[#allocation0]]
  $region122: #{dvcca_forward.1} parent=0
    _
  %s26 = ssub.s32 1, %s24
  %s27 = scalar_select 0, %s26, %s24
  $region1: #{dvcca_forward.1} parent=0
    #allocation2 [shape = 'u8[524288]{0}', space=vmem, size = 0x80000, scoped, tag = 'input window, operand 2, single buffered']
    #allocation3 [shape = 's32[1]{0}', space=sflag, size = 0x4, scoped, tag = 'scoped memory for dvcca_forward.1']
    #allocation4 [shape = 's32[1]{0}', space=sflag, size = 0x4, scoped, tag = 'scoped memory for dvcca_forward.1']
    #allocation5 [shape = 'u8[262144]{0}', space=vmem, size = 0x40000, scoped, tag = 'input window, operand 5, single buffered']
    #allocation6 [shape = 's32[1]{0}', space=sflag, size = 0x4, scoped, tag = 'scoped memory for dvcca_forward.1']
    #allocation7 [shape = 'u8[262144]{0}', space=vmem, size = 0x40000, scoped, tag = 'input window, operand 11, single buffered']
    #allocation8 [shape = 'u8[524288]{0}', space=vmem, size = 0x80000, scoped, tag = 'input window, operand 13, single buffered']
    #allocation9 [shape = 's32[1]{0}', space=sflag, size = 0x4, scoped, tag = 'scoped memory for dvcca_forward.1']
    #allocation10 [shape = 'u8[1024]{0}', space=vmem, size = 0x400, scoped, tag = 'output window, operand 1, single buffered']
    %28 = vsyncpa [#allocation3], 0
    %29 = vsyncpa [#allocation6], 0
    %30 = vsyncpa [#allocation9], 0
    %31 = vsyncpa [#allocation4], 0
    // Predicated region
    $region2: #{dvcca_forward.1} parent=1 // pred_check
      _
    $region3: #{dvcca_forward.1} parent=1 // pred_check_branch
      %33 = sbr.rel (0) target = $region5
    $region4: #{dvcca_forward.1} parent=1 // pred_region
      _
    $region5: #{dvcca_forward.1} parent=1 // pred_fallthru
      _
    // Predicated region
    $region6: #{dvcca_forward.1} parent=1 // pred_check
      _
    $region7: #{dvcca_forward.1} parent=1 // pred_check_branch
      %35 = sbr.rel (0) target = $region9
    $region8: #{dvcca_forward.1} parent=1 // pred_region
      _
    $region9: #{dvcca_forward.1} parent=1 // pred_fallthru
      _
    // Predicated region
    $region10: #{dvcca_forward.1} parent=1 // pred_check
      _
    $region11: #{dvcca_forward.1} parent=1 // pred_check_branch
      %37 = sbr.rel (0) target = $region13
    $region12: #{dvcca_forward.1} parent=1 // pred_region
      %s39 = ssub.s32 16384, 16384
      %40 = vsyncadd [#allocation3], %s39
      %s41 = sshll.u32 [#allocation2], 4
      %s42 = int_to_ptr.vmem [resolvable:$true] %s41
      %47 = dma.hbm_to_vmem [thread:$0]  %s2, 16384, %s42, [#allocation3], 512, 512, 32
    $region13: #{dvcca_forward.1} parent=1 // pred_fallthru
      _
    // Predicated region
    $region14: #{dvcca_forward.1} parent=1 // pred_check
      _
    $region15: #{dvcca_forward.1} parent=1 // pred_check_branch
      %49 = sbr.rel (0) target = $region17
    $region16: #{dvcca_forward.1} parent=1 // pred_region
      _
    $region17: #{dvcca_forward.1} parent=1 // pred_fallthru
      _
    // Predicated region
    $region18: #{dvcca_forward.1} parent=1 // pred_check
      _
    $region19: #{dvcca_forward.1} parent=1 // pred_check_branch
      %51 = sbr.rel (0) target = $region21
    $region20: #{dvcca_forward.1} parent=1 // pred_region
      _
    $region21: #{dvcca_forward.1} parent=1 // pred_fallthru
      _
    // Predicated region
    $region22: #{dvcca_forward.1} parent=1 // pred_check
      _
    $region23: #{dvcca_forward.1} parent=1 // pred_check_branch
      %53 = sbr.rel (0) target = $region25
    $region24: #{dvcca_forward.1} parent=1 // pred_region
      %s55 = ssub.s32 8192, 8192
      %56 = vsyncadd [#allocation6], %s55
      %s57 = sshll.u32 [#allocation5], 4
      %s58 = int_to_ptr.vmem [resolvable:$true] %s57
      %63 = dma.hbm_to_vmem [thread:$0]  %s5, 8192, %s58, [#allocation6], 128, 128, 8
    $region25: #{dvcca_forward.1} parent=1 // pred_fallthru
      _
    // Predicated region
    $region26: #{dvcca_forward.1} parent=1 // pred_check
      _
    $region27: #{dvcca_forward.1} parent=1 // pred_check_branch
      %65 = sbr.rel (0) target = $region29
    $region28: #{dvcca_forward.1} parent=1 // pred_region
      _
    $region29: #{dvcca_forward.1} parent=1 // pred_fallthru
      _
    // Predicated region
    $region30: #{dvcca_forward.1} parent=1 // pred_check
      _
    $region31: #{dvcca_forward.1} parent=1 // pred_check_branch
      %67 = sbr.rel (0) target = $region33
    $region32: #{dvcca_forward.1} parent=1 // pred_region
      _
    $region33: #{dvcca_forward.1} parent=1 // pred_fallthru
      _
    // Predicated region
    $region34: #{dvcca_forward.1} parent=1 // pred_check
      _
    $region35: #{dvcca_forward.1} parent=1 // pred_check_branch
      %69 = sbr.rel (0) target = $region37
    $region36: #{dvcca_forward.1} parent=1 // pred_region
      _
    $region37: #{dvcca_forward.1} parent=1 // pred_fallthru
      _
    // Predicated region
    $region38: #{dvcca_forward.1} parent=1 // pred_check
      _
    $region39: #{dvcca_forward.1} parent=1 // pred_check_branch
      %71 = sbr.rel (0) target = $region41
    $region40: #{dvcca_forward.1} parent=1 // pred_region
      _
    $region41: #{dvcca_forward.1} parent=1 // pred_fallthru
      _
    // Predicated region
    $region42: #{dvcca_forward.1} parent=1 // pred_check
      _
    $region43: #{dvcca_forward.1} parent=1 // pred_check_branch
      %73 = sbr.rel (0) target = $region45
    $region44: #{dvcca_forward.1} parent=1 // pred_region
      _
    $region45: #{dvcca_forward.1} parent=1 // pred_fallthru
      _
    // Predicated region
    $region46: #{dvcca_forward.1} parent=1 // pred_check
      _
    $region47: #{dvcca_forward.1} parent=1 // pred_check_branch
      %75 = sbr.rel (0) target = $region49
    $region48: #{dvcca_forward.1} parent=1 // pred_region
      %s77 = ssub.s32 8192, 8192
      %78 = vsyncadd [#allocation6], %s77
      %s79 = sshll.u32 [#allocation7], 4
      %s80 = int_to_ptr.vmem [resolvable:$true] %s79
      %85 = dma.hbm_to_vmem [thread:$0]  %s11, 8192, %s80, [#allocation6], 256, 256, 16
    $region49: #{dvcca_forward.1} parent=1 // pred_fallthru
      _
    // Predicated region
    $region50: #{dvcca_forward.1} parent=1 // pred_check
      _
    $region51: #{dvcca_forward.1} parent=1 // pred_check_branch
      %87 = sbr.rel (0) target = $region53
    $region52: #{dvcca_forward.1} parent=1 // pred_region
      _
    $region53: #{dvcca_forward.1} parent=1 // pred_fallthru
      _
    // Predicated region
    $region54: #{dvcca_forward.1} parent=1 // pred_check
      _
    $region55: #{dvcca_forward.1} parent=1 // pred_check_branch
      %89 = sbr.rel (0) target = $region57
    $region56: #{dvcca_forward.1} parent=1 // pred_region
      %s91 = ssub.s32 16384, 16384
      %92 = vsyncadd [#allocation9], %s91
      %s93 = sshll.u32 [#allocation8], 4
      %s94 = int_to_ptr.vmem [resolvable:$true] %s93
      %99 = dma.hbm_to_vmem [thread:$0]  %s13, 16384, %s94, [#allocation9], 1024, 1024, 64
    $region57: #{dvcca_forward.1} parent=1 // pred_fallthru
      _
    // Predicated region
    $region58: #{dvcca_forward.1} parent=1 // pred_check
      _
    $region59: #{dvcca_forward.1} parent=1 // pred_check_branch
      %101 = sbr.rel (0) target = $region61
    $region60: #{dvcca_forward.1} parent=1 // pred_region
      _
    $region61: #{dvcca_forward.1} parent=1 // pred_fallthru
      _
    // Predicated region
    $region62: #{dvcca_forward.1} parent=1 // pred_check
      _
    $region63: #{dvcca_forward.1} parent=1 // pred_check_branch
      %103 = sbr.rel (0) target = $region65
    $region64: #{dvcca_forward.1} parent=1 // pred_region
      _
    $region65: #{dvcca_forward.1} parent=1 // pred_fallthru
      _
    // Predicated region
    $region66: #{dvcca_forward.1} parent=1 // pred_check
      _
    $region67: #{dvcca_forward.1} parent=1 // pred_check_branch
      %105 = sbr.rel (0) target = $region69
    $region68: #{dvcca_forward.1} parent=1 // pred_region
      _
    $region69: #{dvcca_forward.1} parent=1 // pred_fallthru
      _
    // Predicated region
    $region70: #{dvcca_forward.1} parent=1 // pred_check
      _
    $region71: #{dvcca_forward.1} parent=1 // pred_check_branch
      %107 = sbr.rel (0) target = $region73
    $region72: #{dvcca_forward.1} parent=1 // pred_region
      _
    $region73: #{dvcca_forward.1} parent=1 // pred_fallthru
      _
    // Predicated region
    $region74: #{dvcca_forward.1} parent=1 // pred_check
      _
    $region75: #{dvcca_forward.1} parent=1 // pred_check_branch
      %109 = sbr.rel (0) target = $region77
    $region76: #{dvcca_forward.1} parent=1 // pred_region
      _
    $region77: #{dvcca_forward.1} parent=1 // pred_fallthru
      _
    // Predicated region
    $region78: #{dvcca_forward.1} parent=1 // pred_check
      _
    $region79: #{dvcca_forward.1} parent=1 // pred_check_branch
      %111 = sbr.rel (0) target = $region81
    $region80: #{dvcca_forward.1} parent=1 // pred_region
      _
    $region81: #{dvcca_forward.1} parent=1 // pred_fallthru
      _
    // Predicated region
    $region82: #{dvcca_forward.1} parent=1 // pred_check
      _
    $region83: #{dvcca_forward.1} parent=1 // pred_check_branch
      %113 = sbr.rel (0) target = $region85
    $region84: #{dvcca_forward.1} parent=1 // pred_region
      %114 = dma.done [#allocation3], 16384
    $region85: #{dvcca_forward.1} parent=1 // pred_fallthru
      _
    // Predicated region
    $region86: #{dvcca_forward.1} parent=1 // pred_check
      _
    $region87: #{dvcca_forward.1} parent=1 // pred_check_branch
      %116 = sbr.rel (0) target = $region89
    $region88: #{dvcca_forward.1} parent=1 // pred_region
      %117 = dma.done [#allocation6], 8192
    $region89: #{dvcca_forward.1} parent=1 // pred_fallthru
      _
    // Predicated region
    $region90: #{dvcca_forward.1} parent=1 // pred_check
      _
    $region91: #{dvcca_forward.1} parent=1 // pred_check_branch
      %119 = sbr.rel (0) target = $region93
    $region92: #{dvcca_forward.1} parent=1 // pred_region
      %120 = dma.done [#allocation6], 8192
    $region93: #{dvcca_forward.1} parent=1 // pred_fallthru
      _
    // Predicated region
    $region94: #{dvcca_forward.1} parent=1 // pred_check
      _
    $region95: #{dvcca_forward.1} parent=1 // pred_check_branch
      %122 = sbr.rel (0) target = $region97
    $region96: #{dvcca_forward.1} parent=1 // pred_region
      %123 = dma.done [#allocation9], 16384
    $region97: #{dvcca_forward.1} parent=1 // pred_fallthru
      _
    %v125 = vld [vmem:[%s0] sm:$0xff]
    %v126 = vld [vmem:[%s1] sm:$0x3]
    %v127 = vld [vmem:[#allocation2] sm:$0xff]
    %v128 = vld [vmem:[#allocation2 + $0x8] sm:$0xff]
    %v129 = vld [vmem:[#allocation2 + $0x10] sm:$0xff]
    %v130 = vld [vmem:[#allocation2 + $0x18] sm:$0xff]
    %v131 = vld [vmem:[#allocation2 + $0x20] sm:$0xff]
    %v132 = vld [vmem:[#allocation2 + $0x28] sm:$0xff]
    %v133 = vld [vmem:[#allocation2 + $0x30] sm:$0xff]
    %v134 = vld [vmem:[#allocation2 + $0x38] sm:$0xff]
    %v135 = vld [vmem:[#allocation2 + $0x40] sm:$0xff]
    %v136 = vld [vmem:[#allocation2 + $0x48] sm:$0xff]
    %v137 = vld [vmem:[#allocation2 + $0x50] sm:$0xff]
    %v138 = vld [vmem:[#allocation2 + $0x58] sm:$0xff]
    %v139 = vld [vmem:[#allocation2 + $0x60] sm:$0xff]
    %v140 = vld [vmem:[#allocation2 + $0x68] sm:$0xff]
    %v141 = vld [vmem:[#allocation2 + $0x70] sm:$0xff]
    %v142 = vld [vmem:[#allocation2 + $0x78] sm:$0xff]
    %v143 = vld [vmem:[#allocation2 + $0x80] sm:$0xff]
    %v144 = vld [vmem:[#allocation2 + $0x88] sm:$0xff]
    %v145 = vld [vmem:[#allocation2 + $0x90] sm:$0xff]
    %v146 = vld [vmem:[#allocation2 + $0x98] sm:$0xff]
    %v147 = vld [vmem:[#allocation2 + $0xa0] sm:$0xff]
    %v148 = vld [vmem:[#allocation2 + $0xa8] sm:$0xff]
    %v149 = vld [vmem:[#allocation2 + $0xb0] sm:$0xff]
    %v150 = vld [vmem:[#allocation2 + $0xb8] sm:$0xff]
    %v151 = vld [vmem:[#allocation2 + $0xc0] sm:$0xff]
    %v152 = vld [vmem:[#allocation2 + $0xc8] sm:$0xff]
    %v153 = vld [vmem:[#allocation2 + $0xd0] sm:$0xff]
    %v154 = vld [vmem:[#allocation2 + $0xd8] sm:$0xff]
    %v155 = vld [vmem:[#allocation2 + $0xe0] sm:$0xff]
    %v156 = vld [vmem:[#allocation2 + $0xe8] sm:$0xff]
    %v157 = vld [vmem:[#allocation2 + $0xf0] sm:$0xff]
    %v158 = vld [vmem:[#allocation2 + $0xf8] sm:$0xff]
    %v159 = vld [vmem:[#allocation2 + $0x100] sm:$0xff]
    %v160 = vld [vmem:[#allocation2 + $0x108] sm:$0xff]
    %v161 = vld [vmem:[#allocation2 + $0x110] sm:$0xff]
    %v162 = vld [vmem:[#allocation2 + $0x118] sm:$0xff]
    %v163 = vld [vmem:[#allocation2 + $0x120] sm:$0xff]
    %v164 = vld [vmem:[#allocation2 + $0x128] sm:$0xff]
    %v165 = vld [vmem:[#allocation2 + $0x130] sm:$0xff]
    %v166 = vld [vmem:[#allocation2 + $0x138] sm:$0xff]
    %v167 = vld [vmem:[#allocation2 + $0x140] sm:$0xff]
    %v168 = vld [vmem:[#allocation2 + $0x148] sm:$0xff]
    %v169 = vld [vmem:[#allocation2 + $0x150] sm:$0xff]
    %v170 = vld [vmem:[#allocation2 + $0x158] sm:$0xff]
    %v171 = vld [vmem:[#allocation2 + $0x160] sm:$0xff]
    %v172 = vld [vmem:[#allocation2 + $0x168] sm:$0xff]
    %v173 = vld [vmem:[#allocation2 + $0x170] sm:$0xff]
    %v174 = vld [vmem:[#allocation2 + $0x178] sm:$0xff]
    %v175 = vld [vmem:[#allocation2 + $0x180] sm:$0xff]
    %v176 = vld [vmem:[#allocation2 + $0x188] sm:$0xff]
    %v177 = vld [vmem:[#allocation2 + $0x190] sm:$0xff]
    %v178 = vld [vmem:[#allocation2 + $0x198] sm:$0xff]
    %v179 = vld [vmem:[#allocation2 + $0x1a0] sm:$0xff]
    %v180 = vld [vmem:[#allocation2 + $0x1a8] sm:$0xff]
    %v181 = vld [vmem:[#allocation2 + $0x1b0] sm:$0xff]
    %v182 = vld [vmem:[#allocation2 + $0x1b8] sm:$0xff]
    %v183 = vld [vmem:[#allocation2 + $0x1c0] sm:$0xff]
    %v184 = vld [vmem:[#allocation2 + $0x1c8] sm:$0xff]
    %v185 = vld [vmem:[#allocation2 + $0x1d0] sm:$0xff]
    %v186 = vld [vmem:[#allocation2 + $0x1d8] sm:$0xff]
    %v187 = vld [vmem:[#allocation2 + $0x1e0] sm:$0xff]
    %v188 = vld [vmem:[#allocation2 + $0x1e8] sm:$0xff]
    %v189 = vld [vmem:[#allocation2 + $0x1f0] sm:$0xff]
    %v190 = vld [vmem:[#allocation2 + $0x1f8] sm:$0xff]
    %v191 = vld [vmem:[#allocation2 + $0x200] sm:$0xff]
    %v192 = vld [vmem:[#allocation2 + $0x208] sm:$0xff]
    %v193 = vld [vmem:[#allocation2 + $0x210] sm:$0xff]
    %v194 = vld [vmem:[#allocation2 + $0x218] sm:$0xff]
    %v195 = vld [vmem:[#allocation2 + $0x220] sm:$0xff]
    %v196 = vld [vmem:[#allocation2 + $0x228] sm:$0xff]
    %v197 = vld [vmem:[#allocation2 + $0x230] sm:$0xff]
    %v198 = vld [vmem:[#allocation2 + $0x238] sm:$0xff]
    %v199 = vld [vmem:[#allocation2 + $0x240] sm:$0xff]
    %v200 = vld [vmem:[#allocation2 + $0x248] sm:$0xff]
    %v201 = vld [vmem:[#allocation2 + $0x250] sm:$0xff]
    %v202 = vld [vmem:[#allocation2 + $0x258] sm:$0xff]
    %v203 = vld [vmem:[#allocation2 + $0x260] sm:$0xff]
    %v204 = vld [vmem:[#allocation2 + $0x268] sm:$0xff]
    %v205 = vld [vmem:[#allocation2 + $0x270] sm:$0xff]
    %v206 = vld [vmem:[#allocation2 + $0x278] sm:$0xff]
    %v207 = vld [vmem:[#allocation2 + $0x280] sm:$0xff]
    %v208 = vld [vmem:[#allocation2 + $0x288] sm:$0xff]
    %v209 = vld [vmem:[#allocation2 + $0x290] sm:$0xff]
    %v210 = vld [vmem:[#allocation2 + $0x298] sm:$0xff]
    %v211 = vld [vmem:[#allocation2 + $0x2a0] sm:$0xff]
    %v212 = vld [vmem:[#allocation2 + $0x2a8] sm:$0xff]
    %v213 = vld [vmem:[#allocation2 + $0x2b0] sm:$0xff]
    %v214 = vld [vmem:[#allocation2 + $0x2b8] sm:$0xff]
    %v215 = vld [vmem:[#allocation2 + $0x2c0] sm:$0xff]
    %v216 = vld [vmem:[#allocation2 + $0x2c8] sm:$0xff]
    %v217 = vld [vmem:[#allocation2 + $0x2d0] sm:$0xff]
    %v218 = vld [vmem:[#allocation2 + $0x2d8] sm:$0xff]
    %v219 = vld [vmem:[#allocation2 + $0x2e0] sm:$0xff]
    %v220 = vld [vmem:[#allocation2 + $0x2e8] sm:$0xff]
    %v221 = vld [vmem:[#allocation2 + $0x2f0] sm:$0xff]
    %v222 = vld [vmem:[#allocation2 + $0x2f8] sm:$0xff]
    %v223 = vld [vmem:[#allocation2 + $0x300] sm:$0xff]
    %v224 = vld [vmem:[#allocation2 + $0x308] sm:$0xff]
    %v225 = vld [vmem:[#allocation2 + $0x310] sm:$0xff]
    %v226 = vld [vmem:[#allocation2 + $0x318] sm:$0xff]
    %v227 = vld [vmem:[#allocation2 + $0x320] sm:$0xff]
    %v228 = vld [vmem:[#allocation2 + $0x328] sm:$0xff]
    %v229 = vld [vmem:[#allocation2 + $0x330] sm:$0xff]
    %v230 = vld [vmem:[#allocation2 + $0x338] sm:$0xff]
    %v231 = vld [vmem:[#allocation2 + $0x340] sm:$0xff]
    %v232 = vld [vmem:[#allocation2 + $0x348] sm:$0xff]
    %v233 = vld [vmem:[#allocation2 + $0x350] sm:$0xff]
    %v234 = vld [vmem:[#allocation2 + $0x358] sm:$0xff]
    %v235 = vld [vmem:[#allocation2 + $0x360] sm:$0xff]
    %v236 = vld [vmem:[#allocation2 + $0x368] sm:$0xff]
    %v237 = vld [vmem:[#allocation2 + $0x370] sm:$0xff]
    %v238 = vld [vmem:[#allocation2 + $0x378] sm:$0xff]
    %v239 = vld [vmem:[#allocation2 + $0x380] sm:$0xff]
    %v240 = vld [vmem:[#allocation2 + $0x388] sm:$0xff]
    %v241 = vld [vmem:[#allocation2 + $0x390] sm:$0xff]
    %v242 = vld [vmem:[#allocation2 + $0x398] sm:$0xff]
    %v243 = vld [vmem:[#allocation2 + $0x3a0] sm:$0xff]
    %v244 = vld [vmem:[#allocation2 + $0x3a8] sm:$0xff]
    %v245 = vld [vmem:[#allocation2 + $0x3b0] sm:$0xff]
    %v246 = vld [vmem:[#allocation2 + $0x3b8] sm:$0xff]
    %v247 = vld [vmem:[#allocation2 + $0x3c0] sm:$0xff]
    %v248 = vld [vmem:[#allocation2 + $0x3c8] sm:$0xff]
    %v249 = vld [vmem:[#allocation2 + $0x3d0] sm:$0xff]
    %v250 = vld [vmem:[#allocation2 + $0x3d8] sm:$0xff]
    %v251 = vld [vmem:[#allocation2 + $0x3e0] sm:$0xff]
    %v252 = vld [vmem:[#allocation2 + $0x3e8] sm:$0xff]
    %v253 = vld [vmem:[#allocation2 + $0x3f0] sm:$0xff]
    %v254 = vld [vmem:[#allocation2 + $0x3f8] sm:$0xff]
    %v255 = vunpack.c.l.s8.bf16 %v127
    %v256 = vunpack.c.l.s8.bf16 %v128
    %v257 = vunpack.c.l.s8.bf16 %v129
    %v258 = vunpack.c.l.s8.bf16 %v130
    %v259 = vunpack.c.h.s8.bf16 %v127
    %v260 = vunpack.c.h.s8.bf16 %v128
    %v261 = vunpack.c.h.s8.bf16 %v129
    %v262 = vunpack.c.h.s8.bf16 %v130
    %v263 = vunpack.c.l.s8.bf16 %v131
    %v264 = vunpack.c.l.s8.bf16 %v132
    %v265 = vunpack.c.l.s8.bf16 %v133
    %v266 = vunpack.c.l.s8.bf16 %v134
    %v267 = vunpack.c.h.s8.bf16 %v131
    %v268 = vunpack.c.h.s8.bf16 %v132
    %v269 = vunpack.c.h.s8.bf16 %v133
    %v270 = vunpack.c.h.s8.bf16 %v134
    %v271 = vunpack.c.l.s8.bf16 %v135
    %v272 = vunpack.c.l.s8.bf16 %v136
    %v273 = vunpack.c.l.s8.bf16 %v137
    %v274 = vunpack.c.l.s8.bf16 %v138
    %v275 = vunpack.c.h.s8.bf16 %v135
    %v276 = vunpack.c.h.s8.bf16 %v136
    %v277 = vunpack.c.h.s8.bf16 %v137
    %v278 = vunpack.c.h.s8.bf16 %v138
    %v279 = vunpack.c.l.s8.bf16 %v139
    %v280 = vunpack.c.l.s8.bf16 %v140
    %v281 = vunpack.c.l.s8.bf16 %v141
    %v282 = vunpack.c.l.s8.bf16 %v142
    %v283 = vunpack.c.h.s8.bf16 %v139
    %v284 = vunpack.c.h.s8.bf16 %v140
    %v285 = vunpack.c.h.s8.bf16 %v141
    %v286 = vunpack.c.h.s8.bf16 %v142
    %v287 = vunpack.c.l.s8.bf16 %v143
    %v288 = vunpack.c.l.s8.bf16 %v144
    %v289 = vunpack.c.l.s8.bf16 %v145
    %v290 = vunpack.c.l.s8.bf16 %v146
    %v291 = vunpack.c.h.s8.bf16 %v143
    %v292 = vunpack.c.h.s8.bf16 %v144
    %v293 = vunpack.c.h.s8.bf16 %v145
    %v294 = vunpack.c.h.s8.bf16 %v146
    %v295 = vunpack.c.l.s8.bf16 %v147
    %v296 = vunpack.c.l.s8.bf16 %v148
    %v297 = vunpack.c.l.s8.bf16 %v149
    %v298 = vunpack.c.l.s8.bf16 %v150
    %v299 = vunpack.c.h.s8.bf16 %v147
    %v300 = vunpack.c.h.s8.bf16 %v148
    %v301 = vunpack.c.h.s8.bf16 %v149
    %v302 = vunpack.c.h.s8.bf16 %v150
    %v303 = vunpack.c.l.s8.bf16 %v151
    %v304 = vunpack.c.l.s8.bf16 %v152
    %v305 = vunpack.c.l.s8.bf16 %v153
    %v306 = vunpack.c.l.s8.bf16 %v154
    %v307 = vunpack.c.h.s8.bf16 %v151
    %v308 = vunpack.c.h.s8.bf16 %v152
    %v309 = vunpack.c.h.s8.bf16 %v153
    %v310 = vunpack.c.h.s8.bf16 %v154
    %v311 = vunpack.c.l.s8.bf16 %v155
    %v312 = vunpack.c.l.s8.bf16 %v156
    %v313 = vunpack.c.l.s8.bf16 %v157
    %v314 = vunpack.c.l.s8.bf16 %v158
    %v315 = vunpack.c.h.s8.bf16 %v155
    %v316 = vunpack.c.h.s8.bf16 %v156
    %v317 = vunpack.c.h.s8.bf16 %v157
    %v318 = vunpack.c.h.s8.bf16 %v158
    %v319 = vunpack.c.l.s8.bf16 %v159
    %v320 = vunpack.c.l.s8.bf16 %v160
    %v321 = vunpack.c.l.s8.bf16 %v161
    %v322 = vunpack.c.l.s8.bf16 %v162
    %v323 = vunpack.c.h.s8.bf16 %v159
    %v324 = vunpack.c.h.s8.bf16 %v160
    %v325 = vunpack.c.h.s8.bf16 %v161
    %v326 = vunpack.c.h.s8.bf16 %v162
    %v327 = vunpack.c.l.s8.bf16 %v163
    %v328 = vunpack.c.l.s8.bf16 %v164
    %v329 = vunpack.c.l.s8.bf16 %v165
    %v330 = vunpack.c.l.s8.bf16 %v166
    %v331 = vunpack.c.h.s8.bf16 %v163
    %v332 = vunpack.c.h.s8.bf16 %v164
    %v333 = vunpack.c.h.s8.bf16 %v165
    %v334 = vunpack.c.h.s8.bf16 %v166
    %v335 = vunpack.c.l.s8.bf16 %v167
    %v336 = vunpack.c.l.s8.bf16 %v168
    %v337 = vunpack.c.l.s8.bf16 %v169
    %v338 = vunpack.c.l.s8.bf16 %v170
    %v339 = vunpack.c.h.s8.bf16 %v167
    %v340 = vunpack.c.h.s8.bf16 %v168
    %v341 = vunpack.c.h.s8.bf16 %v169
    %v342 = vunpack.c.h.s8.bf16 %v170
    %v343 = vunpack.c.l.s8.bf16 %v171
    %v344 = vunpack.c.l.s8.bf16 %v172
    %v345 = vunpack.c.l.s8.bf16 %v173
    %v346 = vunpack.c.l.s8.bf16 %v174
    %v347 = vunpack.c.h.s8.bf16 %v171
    %v348 = vunpack.c.h.s8.bf16 %v172
    %v349 = vunpack.c.h.s8.bf16 %v173
    %v350 = vunpack.c.h.s8.bf16 %v174
    %v351 = vunpack.c.l.s8.bf16 %v175
    %v352 = vunpack.c.l.s8.bf16 %v176
    %v353 = vunpack.c.l.s8.bf16 %v177
    %v354 = vunpack.c.l.s8.bf16 %v178
    %v355 = vunpack.c.h.s8.bf16 %v175
    %v356 = vunpack.c.h.s8.bf16 %v176
    %v357 = vunpack.c.h.s8.bf16 %v177
    %v358 = vunpack.c.h.s8.bf16 %v178
    %v359 = vunpack.c.l.s8.bf16 %v179
    %v360 = vunpack.c.l.s8.bf16 %v180
    %v361 = vunpack.c.l.s8.bf16 %v181
    %v362 = vunpack.c.l.s8.bf16 %v182
    %v363 = vunpack.c.h.s8.bf16 %v179
    %v364 = vunpack.c.h.s8.bf16 %v180
    %v365 = vunpack.c.h.s8.bf16 %v181
    %v366 = vunpack.c.h.s8.bf16 %v182
    %v367 = vunpack.c.l.s8.bf16 %v183
    %v368 = vunpack.c.l.s8.bf16 %v184
    %v369 = vunpack.c.l.s8.bf16 %v185
    %v370 = vunpack.c.l.s8.bf16 %v186
    %v371 = vunpack.c.h.s8.bf16 %v183
    %v372 = vunpack.c.h.s8.bf16 %v184
    %v373 = vunpack.c.h.s8.bf16 %v185
    %v374 = vunpack.c.h.s8.bf16 %v186
    %v375 = vunpack.c.l.s8.bf16 %v187
    %v376 = vunpack.c.l.s8.bf16 %v188
    %v377 = vunpack.c.l.s8.bf16 %v189
    %v378 = vunpack.c.l.s8.bf16 %v190
    %v379 = vunpack.c.h.s8.bf16 %v187
    %v380 = vunpack.c.h.s8.bf16 %v188
    %v381 = vunpack.c.h.s8.bf16 %v189
    %v382 = vunpack.c.h.s8.bf16 %v190
    %v383 = vunpack.c.l.s8.bf16 %v191
    %v384 = vunpack.c.l.s8.bf16 %v192
    %v385 = vunpack.c.l.s8.bf16 %v193
    %v386 = vunpack.c.l.s8.bf16 %v194
    %v387 = vunpack.c.h.s8.bf16 %v191
    %v388 = vunpack.c.h.s8.bf16 %v192
    %v389 = vunpack.c.h.s8.bf16 %v193
    %v390 = vunpack.c.h.s8.bf16 %v194
    %v391 = vunpack.c.l.s8.bf16 %v195
    %v392 = vunpack.c.l.s8.bf16 %v196
    %v393 = vunpack.c.l.s8.bf16 %v197
    %v394 = vunpack.c.l.s8.bf16 %v198
    %v395 = vunpack.c.h.s8.bf16 %v195
    %v396 = vunpack.c.h.s8.bf16 %v196
    %v397 = vunpack.c.h.s8.bf16 %v197
    %v398 = vunpack.c.h.s8.bf16 %v198
    %v399 = vunpack.c.l.s8.bf16 %v199
    %v400 = vunpack.c.l.s8.bf16 %v200
    %v401 = vunpack.c.l.s8.bf16 %v201
    %v402 = vunpack.c.l.s8.bf16 %v202
    %v403 = vunpack.c.h.s8.bf16 %v199
    %v404 = vunpack.c.h.s8.bf16 %v200
    %v405 = vunpack.c.h.s8.bf16 %v201
    %v406 = vunpack.c.h.s8.bf16 %v202
    %v407 = vunpack.c.l.s8.bf16 %v203
    %v408 = vunpack.c.l.s8.bf16 %v204
    %v409 = vunpack.c.l.s8.bf16 %v205
    %v410 = vunpack.c.l.s8.bf16 %v206
    %v411 = vunpack.c.h.s8.bf16 %v203
    %v412 = vunpack.c.h.s8.bf16 %v204
    %v413 = vunpack.c.h.s8.bf16 %v205
    %v414 = vunpack.c.h.s8.bf16 %v206
    %v415 = vunpack.c.l.s8.bf16 %v207
    %v416 = vunpack.c.l.s8.bf16 %v208
    %v417 = vunpack.c.l.s8.bf16 %v209
    %v418 = vunpack.c.l.s8.bf16 %v210
    %v419 = vunpack.c.h.s8.bf16 %v207
    %v420 = vunpack.c.h.s8.bf16 %v208
    %v421 = vunpack.c.h.s8.bf16 %v209
    %v422 = vunpack.c.h.s8.bf16 %v210
    %v423 = vunpack.c.l.s8.bf16 %v211
    %v424 = vunpack.c.l.s8.bf16 %v212
    %v425 = vunpack.c.l.s8.bf16 %v213
    %v426 = vunpack.c.l.s8.bf16 %v214
    %v427 = vunpack.c.h.s8.bf16 %v211
    %v428 = vunpack.c.h.s8.bf16 %v212
    %v429 = vunpack.c.h.s8.bf16 %v213
    %v430 = vunpack.c.h.s8.bf16 %v214
    %v431 = vunpack.c.l.s8.bf16 %v215
    %v432 = vunpack.c.l.s8.bf16 %v216
    %v433 = vunpack.c.l.s8.bf16 %v217
    %v434 = vunpack.c.l.s8.bf16 %v218
    %v435 = vunpack.c.h.s8.bf16 %v215
    %v436 = vunpack.c.h.s8.bf16 %v216
    %v437 = vunpack.c.h.s8.bf16 %v217
    %v438 = vunpack.c.h.s8.bf16 %v218
    %v439 = vunpack.c.l.s8.bf16 %v219
    %v440 = vunpack.c.l.s8.bf16 %v220
    %v441 = vunpack.c.l.s8.bf16 %v221
    %v442 = vunpack.c.l.s8.bf16 %v222
    %v443 = vunpack.c.h.s8.bf16 %v219
    %v444 = vunpack.c.h.s8.bf16 %v220
    %v445 = vunpack.c.h.s8.bf16 %v221
    %v446 = vunpack.c.h.s8.bf16 %v222
    %v447 = vunpack.c.l.s8.bf16 %v223
    %v448 = vunpack.c.l.s8.bf16 %v224
    %v449 = vunpack.c.l.s8.bf16 %v225
    %v450 = vunpack.c.l.s8.bf16 %v226
    %v451 = vunpack.c.h.s8.bf16 %v223
    %v452 = vunpack.c.h.s8.bf16 %v224
    %v453 = vunpack.c.h.s8.bf16 %v225
    %v454 = vunpack.c.h.s8.bf16 %v226
    %v455 = vunpack.c.l.s8.bf16 %v227
    %v456 = vunpack.c.l.s8.bf16 %v228
    %v457 = vunpack.c.l.s8.bf16 %v229
    %v458 = vunpack.c.l.s8.bf16 %v230
    %v459 = vunpack.c.h.s8.bf16 %v227
    %v460 = vunpack.c.h.s8.bf16 %v228
    %v461 = vunpack.c.h.s8.bf16 %v229
    %v462 = vunpack.c.h.s8.bf16 %v230
    %v463 = vunpack.c.l.s8.bf16 %v231
    %v464 = vunpack.c.l.s8.bf16 %v232
    %v465 = vunpack.c.l.s8.bf16 %v233
    %v466 = vunpack.c.l.s8.bf16 %v234
    %v467 = vunpack.c.h.s8.bf16 %v231
    %v468 = vunpack.c.h.s8.bf16 %v232
    %v469 = vunpack.c.h.s8.bf16 %v233
    %v470 = vunpack.c.h.s8.bf16 %v234
    %v471 = vunpack.c.l.s8.bf16 %v235
    %v472 = vunpack.c.l.s8.bf16 %v236
    %v473 = vunpack.c.l.s8.bf16 %v237
    %v474 = vunpack.c.l.s8.bf16 %v238
    %v475 = vunpack.c.h.s8.bf16 %v235
    %v476 = vunpack.c.h.s8.bf16 %v236
    %v477 = vunpack.c.h.s8.bf16 %v237
    %v478 = vunpack.c.h.s8.bf16 %v238
    %v479 = vunpack.c.l.s8.bf16 %v239
    %v480 = vunpack.c.l.s8.bf16 %v240
    %v481 = vunpack.c.l.s8.bf16 %v241
    %v482 = vunpack.c.l.s8.bf16 %v242
    %v483 = vunpack.c.h.s8.bf16 %v239
    %v484 = vunpack.c.h.s8.bf16 %v240
    %v485 = vunpack.c.h.s8.bf16 %v241
    %v486 = vunpack.c.h.s8.bf16 %v242
    %v487 = vunpack.c.l.s8.bf16 %v243
    %v488 = vunpack.c.l.s8.bf16 %v244
    %v489 = vunpack.c.l.s8.bf16 %v245
    %v490 = vunpack.c.l.s8.bf16 %v246
    %v491 = vunpack.c.h.s8.bf16 %v243
    %v492 = vunpack.c.h.s8.bf16 %v244
    %v493 = vunpack.c.h.s8.bf16 %v245
    %v494 = vunpack.c.h.s8.bf16 %v246
    %v495 = vunpack.c.l.s8.bf16 %v247
    %v496 = vunpack.c.l.s8.bf16 %v248
    %v497 = vunpack.c.l.s8.bf16 %v249
    %v498 = vunpack.c.l.s8.bf16 %v250
    %v499 = vunpack.c.h.s8.bf16 %v247
    %v500 = vunpack.c.h.s8.bf16 %v248
    %v501 = vunpack.c.h.s8.bf16 %v249
    %v502 = vunpack.c.h.s8.bf16 %v250
    %v503 = vunpack.c.l.s8.bf16 %v251
    %v504 = vunpack.c.l.s8.bf16 %v252
    %v505 = vunpack.c.l.s8.bf16 %v253
    %v506 = vunpack.c.l.s8.bf16 %v254
    %v507 = vunpack.c.h.s8.bf16 %v251
    %v508 = vunpack.c.h.s8.bf16 %v252
    %v509 = vunpack.c.h.s8.bf16 %v253
    %v510 = vunpack.c.h.s8.bf16 %v254
    %v511 = vld [vmem:[%s4] sm:$0xf]
    %v512 = vld [vmem:[%s3] sm:$0xf]
    %v514 = vcombine.high %v125, %v125
    %v516 = vunpack.c.l.s4 1966171168
    %v517 = vunpack.c.0.s8 %v516
    %v518 = vlaneseq
    %v519 = vshrl.u32 %v518, 7
    %v520 = vsub.s32 %v517, %v519
    %v521 = vrot.slane %v125, %v520
    %v523 = vunpack.c.l.s4 1966171168
    %v524 = vunpack.c.0.s8 %v523
    %v525 = vlaneseq
    %v526 = vshrl.u32 %v525, 7
    %v527 = vsub.s32 %v524, %v526
    %v528 = vrot.slane %v514, %v527
    %v529 = vcombine.high %v521, %v521
    %v530 = vcombine.high %v528, %v528
    %v532 = vunpack.c.l.s4 1966171168
    %v533 = vunpack.c.0.s8 %v532
    %v534 = vlaneseq
    %v535 = vshrl.u32 %v534, 7
    %v536 = vsub.s32 %v533, %v535
    %v537 = vrot.slane %v521, %v536
    %v539 = vunpack.c.l.s4 1966171168
    %v540 = vunpack.c.0.s8 %v539
    %v541 = vlaneseq
    %v542 = vshrl.u32 %v541, 7
    %v543 = vsub.s32 %v540, %v542
    %v544 = vrot.slane %v528, %v543
    %v546 = vunpack.c.l.s4 1966171168
    %v547 = vunpack.c.0.s8 %v546
    %v548 = vlaneseq
    %v549 = vshrl.u32 %v548, 7
    %v550 = vsub.s32 %v547, %v549
    %v551 = vrot.slane %v529, %v550
    %v553 = vunpack.c.l.s4 1966171168
    %v554 = vunpack.c.0.s8 %v553
    %v555 = vlaneseq
    %v556 = vshrl.u32 %v555, 7
    %v557 = vsub.s32 %v554, %v556
    %v558 = vrot.slane %v530, %v557
    %v559 = vcombine.high %v537, %v537
    %v560 = vcombine.high %v544, %v544
    %v561 = vcombine.high %v551, %v551
    %v562 = vcombine.high %v558, %v558
    %571 = vmatprep.subr.bf16.mxu0 %v284
    %572 = vmatpush1.bf16.msra.mxu0 %v283
    %573 = vmatprep.subr.bf16.mxu0 %v280
    %574 = vmatpush1.bf16.msra.mxu0 %v279
    %575 = vmatprep.subr.bf16.mxu0 %v276
    %576 = vmatpush1.bf16.msra.mxu0 %v275
    %577 = vmatprep.subr.bf16.mxu0 %v272
    %578 = vmatpush1.bf16.msra.mxu0 %v271
    %579 = vmatprep.subr.bf16.mxu0 %v268
    %580 = vmatpush1.bf16.msra.mxu0 %v267
    %581 = vmatprep.subr.bf16.mxu0 %v264
    %582 = vmatpush1.bf16.msra.mxu0 %v263
    %583 = vmatprep.subr.bf16.mxu0 %v260
    %584 = vmatpush1.bf16.msra.mxu0 %v259
    %585 = vmatprep.subr.bf16.mxu0 %v256
    %586 = vmatpush1.bf16.msra.mxu0 %v255
    %587 = vmatprep.subr.bf16.mxu0 %v316
    %588 = vmatpush2.bf16.msra.mxu0 %v315
    %589 = vmatprep.subr.bf16.mxu0 %v312
    %590 = vmatpush2.bf16.msra.mxu0 %v311
    %591 = vmatprep.subr.bf16.mxu0 %v308
    %592 = vmatpush2.bf16.msra.mxu0 %v307
    %593 = vmatprep.subr.bf16.mxu0 %v304
    %594 = vmatpush2.bf16.msra.mxu0 %v303
    %595 = vmatprep.subr.bf16.mxu0 %v300
    %596 = vmatpush2.bf16.msra.mxu0 %v299
    %597 = vmatprep.subr.bf16.mxu0 %v296
    %598 = vmatpush2.bf16.msra.mxu0 %v295
    %599 = vmatprep.subr.bf16.mxu0 %v292
    %600 = vmatpush2.bf16.msra.mxu0 %v291
    %601 = vmatprep.subr.bf16.mxu0 %v288
    %602 = vmatpush2.bf16.msra.mxu0 %v287
    %603 = vmatprep.mubr.bf16.mxu0 %v551
    %604 = vmatmul.mubr.bf16.gmra.mxu0 %v537
    %v605 = vpop.f32.mrf.mxu0
    %v606 = vadd.f32 0.0, %v605
    %v607 = vpop.f32.mrf.mxu0
    %v608 = vadd.f32 0.0, %v607
    %v609 = vpop.f32.mrf.mxu0
    %v610 = vpop.f32.mrf.mxu0
    %611 = vdwg.mxu0
    %612 = vmatprep.subr.bf16.mxu0 %v348
    %613 = vmatpush1.bf16.msra.mxu0 %v347
    %614 = vmatprep.subr.bf16.mxu0 %v344
    %615 = vmatpush1.bf16.msra.mxu0 %v343
    %616 = vmatprep.subr.bf16.mxu0 %v340
    %617 = vmatpush1.bf16.msra.mxu0 %v339
    %618 = vmatprep.subr.bf16.mxu0 %v336
    %619 = vmatpush1.bf16.msra.mxu0 %v335
    %620 = vmatprep.subr.bf16.mxu0 %v332
    %621 = vmatpush1.bf16.msra.mxu0 %v331
    %622 = vmatprep.subr.bf16.mxu0 %v328
    %623 = vmatpush1.bf16.msra.mxu0 %v327
    %624 = vmatprep.subr.bf16.mxu0 %v324
    %625 = vmatpush1.bf16.msra.mxu0 %v323
    %626 = vmatprep.subr.bf16.mxu0 %v320
    %627 = vmatpush1.bf16.msra.mxu0 %v319
    %628 = vmatprep.subr.bf16.mxu0 %v380
    %629 = vmatpush2.bf16.msra.mxu0 %v379
    %630 = vmatprep.subr.bf16.mxu0 %v376
    %631 = vmatpush2.bf16.msra.mxu0 %v375
    %632 = vmatprep.subr.bf16.mxu0 %v372
    %633 = vmatpush2.bf16.msra.mxu0 %v371
    %634 = vmatprep.subr.bf16.mxu0 %v368
    %635 = vmatpush2.bf16.msra.mxu0 %v367
    %636 = vmatprep.subr.bf16.mxu0 %v364
    %637 = vmatpush2.bf16.msra.mxu0 %v363
    %638 = vmatprep.subr.bf16.mxu0 %v360
    %639 = vmatpush2.bf16.msra.mxu0 %v359
    %640 = vmatprep.subr.bf16.mxu0 %v356
    %641 = vmatpush2.bf16.msra.mxu0 %v355
    %642 = vmatprep.subr.bf16.mxu0 %v352
    %643 = vmatpush2.bf16.msra.mxu0 %v351
    %644 = vmatprep.mubr.bf16.mxu0 %v561
    %645 = vmatmul.mubr.bf16.gmra.mxu0 %v559
    %v646 = vpop.f32.mrf.mxu0
    %v647 = vadd.f32 %v606, %v646
    %v648 = vpop.f32.mrf.mxu0
    %v649 = vadd.f32 %v608, %v648
    %v650 = vpop.f32.mrf.mxu0
    %v651 = vpop.f32.mrf.mxu0
    %652 = vdwg.mxu0
    %653 = vmatprep.subr.bf16.mxu0 %v412
    %654 = vmatpush1.bf16.msra.mxu0 %v411
    %655 = vmatprep.subr.bf16.mxu0 %v408
    %656 = vmatpush1.bf16.msra.mxu0 %v407
    %657 = vmatprep.subr.bf16.mxu0 %v404
    %658 = vmatpush1.bf16.msra.mxu0 %v403
    %659 = vmatprep.subr.bf16.mxu0 %v400
    %660 = vmatpush1.bf16.msra.mxu0 %v399
    %661 = vmatprep.subr.bf16.mxu0 %v396
    %662 = vmatpush1.bf16.msra.mxu0 %v395
    %663 = vmatprep.subr.bf16.mxu0 %v392
    %664 = vmatpush1.bf16.msra.mxu0 %v391
    %665 = vmatprep.subr.bf16.mxu0 %v388
    %666 = vmatpush1.bf16.msra.mxu0 %v387
    %667 = vmatprep.subr.bf16.mxu0 %v384
    %668 = vmatpush1.bf16.msra.mxu0 %v383
    %669 = vmatprep.subr.bf16.mxu0 %v444
    %670 = vmatpush2.bf16.msra.mxu0 %v443
    %671 = vmatprep.subr.bf16.mxu0 %v440
    %672 = vmatpush2.bf16.msra.mxu0 %v439
    %673 = vmatprep.subr.bf16.mxu0 %v436
    %674 = vmatpush2.bf16.msra.mxu0 %v435
    %675 = vmatprep.subr.bf16.mxu0 %v432
    %676 = vmatpush2.bf16.msra.mxu0 %v431
    %677 = vmatprep.subr.bf16.mxu0 %v428
    %678 = vmatpush2.bf16.msra.mxu0 %v427
    %679 = vmatprep.subr.bf16.mxu0 %v424
    %680 = vmatpush2.bf16.msra.mxu0 %v423
    %681 = vmatprep.subr.bf16.mxu0 %v420
    %682 = vmatpush2.bf16.msra.mxu0 %v419
    %683 = vmatprep.subr.bf16.mxu0 %v416
    %684 = vmatpush2.bf16.msra.mxu0 %v415
    %685 = vmatprep.mubr.bf16.mxu0 %v558
    %686 = vmatmul.mubr.bf16.gmra.mxu0 %v544
    %v687 = vpop.f32.mrf.mxu0
    %v688 = vadd.f32 %v647, %v687
    %v689 = vpop.f32.mrf.mxu0
    %v690 = vadd.f32 %v649, %v689
    %v691 = vpop.f32.mrf.mxu0
    %v692 = vpop.f32.mrf.mxu0
    %693 = vdwg.mxu0
    %694 = vmatprep.subr.bf16.mxu0 %v476
    %695 = vmatpush1.bf16.msra.mxu0 %v475
    %696 = vmatprep.subr.bf16.mxu0 %v472
    %697 = vmatpush1.bf16.msra.mxu0 %v471
    %698 = vmatprep.subr.bf16.mxu0 %v468
    %699 = vmatpush1.bf16.msra.mxu0 %v467
    %700 = vmatprep.subr.bf16.mxu0 %v464
    %701 = vmatpush1.bf16.msra.mxu0 %v463
    %702 = vmatprep.subr.bf16.mxu0 %v460
    %703 = vmatpush1.bf16.msra.mxu0 %v459
    %704 = vmatprep.subr.bf16.mxu0 %v456
    %705 = vmatpush1.bf16.msra.mxu0 %v455
    %706 = vmatprep.subr.bf16.mxu0 %v452
    %707 = vmatpush1.bf16.msra.mxu0 %v451
    %708 = vmatprep.subr.bf16.mxu0 %v448
    %709 = vmatpush1.bf16.msra.mxu0 %v447
    %710 = vmatprep.subr.bf16.mxu0 %v508
    %711 = vmatpush2.bf16.msra.mxu0 %v507
    %712 = vmatprep.subr.bf16.mxu0 %v504
    %713 = vmatpush2.bf16.msra.mxu0 %v503
    %714 = vmatprep.subr.bf16.mxu0 %v500
    %715 = vmatpush2.bf16.msra.mxu0 %v499
    %716 = vmatprep.subr.bf16.mxu0 %v496
    %717 = vmatpush2.bf16.msra.mxu0 %v495
    %718 = vmatprep.subr.bf16.mxu0 %v492
    %719 = vmatpush2.bf16.msra.mxu0 %v491
    %720 = vmatprep.subr.bf16.mxu0 %v488
    %721 = vmatpush2.bf16.msra.mxu0 %v487
    %722 = vmatprep.subr.bf16.mxu0 %v484
    %723 = vmatpush2.bf16.msra.mxu0 %v483
    %724 = vmatprep.subr.bf16.mxu0 %v480
    %725 = vmatpush2.bf16.msra.mxu0 %v479
    %726 = vmatprep.mubr.bf16.mxu0 %v562
    %727 = vmatmul.mubr.bf16.gmra.mxu0 %v560
    %v728 = vpop.f32.mrf.mxu0
    %v729 = vadd.f32 %v688, %v728
    %v730 = vpop.f32.mrf.mxu0
    %v731 = vadd.f32 %v690, %v730
    %v732 = vpop.f32.mrf.mxu0
    %v733 = vpop.f32.mrf.mxu0
    %734 = vdwg.mxu0
    %735 = vmatprep.subr.bf16.mxu0 %v286
    %736 = vmatpush1.bf16.msra.mxu0 %v285
    %737 = vmatprep.subr.bf16.mxu0 %v282
    %738 = vmatpush1.bf16.msra.mxu0 %v281
    %739 = vmatprep.subr.bf16.mxu0 %v278
    %740 = vmatpush1.bf16.msra.mxu0 %v277
    %741 = vmatprep.subr.bf16.mxu0 %v274
    %742 = vmatpush1.bf16.msra.mxu0 %v273
    %743 = vmatprep.subr.bf16.mxu0 %v270
    %744 = vmatpush1.bf16.msra.mxu0 %v269
    %745 = vmatprep.subr.bf16.mxu0 %v266
    %746 = vmatpush1.bf16.msra.mxu0 %v265
    %747 = vmatprep.subr.bf16.mxu0 %v262
    %748 = vmatpush1.bf16.msra.mxu0 %v261
    %749 = vmatprep.subr.bf16.mxu0 %v258
    %750 = vmatpush1.bf16.msra.mxu0 %v257
    %751 = vmatprep.subr.bf16.mxu0 %v318
    %752 = vmatpush2.bf16.msra.mxu0 %v317
    %753 = vmatprep.subr.bf16.mxu0 %v314
    %754 = vmatpush2.bf16.msra.mxu0 %v313
    %755 = vmatprep.subr.bf16.mxu0 %v310
    %756 = vmatpush2.bf16.msra.mxu0 %v309
    %757 = vmatprep.subr.bf16.mxu0 %v306
    %758 = vmatpush2.bf16.msra.mxu0 %v305
    %759 = vmatprep.subr.bf16.mxu0 %v302
    %760 = vmatpush2.bf16.msra.mxu0 %v301
    %761 = vmatprep.subr.bf16.mxu0 %v298
    %762 = vmatpush2.bf16.msra.mxu0 %v297
    %763 = vmatprep.subr.bf16.mxu0 %v294
    %764 = vmatpush2.bf16.msra.mxu0 %v293
    %765 = vmatprep.subr.bf16.mxu0 %v290
    %766 = vmatpush2.bf16.msra.mxu0 %v289
    %767 = vmatprep.mubr.bf16.mxu0 %v551
    %768 = vmatmul.mubr.bf16.gmra.mxu0 %v537
    %v769 = vpop.f32.mrf.mxu0
    %v770 = vadd.f32 0.0, %v769
    %v771 = vpop.f32.mrf.mxu0
    %v772 = vadd.f32 0.0, %v771
    %v773 = vpop.f32.mrf.mxu0
    %v774 = vpop.f32.mrf.mxu0
    %775 = vdwg.mxu0
    %776 = vmatprep.subr.bf16.mxu0 %v350
    %777 = vmatpush1.bf16.msra.mxu0 %v349
    %778 = vmatprep.subr.bf16.mxu0 %v346
    %779 = vmatpush1.bf16.msra.mxu0 %v345
    %780 = vmatprep.subr.bf16.mxu0 %v342
    %781 = vmatpush1.bf16.msra.mxu0 %v341
    %782 = vmatprep.subr.bf16.mxu0 %v338
    %783 = vmatpush1.bf16.msra.mxu0 %v337
    %784 = vmatprep.subr.bf16.mxu0 %v334
    %785 = vmatpush1.bf16.msra.mxu0 %v333
    %786 = vmatprep.subr.bf16.mxu0 %v330
    %787 = vmatpush1.bf16.msra.mxu0 %v329
    %788 = vmatprep.subr.bf16.mxu0 %v326
    %789 = vmatpush1.bf16.msra.mxu0 %v325
    %790 = vmatprep.subr.bf16.mxu0 %v322
    %791 = vmatpush1.bf16.msra.mxu0 %v321
    %792 = vmatprep.subr.bf16.mxu0 %v382
    %793 = vmatpush2.bf16.msra.mxu0 %v381
    %794 = vmatprep.subr.bf16.mxu0 %v378
    %795 = vmatpush2.bf16.msra.mxu0 %v377
    %796 = vmatprep.subr.bf16.mxu0 %v374
    %797 = vmatpush2.bf16.msra.mxu0 %v373
    %798 = vmatprep.subr.bf16.mxu0 %v370
    %799 = vmatpush2.bf16.msra.mxu0 %v369
    %800 = vmatprep.subr.bf16.mxu0 %v366
    %801 = vmatpush2.bf16.msra.mxu0 %v365
    %802 = vmatprep.subr.bf16.mxu0 %v362
    %803 = vmatpush2.bf16.msra.mxu0 %v361
    %804 = vmatprep.subr.bf16.mxu0 %v358
    %805 = vmatpush2.bf16.msra.mxu0 %v357
    %806 = vmatprep.subr.bf16.mxu0 %v354
    %807 = vmatpush2.bf16.msra.mxu0 %v353
    %808 = vmatprep.mubr.bf16.mxu0 %v561
    %809 = vmatmul.mubr.bf16.gmra.mxu0 %v559
    %v810 = vpop.f32.mrf.mxu0
    %v811 = vadd.f32 %v770, %v810
    %v812 = vpop.f32.mrf.mxu0
    %v813 = vadd.f32 %v772, %v812
    %v814 = vpop.f32.mrf.mxu0
    %v815 = vpop.f32.mrf.mxu0
    %816 = vdwg.mxu0
    %817 = vmatprep.subr.bf16.mxu0 %v414
    %818 = vmatpush1.bf16.msra.mxu0 %v413
    %819 = vmatprep.subr.bf16.mxu0 %v410
    %820 = vmatpush1.bf16.msra.mxu0 %v409
    %821 = vmatprep.subr.bf16.mxu0 %v406
    %822 = vmatpush1.bf16.msra.mxu0 %v405
    %823 = vmatprep.subr.bf16.mxu0 %v402
    %824 = vmatpush1.bf16.msra.mxu0 %v401
    %825 = vmatprep.subr.bf16.mxu0 %v398
    %826 = vmatpush1.bf16.msra.mxu0 %v397
    %827 = vmatprep.subr.bf16.mxu0 %v394
    %828 = vmatpush1.bf16.msra.mxu0 %v393
    %829 = vmatprep.subr.bf16.mxu0 %v390
    %830 = vmatpush1.bf16.msra.mxu0 %v389
    %831 = vmatprep.subr.bf16.mxu0 %v386
    %832 = vmatpush1.bf16.msra.mxu0 %v385
    %833 = vmatprep.subr.bf16.mxu0 %v446
    %834 = vmatpush2.bf16.msra.mxu0 %v445
    %835 = vmatprep.subr.bf16.mxu0 %v442
    %836 = vmatpush2.bf16.msra.mxu0 %v441
    %837 = vmatprep.subr.bf16.mxu0 %v438
    %838 = vmatpush2.bf16.msra.mxu0 %v437
    %839 = vmatprep.subr.bf16.mxu0 %v434
    %840 = vmatpush2.bf16.msra.mxu0 %v433
    %841 = vmatprep.subr.bf16.mxu0 %v430
    %842 = vmatpush2.bf16.msra.mxu0 %v429
    %843 = vmatprep.subr.bf16.mxu0 %v426
    %844 = vmatpush2.bf16.msra.mxu0 %v425
    %845 = vmatprep.subr.bf16.mxu0 %v422
    %846 = vmatpush2.bf16.msra.mxu0 %v421
    %847 = vmatprep.subr.bf16.mxu0 %v418
    %848 = vmatpush2.bf16.msra.mxu0 %v417
    %849 = vmatprep.mubr.bf16.mxu0 %v558
    %850 = vmatmul.mubr.bf16.gmra.mxu0 %v544
    %v851 = vpop.f32.mrf.mxu0
    %v852 = vadd.f32 %v811, %v851
    %v853 = vpop.f32.mrf.mxu0
    %v854 = vadd.f32 %v813, %v853
    %v855 = vpop.f32.mrf.mxu0
    %v856 = vpop.f32.mrf.mxu0
    %857 = vdwg.mxu0
    %858 = vmatprep.subr.bf16.mxu0 %v478
    %859 = vmatpush1.bf16.msra.mxu0 %v477
    %860 = vmatprep.subr.bf16.mxu0 %v474
    %861 = vmatpush1.bf16.msra.mxu0 %v473
    %862 = vmatprep.subr.bf16.mxu0 %v470
    %863 = vmatpush1.bf16.msra.mxu0 %v469
    %864 = vmatprep.subr.bf16.mxu0 %v466
    %865 = vmatpush1.bf16.msra.mxu0 %v465
    %866 = vmatprep.subr.bf16.mxu0 %v462
    %867 = vmatpush1.bf16.msra.mxu0 %v461
    %868 = vmatprep.subr.bf16.mxu0 %v458
    %869 = vmatpush1.bf16.msra.mxu0 %v457
    %870 = vmatprep.subr.bf16.mxu0 %v454
    %871 = vmatpush1.bf16.msra.mxu0 %v453
    %872 = vmatprep.subr.bf16.mxu0 %v450
    %873 = vmatpush1.bf16.msra.mxu0 %v449
    %874 = vmatprep.subr.bf16.mxu0 %v510
    %875 = vmatpush2.bf16.msra.mxu0 %v509
    %876 = vmatprep.subr.bf16.mxu0 %v506
    %877 = vmatpush2.bf16.msra.mxu0 %v505
    %878 = vmatprep.subr.bf16.mxu0 %v502
    %879 = vmatpush2.bf16.msra.mxu0 %v501
    %880 = vmatprep.subr.bf16.mxu0 %v498
    %881 = vmatpush2.bf16.msra.mxu0 %v497
    %882 = vmatprep.subr.bf16.mxu0 %v494
    %883 = vmatpush2.bf16.msra.mxu0 %v493
    %884 = vmatprep.subr.bf16.mxu0 %v490
    %885 = vmatpush2.bf16.msra.mxu0 %v489
    %886 = vmatprep.subr.bf16.mxu0 %v486
    %887 = vmatpush2.bf16.msra.mxu0 %v485
    %888 = vmatprep.subr.bf16.mxu0 %v482
    %889 = vmatpush2.bf16.msra.mxu0 %v481
    %890 = vmatprep.mubr.bf16.mxu0 %v562
    %891 = vmatmul.mubr.bf16.gmra.mxu0 %v560
    %v892 = vpop.f32.mrf.mxu0
    %v893 = vadd.f32 %v852, %v892
    %v894 = vpop.f32.mrf.mxu0
    %v895 = vadd.f32 %v854, %v894
    %v896 = vpop.f32.mrf.mxu0
    %v897 = vpop.f32.mrf.mxu0
    %898 = vdwg.mxu0
    %v900 = vlaneseq
    %v901 = vshrl.u32 %v900, 7
    %v902 = vsub.s32 0, %v901
    %v903 = vrot.slane %v512, %v902
    %v904 = vlaneseq
    %v905 = vshrl.u32 %v904, 7
    %v906 = vsub.s32 1, %v905
    %v907 = vrot.slane %v512, %v906
    %v908 = vlaneseq
    %v909 = vshrl.u32 %v908, 7
    %v910 = vsub.s32 2, %v909
    %v911 = vrot.slane %v512, %v910
    %v912 = vlaneseq
    %v913 = vshrl.u32 %v912, 7
    %v914 = vsub.s32 3, %v913
    %v915 = vrot.slane %v512, %v914
    %v920 = vmul.f32 %v729, %v903
    %v921 = vmul.f32 %v731, %v907
    %v922 = vmul.f32 %v893, %v911
    %v923 = vmul.f32 %v895, %v915
    %v925 = vlaneseq
    %v926 = vshrl.u32 %v925, 7
    %v927 = vsub.s32 0, %v926
    %v928 = vrot.slane %v511, %v927
    %v929 = vlaneseq
    %v930 = vshrl.u32 %v929, 7
    %v931 = vsub.s32 1, %v930
    %v932 = vrot.slane %v511, %v931
    %v933 = vlaneseq
    %v934 = vshrl.u32 %v933, 7
    %v935 = vsub.s32 2, %v934
    %v936 = vrot.slane %v511, %v935
    %v937 = vlaneseq
    %v938 = vshrl.u32 %v937, 7
    %v939 = vsub.s32 3, %v938
    %v940 = vrot.slane %v511, %v939
    %v945 = vadd.f32 %v920, %v928
    %v946 = vadd.f32 %v921, %v932
    %v947 = vadd.f32 %v922, %v936
    %v948 = vadd.f32 %v923, %v940
    %v949 = vmax.f32 %v945, 0.0
    %v950 = vmax.f32 %v946, 0.0
    %v951 = vmax.f32 %v947, 0.0
    %v952 = vmax.f32 %v948, 0.0
    %v953 = vpack.c.bf16 %v949, %v949
    %v954 = vpack.c.bf16 %v950, %v950
    %v955 = vpack.c.bf16 %v951, %v951
    %v956 = vpack.c.bf16 %v952, %v952
    %v957 = vld [vmem:[#allocation5] sm:$0xff]
    %v958 = vld [vmem:[#allocation5 + $0x8] sm:$0xff]
    %v959 = vld [vmem:[#allocation5 + $0x10] sm:$0xff]
    %v960 = vld [vmem:[#allocation5 + $0x18] sm:$0xff]
    %v961 = vld [vmem:[#allocation5 + $0x20] sm:$0xff]
    %v962 = vld [vmem:[#allocation5 + $0x28] sm:$0xff]
    %v963 = vld [vmem:[#allocation5 + $0x30] sm:$0xff]
    %v964 = vld [vmem:[#allocation5 + $0x38] sm:$0xff]
    %v965 = vld [vmem:[#allocation5 + $0x40] sm:$0xff]
    %v966 = vld [vmem:[#allocation5 + $0x48] sm:$0xff]
    %v967 = vld [vmem:[#allocation5 + $0x50] sm:$0xff]
    %v968 = vld [vmem:[#allocation5 + $0x58] sm:$0xff]
    %v969 = vld [vmem:[#allocation5 + $0x60] sm:$0xff]
    %v970 = vld [vmem:[#allocation5 + $0x68] sm:$0xff]
    %v971 = vld [vmem:[#allocation5 + $0x70] sm:$0xff]
    %v972 = vld [vmem:[#allocation5 + $0x78] sm:$0xff]
    %v973 = vld [vmem:[#allocation5 + $0x80] sm:$0xff]
    %v974 = vld [vmem:[#allocation5 + $0x88] sm:$0xff]
    %v975 = vld [vmem:[#allocation5 + $0x90] sm:$0xff]
    %v976 = vld [vmem:[#allocation5 + $0x98] sm:$0xff]
    %v977 = vld [vmem:[#allocation5 + $0xa0] sm:$0xff]
    %v978 = vld [vmem:[#allocation5 + $0xa8] sm:$0xff]
    %v979 = vld [vmem:[#allocation5 + $0xb0] sm:$0xff]
    %v980 = vld [vmem:[#allocation5 + $0xb8] sm:$0xff]
    %v981 = vld [vmem:[#allocation5 + $0xc0] sm:$0xff]
    %v982 = vld [vmem:[#allocation5 + $0xc8] sm:$0xff]
    %v983 = vld [vmem:[#allocation5 + $0xd0] sm:$0xff]
    %v984 = vld [vmem:[#allocation5 + $0xd8] sm:$0xff]
    %v985 = vld [vmem:[#allocation5 + $0xe0] sm:$0xff]
    %v986 = vld [vmem:[#allocation5 + $0xe8] sm:$0xff]
    %v987 = vld [vmem:[#allocation5 + $0xf0] sm:$0xff]
    %v988 = vld [vmem:[#allocation5 + $0xf8] sm:$0xff]
    %v989 = vld [vmem:[#allocation5 + $0x100] sm:$0xff]
    %v990 = vld [vmem:[#allocation5 + $0x108] sm:$0xff]
    %v991 = vld [vmem:[#allocation5 + $0x110] sm:$0xff]
    %v992 = vld [vmem:[#allocation5 + $0x118] sm:$0xff]
    %v993 = vld [vmem:[#allocation5 + $0x120] sm:$0xff]
    %v994 = vld [vmem:[#allocation5 + $0x128] sm:$0xff]
    %v995 = vld [vmem:[#allocation5 + $0x130] sm:$0xff]
    %v996 = vld [vmem:[#allocation5 + $0x138] sm:$0xff]
    %v997 = vld [vmem:[#allocation5 + $0x140] sm:$0xff]
    %v998 = vld [vmem:[#allocation5 + $0x148] sm:$0xff]
    %v999 = vld [vmem:[#allocation5 + $0x150] sm:$0xff]
    %v1000 = vld [vmem:[#allocation5 + $0x158] sm:$0xff]
    %v1001 = vld [vmem:[#allocation5 + $0x160] sm:$0xff]
    %v1002 = vld [vmem:[#allocation5 + $0x168] sm:$0xff]
    %v1003 = vld [vmem:[#allocation5 + $0x170] sm:$0xff]
    %v1004 = vld [vmem:[#allocation5 + $0x178] sm:$0xff]
    %v1005 = vld [vmem:[#allocation5 + $0x180] sm:$0xff]
    %v1006 = vld [vmem:[#allocation5 + $0x188] sm:$0xff]
    %v1007 = vld [vmem:[#allocation5 + $0x190] sm:$0xff]
    %v1008 = vld [vmem:[#allocation5 + $0x198] sm:$0xff]
    %v1009 = vld [vmem:[#allocation5 + $0x1a0] sm:$0xff]
    %v1010 = vld [vmem:[#allocation5 + $0x1a8] sm:$0xff]
    %v1011 = vld [vmem:[#allocation5 + $0x1b0] sm:$0xff]
    %v1012 = vld [vmem:[#allocation5 + $0x1b8] sm:$0xff]
    %v1013 = vld [vmem:[#allocation5 + $0x1c0] sm:$0xff]
    %v1014 = vld [vmem:[#allocation5 + $0x1c8] sm:$0xff]
    %v1015 = vld [vmem:[#allocation5 + $0x1d0] sm:$0xff]
    %v1016 = vld [vmem:[#allocation5 + $0x1d8] sm:$0xff]
    %v1017 = vld [vmem:[#allocation5 + $0x1e0] sm:$0xff]
    %v1018 = vld [vmem:[#allocation5 + $0x1e8] sm:$0xff]
    %v1019 = vld [vmem:[#allocation5 + $0x1f0] sm:$0xff]
    %v1020 = vld [vmem:[#allocation5 + $0x1f8] sm:$0xff]
    %v1021 = vld [vmem:[%s6] sm:$0x3]
    %v1023 = vlaneseq
    %v1024 = vshrl.u32 %v1023, 7
    %v1025 = vsub.s32 0, %v1024
    %v1026 = vrot.slane %v1021, %v1025
    %v1027 = vlaneseq
    %v1028 = vshrl.u32 %v1027, 7
    %v1029 = vsub.s32 1, %v1028
    %v1030 = vrot.slane %v1021, %v1029
    %v1097 = vunpack.c.l.b16 %v957
    %v1098 = vunpack.c.h.b16 %v957
    %v1099 = vunpack.c.l.b16 %v958
    %v1100 = vunpack.c.h.b16 %v958
    %v1101 = vunpack.c.l.b16 %v959
    %v1102 = vunpack.c.h.b16 %v959
    %v1103 = vunpack.c.l.b16 %v960
    %v1104 = vunpack.c.h.b16 %v960
    %v1105 = vunpack.c.l.b16 %v961
    %v1106 = vunpack.c.h.b16 %v961
    %v1107 = vunpack.c.l.b16 %v962
    %v1108 = vunpack.c.h.b16 %v962
    %v1109 = vunpack.c.l.b16 %v963
    %v1110 = vunpack.c.h.b16 %v963
    %v1111 = vunpack.c.l.b16 %v964
    %v1112 = vunpack.c.h.b16 %v964
    %v1113 = vunpack.c.l.b16 %v965
    %v1114 = vunpack.c.h.b16 %v965
    %v1115 = vunpack.c.l.b16 %v966
    %v1116 = vunpack.c.h.b16 %v966
    %v1117 = vunpack.c.l.b16 %v967
    %v1118 = vunpack.c.h.b16 %v967
    %v1119 = vunpack.c.l.b16 %v968
    %v1120 = vunpack.c.h.b16 %v968
    %v1121 = vunpack.c.l.b16 %v969
    %v1122 = vunpack.c.h.b16 %v969
    %v1123 = vunpack.c.l.b16 %v970
    %v1124 = vunpack.c.h.b16 %v970
    %v1125 = vunpack.c.l.b16 %v971
    %v1126 = vunpack.c.h.b16 %v971
    %v1127 = vunpack.c.l.b16 %v972
    %v1128 = vunpack.c.h.b16 %v972
    %v1129 = vunpack.c.l.b16 %v973
    %v1130 = vunpack.c.h.b16 %v973
    %v1131 = vunpack.c.l.b16 %v974
    %v1132 = vunpack.c.h.b16 %v974
    %v1133 = vunpack.c.l.b16 %v975
    %v1134 = vunpack.c.h.b16 %v975
    %v1135 = vunpack.c.l.b16 %v976
    %v1136 = vunpack.c.h.b16 %v976
    %v1137 = vunpack.c.l.b16 %v977
    %v1138 = vunpack.c.h.b16 %v977
    %v1139 = vunpack.c.l.b16 %v978
    %v1140 = vunpack.c.h.b16 %v978
    %v1141 = vunpack.c.l.b16 %v979
    %v1142 = vunpack.c.h.b16 %v979
    %v1143 = vunpack.c.l.b16 %v980
    %v1144 = vunpack.c.h.b16 %v980
    %v1145 = vunpack.c.l.b16 %v981
    %v1146 = vunpack.c.h.b16 %v981
    %v1147 = vunpack.c.l.b16 %v982
    %v1148 = vunpack.c.h.b16 %v982
    %v1149 = vunpack.c.l.b16 %v983
    %v1150 = vunpack.c.h.b16 %v983
    %v1151 = vunpack.c.l.b16 %v984
    %v1152 = vunpack.c.h.b16 %v984
    %v1153 = vunpack.c.l.b16 %v985
    %v1154 = vunpack.c.h.b16 %v985
    %v1155 = vunpack.c.l.b16 %v986
    %v1156 = vunpack.c.h.b16 %v986
    %v1157 = vunpack.c.l.b16 %v987
    %v1158 = vunpack.c.h.b16 %v987
    %v1159 = vunpack.c.l.b16 %v988
    %v1160 = vunpack.c.h.b16 %v988
    %v1161 = vunpack.c.l.b16 %v989
    %v1162 = vunpack.c.h.b16 %v989
    %v1163 = vunpack.c.l.b16 %v990
    %v1164 = vunpack.c.h.b16 %v990
    %v1165 = vunpack.c.l.b16 %v991
    %v1166 = vunpack.c.h.b16 %v991
    %v1167 = vunpack.c.l.b16 %v992
    %v1168 = vunpack.c.h.b16 %v992
    %v1169 = vunpack.c.l.b16 %v993
    %v1170 = vunpack.c.h.b16 %v993
    %v1171 = vunpack.c.l.b16 %v994
    %v1172 = vunpack.c.h.b16 %v994
    %v1173 = vunpack.c.l.b16 %v995
    %v1174 = vunpack.c.h.b16 %v995
    %v1175 = vunpack.c.l.b16 %v996
    %v1176 = vunpack.c.h.b16 %v996
    %v1177 = vunpack.c.l.b16 %v997
    %v1178 = vunpack.c.h.b16 %v997
    %v1179 = vunpack.c.l.b16 %v998
    %v1180 = vunpack.c.h.b16 %v998
    %v1181 = vunpack.c.l.b16 %v999
    %v1182 = vunpack.c.h.b16 %v999
    %v1183 = vunpack.c.l.b16 %v1000
    %v1184 = vunpack.c.h.b16 %v1000
    %v1185 = vunpack.c.l.b16 %v1001
    %v1186 = vunpack.c.h.b16 %v1001
    %v1187 = vunpack.c.l.b16 %v1002
    %v1188 = vunpack.c.h.b16 %v1002
    %v1189 = vunpack.c.l.b16 %v1003
    %v1190 = vunpack.c.h.b16 %v1003
    %v1191 = vunpack.c.l.b16 %v1004
    %v1192 = vunpack.c.h.b16 %v1004
    %v1193 = vunpack.c.l.b16 %v1005
    %v1194 = vunpack.c.h.b16 %v1005
    %v1195 = vunpack.c.l.b16 %v1006
    %v1196 = vunpack.c.h.b16 %v1006
    %v1197 = vunpack.c.l.b16 %v1007
    %v1198 = vunpack.c.h.b16 %v1007
    %v1199 = vunpack.c.l.b16 %v1008
    %v1200 = vunpack.c.h.b16 %v1008
    %v1201 = vunpack.c.l.b16 %v1009
    %v1202 = vunpack.c.h.b16 %v1009
    %v1203 = vunpack.c.l.b16 %v1010
    %v1204 = vunpack.c.h.b16 %v1010
    %v1205 = vunpack.c.l.b16 %v1011
    %v1206 = vunpack.c.h.b16 %v1011
    %v1207 = vunpack.c.l.b16 %v1012
    %v1208 = vunpack.c.h.b16 %v1012
    %v1209 = vunpack.c.l.b16 %v1013
    %v1210 = vunpack.c.h.b16 %v1013
    %v1211 = vunpack.c.l.b16 %v1014
    %v1212 = vunpack.c.h.b16 %v1014
    %v1213 = vunpack.c.l.b16 %v1015
    %v1214 = vunpack.c.h.b16 %v1015
    %v1215 = vunpack.c.l.b16 %v1016
    %v1216 = vunpack.c.h.b16 %v1016
    %v1217 = vunpack.c.l.b16 %v1017
    %v1218 = vunpack.c.h.b16 %v1017
    %v1219 = vunpack.c.l.b16 %v1018
    %v1220 = vunpack.c.h.b16 %v1018
    %v1221 = vunpack.c.l.b16 %v1019
    %v1222 = vunpack.c.h.b16 %v1019
    %v1223 = vunpack.c.l.b16 %v1020
    %v1224 = vunpack.c.h.b16 %v1020
    %v1225 = vpack.c.b16 %v1099, %v1097
    %v1226 = vpack.c.b16 %v1100, %v1098
    %v1227 = vpack.c.b16 %v1103, %v1101
    %v1228 = vpack.c.b16 %v1104, %v1102
    %v1229 = vpack.c.b16 %v1107, %v1105
    %v1230 = vpack.c.b16 %v1108, %v1106
    %v1231 = vpack.c.b16 %v1111, %v1109
    %v1232 = vpack.c.b16 %v1112, %v1110
    %v1233 = vpack.c.b16 %v1115, %v1113
    %v1234 = vpack.c.b16 %v1116, %v1114
    %v1235 = vpack.c.b16 %v1119, %v1117
    %v1236 = vpack.c.b16 %v1120, %v1118
    %v1237 = vpack.c.b16 %v1123, %v1121
    %v1238 = vpack.c.b16 %v1124, %v1122
    %v1239 = vpack.c.b16 %v1127, %v1125
    %v1240 = vpack.c.b16 %v1128, %v1126
    %v1241 = vpack.c.b16 %v1131, %v1129
    %v1242 = vpack.c.b16 %v1132, %v1130
    %v1243 = vpack.c.b16 %v1135, %v1133
    %v1244 = vpack.c.b16 %v1136, %v1134
    %v1245 = vpack.c.b16 %v1139, %v1137
    %v1246 = vpack.c.b16 %v1140, %v1138
    %v1247 = vpack.c.b16 %v1143, %v1141
    %v1248 = vpack.c.b16 %v1144, %v1142
    %v1249 = vpack.c.b16 %v1147, %v1145
    %v1250 = vpack.c.b16 %v1148, %v1146
    %v1251 = vpack.c.b16 %v1151, %v1149
    %v1252 = vpack.c.b16 %v1152, %v1150
    %v1253 = vpack.c.b16 %v1155, %v1153
    %v1254 = vpack.c.b16 %v1156, %v1154
    %v1255 = vpack.c.b16 %v1159, %v1157
    %v1256 = vpack.c.b16 %v1160, %v1158
    %v1257 = vpack.c.b16 %v1163, %v1161
    %v1258 = vpack.c.b16 %v1164, %v1162
    %v1259 = vpack.c.b16 %v1167, %v1165
    %v1260 = vpack.c.b16 %v1168, %v1166
    %v1261 = vpack.c.b16 %v1171, %v1169
    %v1262 = vpack.c.b16 %v1172, %v1170
    %v1263 = vpack.c.b16 %v1175, %v1173
    %v1264 = vpack.c.b16 %v1176, %v1174
    %v1265 = vpack.c.b16 %v1179, %v1177
    %v1266 = vpack.c.b16 %v1180, %v1178
    %v1267 = vpack.c.b16 %v1183, %v1181
    %v1268 = vpack.c.b16 %v1184, %v1182
    %v1269 = vpack.c.b16 %v1187, %v1185
    %v1270 = vpack.c.b16 %v1188, %v1186
    %v1271 = vpack.c.b16 %v1191, %v1189
    %v1272 = vpack.c.b16 %v1192, %v1190
    %v1273 = vpack.c.b16 %v1195, %v1193
    %v1274 = vpack.c.b16 %v1196, %v1194
    %v1275 = vpack.c.b16 %v1199, %v1197
    %v1276 = vpack.c.b16 %v1200, %v1198
    %v1277 = vpack.c.b16 %v1203, %v1201
    %v1278 = vpack.c.b16 %v1204, %v1202
    %v1279 = vpack.c.b16 %v1207, %v1205
    %v1280 = vpack.c.b16 %v1208, %v1206
    %v1281 = vpack.c.b16 %v1211, %v1209
    %v1282 = vpack.c.b16 %v1212, %v1210
    %v1283 = vpack.c.b16 %v1215, %v1213
    %v1284 = vpack.c.b16 %v1216, %v1214
    %v1285 = vpack.c.b16 %v1219, %v1217
    %v1286 = vpack.c.b16 %v1220, %v1218
    %v1287 = vpack.c.b16 %v1223, %v1221
    %v1288 = vpack.c.b16 %v1224, %v1222
    %1353 = vmatprep.subr.bf16.mxu0 %v1240
    %1354 = vmatpush1.bf16.msra.mxu0 %v1239
    %1355 = vmatprep.subr.bf16.mxu0 %v1238
    %1356 = vmatpush1.bf16.msra.mxu0 %v1237
    %1357 = vmatprep.subr.bf16.mxu0 %v1236
    %1358 = vmatpush1.bf16.msra.mxu0 %v1235
    %1359 = vmatprep.subr.bf16.mxu0 %v1234
    %1360 = vmatpush1.bf16.msra.mxu0 %v1233
    %1361 = vmatprep.subr.bf16.mxu0 %v1232
    %1362 = vmatpush1.bf16.msra.mxu0 %v1231
    %1363 = vmatprep.subr.bf16.mxu0 %v1230
    %1364 = vmatpush1.bf16.msra.mxu0 %v1229
    %1365 = vmatprep.subr.bf16.mxu0 %v1228
    %1366 = vmatpush1.bf16.msra.mxu0 %v1227
    %1367 = vmatprep.subr.bf16.mxu0 %v1226
    %1368 = vmatpush1.bf16.msra.mxu0 %v1225
    %1369 = vmatprep.subr.bf16.mxu0 %v1256
    %1370 = vmatpush2.bf16.msra.mxu0 %v1255
    %1371 = vmatprep.subr.bf16.mxu0 %v1254
    %1372 = vmatpush2.bf16.msra.mxu0 %v1253
    %1373 = vmatprep.subr.bf16.mxu0 %v1252
    %1374 = vmatpush2.bf16.msra.mxu0 %v1251
    %1375 = vmatprep.subr.bf16.mxu0 %v1250
    %1376 = vmatpush2.bf16.msra.mxu0 %v1249
    %1377 = vmatprep.subr.bf16.mxu0 %v1248
    %1378 = vmatpush2.bf16.msra.mxu0 %v1247
    %1379 = vmatprep.subr.bf16.mxu0 %v1246
    %1380 = vmatpush2.bf16.msra.mxu0 %v1245
    %1381 = vmatprep.subr.bf16.mxu0 %v1244
    %1382 = vmatpush2.bf16.msra.mxu0 %v1243
    %1383 = vmatprep.subr.bf16.mxu0 %v1242
    %1384 = vmatpush2.bf16.msra.mxu0 %v1241
    %1385 = vmatprep.mubr.bf16.mxu0 %v954
    %1386 = vmatmul.mubr.bf16.gmra.mxu0 %v953
    %v1387 = vpop.f32.mrf.mxu0
    %v1388 = vadd.f32 %v1026, %v1387
    %v1389 = vpop.f32.mrf.mxu0
    %v1390 = vadd.f32 %v1030, %v1389
    %v1391 = vpop.f32.mrf.mxu0
    %v1392 = vpop.f32.mrf.mxu0
    %1393 = vdwg.mxu0
    %1394 = vmatprep.subr.bf16.mxu0 %v1272
    %1395 = vmatpush1.bf16.msra.mxu0 %v1271
    %1396 = vmatprep.subr.bf16.mxu0 %v1270
    %1397 = vmatpush1.bf16.msra.mxu0 %v1269
    %1398 = vmatprep.subr.bf16.mxu0 %v1268
    %1399 = vmatpush1.bf16.msra.mxu0 %v1267
    %1400 = vmatprep.subr.bf16.mxu0 %v1266
    %1401 = vmatpush1.bf16.msra.mxu0 %v1265
    %1402 = vmatprep.subr.bf16.mxu0 %v1264
    %1403 = vmatpush1.bf16.msra.mxu0 %v1263
    %1404 = vmatprep.subr.bf16.mxu0 %v1262
    %1405 = vmatpush1.bf16.msra.mxu0 %v1261
    %1406 = vmatprep.subr.bf16.mxu0 %v1260
    %1407 = vmatpush1.bf16.msra.mxu0 %v1259
    %1408 = vmatprep.subr.bf16.mxu0 %v1258
    %1409 = vmatpush1.bf16.msra.mxu0 %v1257
    %1410 = vmatprep.subr.bf16.mxu0 %v1288
    %1411 = vmatpush2.bf16.msra.mxu0 %v1287
    %1412 = vmatprep.subr.bf16.mxu0 %v1286
    %1413 = vmatpush2.bf16.msra.mxu0 %v1285
    %1414 = vmatprep.subr.bf16.mxu0 %v1284
    %1415 = vmatpush2.bf16.msra.mxu0 %v1283
    %1416 = vmatprep.subr.bf16.mxu0 %v1282
    %1417 = vmatpush2.bf16.msra.mxu0 %v1281
    %1418 = vmatprep.subr.bf16.mxu0 %v1280
    %1419 = vmatpush2.bf16.msra.mxu0 %v1279
    %1420 = vmatprep.subr.bf16.mxu0 %v1278
    %1421 = vmatpush2.bf16.msra.mxu0 %v1277
    %1422 = vmatprep.subr.bf16.mxu0 %v1276
    %1423 = vmatpush2.bf16.msra.mxu0 %v1275
    %1424 = vmatprep.subr.bf16.mxu0 %v1274
    %1425 = vmatpush2.bf16.msra.mxu0 %v1273
    %1426 = vmatprep.mubr.bf16.mxu0 %v956
    %1427 = vmatmul.mubr.bf16.gmra.mxu0 %v955
    %v1428 = vpop.f32.mrf.mxu0
    %v1429 = vadd.f32 %v1388, %v1428
    %v1430 = vpop.f32.mrf.mxu0
    %v1431 = vadd.f32 %v1390, %v1430
    %v1432 = vpop.f32.mrf.mxu0
    %v1433 = vpop.f32.mrf.mxu0
    %1434 = vdwg.mxu0
    %v1435 = vmax.f32 %v1429, 0.0
    %v1436 = vmax.f32 %v1431, 0.0
    %v1437 = vpack.c.bf16 %v1435, %v1435
    %v1438 = vpack.c.bf16 %v1436, %v1436
    %v1439 = vld [vmem:[%s7] sm:$0xf]
    %v1440 = vld [vmem:[%s7 + $0x4] sm:$0xf]
    %v1441 = vld [vmem:[%s7 + $0x8] sm:$0xf]
    %v1442 = vld [vmem:[%s7 + $0xc] sm:$0xf]
    %v1443 = vld [vmem:[%s7 + $0x10] sm:$0xf]
    %v1444 = vld [vmem:[%s7 + $0x14] sm:$0xf]
    %v1445 = vld [vmem:[%s7 + $0x18] sm:$0xf]
    %v1446 = vld [vmem:[%s7 + $0x1c] sm:$0xf]
    %v1447 = vld [vmem:[%s7 + $0x20] sm:$0xf]
    %v1448 = vld [vmem:[%s7 + $0x24] sm:$0xf]
    %v1449 = vld [vmem:[%s7 + $0x28] sm:$0xf]
    %v1450 = vld [vmem:[%s7 + $0x2c] sm:$0xf]
    %v1451 = vld [vmem:[%s7 + $0x30] sm:$0xf]
    %v1452 = vld [vmem:[%s7 + $0x34] sm:$0xf]
    %v1453 = vld [vmem:[%s7 + $0x38] sm:$0xf]
    %v1454 = vld [vmem:[%s7 + $0x3c] sm:$0xf]
    %v1455 = vld [vmem:[%s7 + $0x40] sm:$0xf]
    %v1456 = vld [vmem:[%s7 + $0x44] sm:$0xf]
    %v1457 = vld [vmem:[%s7 + $0x48] sm:$0xf]
    %v1458 = vld [vmem:[%s7 + $0x4c] sm:$0xf]
    %v1459 = vld [vmem:[%s7 + $0x50] sm:$0xf]
    %v1460 = vld [vmem:[%s7 + $0x54] sm:$0xf]
    %v1461 = vld [vmem:[%s7 + $0x58] sm:$0xf]
    %v1462 = vld [vmem:[%s7 + $0x5c] sm:$0xf]
    %v1463 = vld [vmem:[%s7 + $0x60] sm:$0xf]
    %v1464 = vld [vmem:[%s7 + $0x64] sm:$0xf]
    %v1465 = vld [vmem:[%s7 + $0x68] sm:$0xf]
    %v1466 = vld [vmem:[%s7 + $0x6c] sm:$0xf]
    %v1467 = vld [vmem:[%s7 + $0x70] sm:$0xf]
    %v1468 = vld [vmem:[%s7 + $0x74] sm:$0xf]
    %v1469 = vld [vmem:[%s7 + $0x78] sm:$0xf]
    %v1470 = vld [vmem:[%s7 + $0x7c] sm:$0xf]
    %v1471 = vld [vmem:[%s8] sm:$0x1]
    %v1473 = vlaneseq
    %v1474 = vshrl.u32 %v1473, 7
    %v1475 = vsub.s32 0, %v1474
    %v1476 = vrot.slane %v1471, %v1475
    %v1510 = vunpack.c.l.b16 %v1439
    %v1511 = vunpack.c.l.b16 %v1440
    %v1512 = vunpack.c.l.b16 %v1441
    %v1513 = vunpack.c.l.b16 %v1442
    %v1514 = vunpack.c.l.b16 %v1443
    %v1515 = vunpack.c.l.b16 %v1444
    %v1516 = vunpack.c.l.b16 %v1445
    %v1517 = vunpack.c.l.b16 %v1446
    %v1518 = vunpack.c.l.b16 %v1447
    %v1519 = vunpack.c.l.b16 %v1448
    %v1520 = vunpack.c.l.b16 %v1449
    %v1521 = vunpack.c.l.b16 %v1450
    %v1522 = vunpack.c.l.b16 %v1451
    %v1523 = vunpack.c.l.b16 %v1452
    %v1524 = vunpack.c.l.b16 %v1453
    %v1525 = vunpack.c.l.b16 %v1454
    %v1526 = vunpack.c.l.b16 %v1455
    %v1527 = vunpack.c.l.b16 %v1456
    %v1528 = vunpack.c.l.b16 %v1457
    %v1529 = vunpack.c.l.b16 %v1458
    %v1530 = vunpack.c.l.b16 %v1459
    %v1531 = vunpack.c.l.b16 %v1460
    %v1532 = vunpack.c.l.b16 %v1461
    %v1533 = vunpack.c.l.b16 %v1462
    %v1534 = vunpack.c.l.b16 %v1463
    %v1535 = vunpack.c.l.b16 %v1464
    %v1536 = vunpack.c.l.b16 %v1465
    %v1537 = vunpack.c.l.b16 %v1466
    %v1538 = vunpack.c.l.b16 %v1467
    %v1539 = vunpack.c.l.b16 %v1468
    %v1540 = vunpack.c.l.b16 %v1469
    %v1541 = vunpack.c.l.b16 %v1470
    %v1542 = vpack.c.b16 %v1511, %v1510
    %v1543 = vpack.c.b16 %v1513, %v1512
    %v1544 = vpack.c.b16 %v1515, %v1514
    %v1545 = vpack.c.b16 %v1517, %v1516
    %v1546 = vpack.c.b16 %v1519, %v1518
    %v1547 = vpack.c.b16 %v1521, %v1520
    %v1548 = vpack.c.b16 %v1523, %v1522
    %v1549 = vpack.c.b16 %v1525, %v1524
    %v1550 = vpack.c.b16 %v1527, %v1526
    %v1551 = vpack.c.b16 %v1529, %v1528
    %v1552 = vpack.c.b16 %v1531, %v1530
    %v1553 = vpack.c.b16 %v1533, %v1532
    %v1554 = vpack.c.b16 %v1535, %v1534
    %v1555 = vpack.c.b16 %v1537, %v1536
    %v1556 = vpack.c.b16 %v1539, %v1538
    %v1557 = vpack.c.b16 %v1541, %v1540
    %1574 = vmatprep.subr.bf16.mxu0 0
    %1575 = vmatpush1.bf16.msra.mxu0 %v1549
    %1576 = vmatprep.subr.bf16.mxu0 0
    %1577 = vmatpush1.bf16.msra.mxu0 %v1548
    %1578 = vmatprep.subr.bf16.mxu0 0
    %1579 = vmatpush1.bf16.msra.mxu0 %v1547
    %1580 = vmatprep.subr.bf16.mxu0 0
    %1581 = vmatpush1.bf16.msra.mxu0 %v1546
    %1582 = vmatprep.subr.bf16.mxu0 0
    %1583 = vmatpush1.bf16.msra.mxu0 %v1545
    %1584 = vmatprep.subr.bf16.mxu0 0
    %1585 = vmatpush1.bf16.msra.mxu0 %v1544
    %1586 = vmatprep.subr.bf16.mxu0 0
    %1587 = vmatpush1.bf16.msra.mxu0 %v1543
    %1588 = vmatprep.subr.bf16.mxu0 0
    %1589 = vmatpush1.bf16.msra.mxu0 %v1542
    %1590 = vmatprep.subr.bf16.mxu0 0
    %1591 = vmatpush2.bf16.msra.mxu0 %v1557
    %1592 = vmatprep.subr.bf16.mxu0 0
    %1593 = vmatpush2.bf16.msra.mxu0 %v1556
    %1594 = vmatprep.subr.bf16.mxu0 0
    %1595 = vmatpush2.bf16.msra.mxu0 %v1555
    %1596 = vmatprep.subr.bf16.mxu0 0
    %1597 = vmatpush2.bf16.msra.mxu0 %v1554
    %1598 = vmatprep.subr.bf16.mxu0 0
    %1599 = vmatpush2.bf16.msra.mxu0 %v1553
    %1600 = vmatprep.subr.bf16.mxu0 0
    %1601 = vmatpush2.bf16.msra.mxu0 %v1552
    %1602 = vmatprep.subr.bf16.mxu0 0
    %1603 = vmatpush2.bf16.msra.mxu0 %v1551
    %1604 = vmatprep.subr.bf16.mxu0 0
    %1605 = vmatpush2.bf16.msra.mxu0 %v1550
    %1606 = vmatprep.mubr.bf16.mxu0 %v1438
    %1607 = vmatmul.mubr.bf16.gmra.mxu0 %v1437
    %v1608 = vpop.f32.mrf.mxu0
    %v1609 = vadd.f32 %v1476, %v1608
    %v1610 = vpop.f32.mrf.mxu0
    %v1611 = vpop.f32.mrf.mxu0
    %v1612 = vpop.f32.mrf.mxu0
    %1613 = vdwg.mxu0
    %v1614 = vmul.f32 %v1609, 0.5
    %v1615 = vmul.f32 %v1614, 1.442695
    %v1616 = vpow.pop %v1615
    %1618 = vrot.lane.b32.xlu0 %v1616, 96
    %v1619 = vpop.permute.xlu0 %1618
    %v1621 = vmul.f32 %v126, %v1619
    %v1622 = vadd.f32 %v1609, %v1621
    %v1623 = vpack.c.bf16 %v1622, %v1622
    %v1624 = vmul.f32 %v126, %v1616
    %1626 = vrot.lane.b32.xlu0 %v1624, 96
    %v1627 = vpop.permute.xlu0 %1626
    %v1629 = vadd.f32 %v1609, %v1627
    %v1630 = vpack.c.bf16 %v1629, %v1629
    %v1631 = vld [vmem:[%s9] sm:$0xff]
    %v1632 = vld [vmem:[%s9 + $0x8] sm:$0xff]
    %v1633 = vld [vmem:[%s9 + $0x10] sm:$0xff]
    %v1634 = vld [vmem:[%s9 + $0x18] sm:$0xff]
    %v1635 = vld [vmem:[%s10] sm:$0x3]
    %v1637 = vlaneseq
    %v1638 = vshrl.u32 %v1637, 7
    %v1639 = vsub.s32 0, %v1638
    %v1640 = vrot.slane %v1635, %v1639
    %v1641 = vlaneseq
    %v1642 = vshrl.u32 %v1641, 7
    %v1643 = vsub.s32 1, %v1642
    %v1644 = vrot.slane %v1635, %v1643
    %v1651 = vunpack.c.l.b16 %v1631
    %v1652 = vunpack.c.h.b16 %v1631
    %v1653 = vunpack.c.l.b16 %v1632
    %v1654 = vunpack.c.h.b16 %v1632
    %v1655 = vunpack.c.l.b16 %v1633
    %v1656 = vunpack.c.h.b16 %v1633
    %v1657 = vunpack.c.l.b16 %v1634
    %v1658 = vunpack.c.h.b16 %v1634
    %v1659 = vpack.c.b16 %v1653, %v1651
    %v1660 = vpack.c.b16 %v1654, %v1652
    %v1661 = vpack.c.b16 %v1657, %v1655
    %v1662 = vpack.c.b16 %v1658, %v1656
    %vm1667 = vcmask 261120
    %v1669 = vsel %vm1667, %v1623, 0
    %1671 = vmatprep.subr.bf16.mxu0 0
    %1672 = vmatpush1.bf16.msra.mxu0 0
    %1673 = vmatprep.subr.bf16.mxu0 0
    %1674 = vmatpush1.bf16.msra.mxu0 0
    %1675 = vmatprep.subr.bf16.mxu0 0
    %1676 = vmatpush1.bf16.msra.mxu0 0
    %1677 = vmatprep.subr.bf16.mxu0 0
    %1678 = vmatpush1.bf16.msra.mxu0 0
    %1679 = vmatprep.subr.bf16.mxu0 0
    %1680 = vmatpush1.bf16.msra.mxu0 0
    %1681 = vmatprep.subr.bf16.mxu0 0
    %1682 = vmatpush1.bf16.msra.mxu0 0
    %1683 = vmatprep.subr.bf16.mxu0 %v1662
    %1684 = vmatpush1.bf16.msra.mxu0 %v1661
    %1685 = vmatprep.subr.bf16.mxu0 %v1660
    %1686 = vmatpush1.bf16.msra.mxu0 %v1659
    %1687 = vmatprep.subr.bf16.mxu0 0
    %1688 = vmatpush2.bf16.msra.mxu0 0
    %1689 = vmatprep.subr.bf16.mxu0 0
    %1690 = vmatpush2.bf16.msra.mxu0 0
    %1691 = vmatprep.subr.bf16.mxu0 0
    %1692 = vmatpush2.bf16.msra.mxu0 0
    %1693 = vmatprep.subr.bf16.mxu0 0
    %1694 = vmatpush2.bf16.msra.mxu0 0
    %1695 = vmatprep.subr.bf16.mxu0 0
    %1696 = vmatpush2.bf16.msra.mxu0 0
    %1697 = vmatprep.subr.bf16.mxu0 0
    %1698 = vmatpush2.bf16.msra.mxu0 0
    %1699 = vmatprep.subr.bf16.mxu0 0
    %1700 = vmatpush2.bf16.msra.mxu0 0
    %1701 = vmatprep.subr.bf16.mxu0 0
    %1702 = vmatpush2.bf16.msra.mxu0 0
    %1703 = vmatprep.mubr.bf16.mxu0 0
    %1704 = vmatmul.mubr.bf16.gmra.mxu0 %v1669
    %v1705 = vpop.f32.mrf.mxu0
    %v1706 = vadd.f32 %v1640, %v1705
    %v1707 = vpop.f32.mrf.mxu0
    %v1708 = vadd.f32 %v1644, %v1707
    %v1709 = vpop.f32.mrf.mxu0
    %v1710 = vpop.f32.mrf.mxu0
    %1711 = vdwg.mxu0
    %v1712 = vmax.f32 %v1706, 0.0
    %v1713 = vmax.f32 %v1708, 0.0
    %v1714 = vpack.c.bf16 %v1712, %v1712
    %v1715 = vpack.c.bf16 %v1713, %v1713
    %v1716 = vld [vmem:[#allocation7] sm:$0xff]
    %v1717 = vld [vmem:[#allocation7 + $0x8] sm:$0xff]
    %v1718 = vld [vmem:[#allocation7 + $0x10] sm:$0xff]
    %v1719 = vld [vmem:[#allocation7 + $0x18] sm:$0xff]
    %v1720 = vld [vmem:[#allocation7 + $0x20] sm:$0xff]
    %v1721 = vld [vmem:[#allocation7 + $0x28] sm:$0xff]
    %v1722 = vld [vmem:[#allocation7 + $0x30] sm:$0xff]
    %v1723 = vld [vmem:[#allocation7 + $0x38] sm:$0xff]
    %v1724 = vld [vmem:[#allocation7 + $0x40] sm:$0xff]
    %v1725 = vld [vmem:[#allocation7 + $0x48] sm:$0xff]
    %v1726 = vld [vmem:[#allocation7 + $0x50] sm:$0xff]
    %v1727 = vld [vmem:[#allocation7 + $0x58] sm:$0xff]
    %v1728 = vld [vmem:[#allocation7 + $0x60] sm:$0xff]
    %v1729 = vld [vmem:[#allocation7 + $0x68] sm:$0xff]
    %v1730 = vld [vmem:[#allocation7 + $0x70] sm:$0xff]
    %v1731 = vld [vmem:[#allocation7 + $0x78] sm:$0xff]
    %v1732 = vld [vmem:[#allocation7 + $0x80] sm:$0xff]
    %v1733 = vld [vmem:[#allocation7 + $0x88] sm:$0xff]
    %v1734 = vld [vmem:[#allocation7 + $0x90] sm:$0xff]
    %v1735 = vld [vmem:[#allocation7 + $0x98] sm:$0xff]
    %v1736 = vld [vmem:[#allocation7 + $0xa0] sm:$0xff]
    %v1737 = vld [vmem:[#allocation7 + $0xa8] sm:$0xff]
    %v1738 = vld [vmem:[#allocation7 + $0xb0] sm:$0xff]
    %v1739 = vld [vmem:[#allocation7 + $0xb8] sm:$0xff]
    %v1740 = vld [vmem:[#allocation7 + $0xc0] sm:$0xff]
    %v1741 = vld [vmem:[#allocation7 + $0xc8] sm:$0xff]
    %v1742 = vld [vmem:[#allocation7 + $0xd0] sm:$0xff]
    %v1743 = vld [vmem:[#allocation7 + $0xd8] sm:$0xff]
    %v1744 = vld [vmem:[#allocation7 + $0xe0] sm:$0xff]
    %v1745 = vld [vmem:[#allocation7 + $0xe8] sm:$0xff]
    %v1746 = vld [vmem:[#allocation7 + $0xf0] sm:$0xff]
    %v1747 = vld [vmem:[#allocation7 + $0xf8] sm:$0xff]
    %v1748 = vld [vmem:[#allocation7 + $0x100] sm:$0xff]
    %v1749 = vld [vmem:[#allocation7 + $0x108] sm:$0xff]
    %v1750 = vld [vmem:[#allocation7 + $0x110] sm:$0xff]
    %v1751 = vld [vmem:[#allocation7 + $0x118] sm:$0xff]
    %v1752 = vld [vmem:[#allocation7 + $0x120] sm:$0xff]
    %v1753 = vld [vmem:[#allocation7 + $0x128] sm:$0xff]
    %v1754 = vld [vmem:[#allocation7 + $0x130] sm:$0xff]
    %v1755 = vld [vmem:[#allocation7 + $0x138] sm:$0xff]
    %v1756 = vld [vmem:[#allocation7 + $0x140] sm:$0xff]
    %v1757 = vld [vmem:[#allocation7 + $0x148] sm:$0xff]
    %v1758 = vld [vmem:[#allocation7 + $0x150] sm:$0xff]
    %v1759 = vld [vmem:[#allocation7 + $0x158] sm:$0xff]
    %v1760 = vld [vmem:[#allocation7 + $0x160] sm:$0xff]
    %v1761 = vld [vmem:[#allocation7 + $0x168] sm:$0xff]
    %v1762 = vld [vmem:[#allocation7 + $0x170] sm:$0xff]
    %v1763 = vld [vmem:[#allocation7 + $0x178] sm:$0xff]
    %v1764 = vld [vmem:[#allocation7 + $0x180] sm:$0xff]
    %v1765 = vld [vmem:[#allocation7 + $0x188] sm:$0xff]
    %v1766 = vld [vmem:[#allocation7 + $0x190] sm:$0xff]
    %v1767 = vld [vmem:[#allocation7 + $0x198] sm:$0xff]
    %v1768 = vld [vmem:[#allocation7 + $0x1a0] sm:$0xff]
    %v1769 = vld [vmem:[#allocation7 + $0x1a8] sm:$0xff]
    %v1770 = vld [vmem:[#allocation7 + $0x1b0] sm:$0xff]
    %v1771 = vld [vmem:[#allocation7 + $0x1b8] sm:$0xff]
    %v1772 = vld [vmem:[#allocation7 + $0x1c0] sm:$0xff]
    %v1773 = vld [vmem:[#allocation7 + $0x1c8] sm:$0xff]
    %v1774 = vld [vmem:[#allocation7 + $0x1d0] sm:$0xff]
    %v1775 = vld [vmem:[#allocation7 + $0x1d8] sm:$0xff]
    %v1776 = vld [vmem:[#allocation7 + $0x1e0] sm:$0xff]
    %v1777 = vld [vmem:[#allocation7 + $0x1e8] sm:$0xff]
    %v1778 = vld [vmem:[#allocation7 + $0x1f0] sm:$0xff]
    %v1779 = vld [vmem:[#allocation7 + $0x1f8] sm:$0xff]
    %v1780 = vld [vmem:[%s12] sm:$0xf]
    %v1782 = vlaneseq
    %v1783 = vshrl.u32 %v1782, 7
    %v1784 = vsub.s32 0, %v1783
    %v1785 = vrot.slane %v1780, %v1784
    %v1786 = vlaneseq
    %v1787 = vshrl.u32 %v1786, 7
    %v1788 = vsub.s32 1, %v1787
    %v1789 = vrot.slane %v1780, %v1788
    %v1790 = vlaneseq
    %v1791 = vshrl.u32 %v1790, 7
    %v1792 = vsub.s32 2, %v1791
    %v1793 = vrot.slane %v1780, %v1792
    %v1794 = vlaneseq
    %v1795 = vshrl.u32 %v1794, 7
    %v1796 = vsub.s32 3, %v1795
    %v1797 = vrot.slane %v1780, %v1796
    %v1866 = vunpack.c.l.b16 %v1716
    %v1867 = vunpack.c.h.b16 %v1716
    %v1868 = vunpack.c.l.b16 %v1717
    %v1869 = vunpack.c.h.b16 %v1717
    %v1870 = vunpack.c.l.b16 %v1718
    %v1871 = vunpack.c.h.b16 %v1718
    %v1872 = vunpack.c.l.b16 %v1719
    %v1873 = vunpack.c.h.b16 %v1719
    %v1874 = vunpack.c.l.b16 %v1720
    %v1875 = vunpack.c.h.b16 %v1720
    %v1876 = vunpack.c.l.b16 %v1721
    %v1877 = vunpack.c.h.b16 %v1721
    %v1878 = vunpack.c.l.b16 %v1722
    %v1879 = vunpack.c.h.b16 %v1722
    %v1880 = vunpack.c.l.b16 %v1723
    %v1881 = vunpack.c.h.b16 %v1723
    %v1882 = vunpack.c.l.b16 %v1724
    %v1883 = vunpack.c.h.b16 %v1724
    %v1884 = vunpack.c.l.b16 %v1725
    %v1885 = vunpack.c.h.b16 %v1725
    %v1886 = vunpack.c.l.b16 %v1726
    %v1887 = vunpack.c.h.b16 %v1726
    %v1888 = vunpack.c.l.b16 %v1727
    %v1889 = vunpack.c.h.b16 %v1727
    %v1890 = vunpack.c.l.b16 %v1728
    %v1891 = vunpack.c.h.b16 %v1728
    %v1892 = vunpack.c.l.b16 %v1729
    %v1893 = vunpack.c.h.b16 %v1729
    %v1894 = vunpack.c.l.b16 %v1730
    %v1895 = vunpack.c.h.b16 %v1730
    %v1896 = vunpack.c.l.b16 %v1731
    %v1897 = vunpack.c.h.b16 %v1731
    %v1898 = vunpack.c.l.b16 %v1732
    %v1899 = vunpack.c.h.b16 %v1732
    %v1900 = vunpack.c.l.b16 %v1733
    %v1901 = vunpack.c.h.b16 %v1733
    %v1902 = vunpack.c.l.b16 %v1734
    %v1903 = vunpack.c.h.b16 %v1734
    %v1904 = vunpack.c.l.b16 %v1735
    %v1905 = vunpack.c.h.b16 %v1735
    %v1906 = vunpack.c.l.b16 %v1736
    %v1907 = vunpack.c.h.b16 %v1736
    %v1908 = vunpack.c.l.b16 %v1737
    %v1909 = vunpack.c.h.b16 %v1737
    %v1910 = vunpack.c.l.b16 %v1738
    %v1911 = vunpack.c.h.b16 %v1738
    %v1912 = vunpack.c.l.b16 %v1739
    %v1913 = vunpack.c.h.b16 %v1739
    %v1914 = vunpack.c.l.b16 %v1740
    %v1915 = vunpack.c.h.b16 %v1740
    %v1916 = vunpack.c.l.b16 %v1741
    %v1917 = vunpack.c.h.b16 %v1741
    %v1918 = vunpack.c.l.b16 %v1742
    %v1919 = vunpack.c.h.b16 %v1742
    %v1920 = vunpack.c.l.b16 %v1743
    %v1921 = vunpack.c.h.b16 %v1743
    %v1922 = vunpack.c.l.b16 %v1744
    %v1923 = vunpack.c.h.b16 %v1744
    %v1924 = vunpack.c.l.b16 %v1745
    %v1925 = vunpack.c.h.b16 %v1745
    %v1926 = vunpack.c.l.b16 %v1746
    %v1927 = vunpack.c.h.b16 %v1746
    %v1928 = vunpack.c.l.b16 %v1747
    %v1929 = vunpack.c.h.b16 %v1747
    %v1930 = vunpack.c.l.b16 %v1748
    %v1931 = vunpack.c.h.b16 %v1748
    %v1932 = vunpack.c.l.b16 %v1749
    %v1933 = vunpack.c.h.b16 %v1749
    %v1934 = vunpack.c.l.b16 %v1750
    %v1935 = vunpack.c.h.b16 %v1750
    %v1936 = vunpack.c.l.b16 %v1751
    %v1937 = vunpack.c.h.b16 %v1751
    %v1938 = vunpack.c.l.b16 %v1752
    %v1939 = vunpack.c.h.b16 %v1752
    %v1940 = vunpack.c.l.b16 %v1753
    %v1941 = vunpack.c.h.b16 %v1753
    %v1942 = vunpack.c.l.b16 %v1754
    %v1943 = vunpack.c.h.b16 %v1754
    %v1944 = vunpack.c.l.b16 %v1755
    %v1945 = vunpack.c.h.b16 %v1755
    %v1946 = vunpack.c.l.b16 %v1756
    %v1947 = vunpack.c.h.b16 %v1756
    %v1948 = vunpack.c.l.b16 %v1757
    %v1949 = vunpack.c.h.b16 %v1757
    %v1950 = vunpack.c.l.b16 %v1758
    %v1951 = vunpack.c.h.b16 %v1758
    %v1952 = vunpack.c.l.b16 %v1759
    %v1953 = vunpack.c.h.b16 %v1759
    %v1954 = vunpack.c.l.b16 %v1760
    %v1955 = vunpack.c.h.b16 %v1760
    %v1956 = vunpack.c.l.b16 %v1761
    %v1957 = vunpack.c.h.b16 %v1761
    %v1958 = vunpack.c.l.b16 %v1762
    %v1959 = vunpack.c.h.b16 %v1762
    %v1960 = vunpack.c.l.b16 %v1763
    %v1961 = vunpack.c.h.b16 %v1763
    %v1962 = vunpack.c.l.b16 %v1764
    %v1963 = vunpack.c.h.b16 %v1764
    %v1964 = vunpack.c.l.b16 %v1765
    %v1965 = vunpack.c.h.b16 %v1765
    %v1966 = vunpack.c.l.b16 %v1766
    %v1967 = vunpack.c.h.b16 %v1766
    %v1968 = vunpack.c.l.b16 %v1767
    %v1969 = vunpack.c.h.b16 %v1767
    %v1970 = vunpack.c.l.b16 %v1768
    %v1971 = vunpack.c.h.b16 %v1768
    %v1972 = vunpack.c.l.b16 %v1769
    %v1973 = vunpack.c.h.b16 %v1769
    %v1974 = vunpack.c.l.b16 %v1770
    %v1975 = vunpack.c.h.b16 %v1770
    %v1976 = vunpack.c.l.b16 %v1771
    %v1977 = vunpack.c.h.b16 %v1771
    %v1978 = vunpack.c.l.b16 %v1772
    %v1979 = vunpack.c.h.b16 %v1772
    %v1980 = vunpack.c.l.b16 %v1773
    %v1981 = vunpack.c.h.b16 %v1773
    %v1982 = vunpack.c.l.b16 %v1774
    %v1983 = vunpack.c.h.b16 %v1774
    %v1984 = vunpack.c.l.b16 %v1775
    %v1985 = vunpack.c.h.b16 %v1775
    %v1986 = vunpack.c.l.b16 %v1776
    %v1987 = vunpack.c.h.b16 %v1776
    %v1988 = vunpack.c.l.b16 %v1777
    %v1989 = vunpack.c.h.b16 %v1777
    %v1990 = vunpack.c.l.b16 %v1778
    %v1991 = vunpack.c.h.b16 %v1778
    %v1992 = vunpack.c.l.b16 %v1779
    %v1993 = vunpack.c.h.b16 %v1779
    %v1994 = vpack.c.b16 %v1870, %v1866
    %v1995 = vpack.c.b16 %v1871, %v1867
    %v1996 = vpack.c.b16 %v1872, %v1868
    %v1997 = vpack.c.b16 %v1873, %v1869
    %v1998 = vpack.c.b16 %v1878, %v1874
    %v1999 = vpack.c.b16 %v1879, %v1875
    %v2000 = vpack.c.b16 %v1880, %v1876
    %v2001 = vpack.c.b16 %v1881, %v1877
    %v2002 = vpack.c.b16 %v1886, %v1882
    %v2003 = vpack.c.b16 %v1887, %v1883
    %v2004 = vpack.c.b16 %v1888, %v1884
    %v2005 = vpack.c.b16 %v1889, %v1885
    %v2006 = vpack.c.b16 %v1894, %v1890
    %v2007 = vpack.c.b16 %v1895, %v1891
    %v2008 = vpack.c.b16 %v1896, %v1892
    %v2009 = vpack.c.b16 %v1897, %v1893
    %v2010 = vpack.c.b16 %v1902, %v1898
    %v2011 = vpack.c.b16 %v1903, %v1899
    %v2012 = vpack.c.b16 %v1904, %v1900
    %v2013 = vpack.c.b16 %v1905, %v1901
    %v2014 = vpack.c.b16 %v1910, %v1906
    %v2015 = vpack.c.b16 %v1911, %v1907
    %v2016 = vpack.c.b16 %v1912, %v1908
    %v2017 = vpack.c.b16 %v1913, %v1909
    %v2018 = vpack.c.b16 %v1918, %v1914
    %v2019 = vpack.c.b16 %v1919, %v1915
    %v2020 = vpack.c.b16 %v1920, %v1916
    %v2021 = vpack.c.b16 %v1921, %v1917
    %v2022 = vpack.c.b16 %v1926, %v1922
    %v2023 = vpack.c.b16 %v1927, %v1923
    %v2024 = vpack.c.b16 %v1928, %v1924
    %v2025 = vpack.c.b16 %v1929, %v1925
    %v2026 = vpack.c.b16 %v1934, %v1930
    %v2027 = vpack.c.b16 %v1935, %v1931
    %v2028 = vpack.c.b16 %v1936, %v1932
    %v2029 = vpack.c.b16 %v1937, %v1933
    %v2030 = vpack.c.b16 %v1942, %v1938
    %v2031 = vpack.c.b16 %v1943, %v1939
    %v2032 = vpack.c.b16 %v1944, %v1940
    %v2033 = vpack.c.b16 %v1945, %v1941
    %v2034 = vpack.c.b16 %v1950, %v1946
    %v2035 = vpack.c.b16 %v1951, %v1947
    %v2036 = vpack.c.b16 %v1952, %v1948
    %v2037 = vpack.c.b16 %v1953, %v1949
    %v2038 = vpack.c.b16 %v1958, %v1954
    %v2039 = vpack.c.b16 %v1959, %v1955
    %v2040 = vpack.c.b16 %v1960, %v1956
    %v2041 = vpack.c.b16 %v1961, %v1957
    %v2042 = vpack.c.b16 %v1966, %v1962
    %v2043 = vpack.c.b16 %v1967, %v1963
    %v2044 = vpack.c.b16 %v1968, %v1964
    %v2045 = vpack.c.b16 %v1969, %v1965
    %v2046 = vpack.c.b16 %v1974, %v1970
    %v2047 = vpack.c.b16 %v1975, %v1971
    %v2048 = vpack.c.b16 %v1976, %v1972
    %v2049 = vpack.c.b16 %v1977, %v1973
    %v2050 = vpack.c.b16 %v1982, %v1978
    %v2051 = vpack.c.b16 %v1983, %v1979
    %v2052 = vpack.c.b16 %v1984, %v1980
    %v2053 = vpack.c.b16 %v1985, %v1981
    %v2054 = vpack.c.b16 %v1990, %v1986
    %v2055 = vpack.c.b16 %v1991, %v1987
    %v2056 = vpack.c.b16 %v1992, %v1988
    %v2057 = vpack.c.b16 %v1993, %v1989
    %2122 = vmatprep.subr.bf16.mxu0 %v2023
    %2123 = vmatpush1.bf16.msra.mxu0 %v2022
    %2124 = vmatprep.subr.bf16.mxu0 %v2019
    %2125 = vmatpush1.bf16.msra.mxu0 %v2018
    %2126 = vmatprep.subr.bf16.mxu0 %v2015
    %2127 = vmatpush1.bf16.msra.mxu0 %v2014
    %2128 = vmatprep.subr.bf16.mxu0 %v2011
    %2129 = vmatpush1.bf16.msra.mxu0 %v2010
    %2130 = vmatprep.subr.bf16.mxu0 %v2007
    %2131 = vmatpush1.bf16.msra.mxu0 %v2006
    %2132 = vmatprep.subr.bf16.mxu0 %v2003
    %2133 = vmatpush1.bf16.msra.mxu0 %v2002
    %2134 = vmatprep.subr.bf16.mxu0 %v1999
    %2135 = vmatpush1.bf16.msra.mxu0 %v1998
    %2136 = vmatprep.subr.bf16.mxu0 %v1995
    %2137 = vmatpush1.bf16.msra.mxu0 %v1994
    %2138 = vmatprep.subr.bf16.mxu0 %v2055
    %2139 = vmatpush2.bf16.msra.mxu0 %v2054
    %2140 = vmatprep.subr.bf16.mxu0 %v2051
    %2141 = vmatpush2.bf16.msra.mxu0 %v2050
    %2142 = vmatprep.subr.bf16.mxu0 %v2047
    %2143 = vmatpush2.bf16.msra.mxu0 %v2046
    %2144 = vmatprep.subr.bf16.mxu0 %v2043
    %2145 = vmatpush2.bf16.msra.mxu0 %v2042
    %2146 = vmatprep.subr.bf16.mxu0 %v2039
    %2147 = vmatpush2.bf16.msra.mxu0 %v2038
    %2148 = vmatprep.subr.bf16.mxu0 %v2035
    %2149 = vmatpush2.bf16.msra.mxu0 %v2034
    %2150 = vmatprep.subr.bf16.mxu0 %v2031
    %2151 = vmatpush2.bf16.msra.mxu0 %v2030
    %2152 = vmatprep.subr.bf16.mxu0 %v2027
    %2153 = vmatpush2.bf16.msra.mxu0 %v2026
    %2154 = vmatprep.mubr.bf16.mxu0 %v1715
    %2155 = vmatmul.mubr.bf16.gmra.mxu0 %v1714
    %v2156 = vpop.f32.mrf.mxu0
    %v2157 = vadd.f32 %v1785, %v2156
    %v2158 = vpop.f32.mrf.mxu0
    %v2159 = vadd.f32 %v1789, %v2158
    %v2160 = vpop.f32.mrf.mxu0
    %v2161 = vpop.f32.mrf.mxu0
    %2162 = vdwg.mxu0
    %2163 = vmatprep.subr.bf16.mxu0 %v2025
    %2164 = vmatpush1.bf16.msra.mxu0 %v2024
    %2165 = vmatprep.subr.bf16.mxu0 %v2021
    %2166 = vmatpush1.bf16.msra.mxu0 %v2020
    %2167 = vmatprep.subr.bf16.mxu0 %v2017
    %2168 = vmatpush1.bf16.msra.mxu0 %v2016
    %2169 = vmatprep.subr.bf16.mxu0 %v2013
    %2170 = vmatpush1.bf16.msra.mxu0 %v2012
    %2171 = vmatprep.subr.bf16.mxu0 %v2009
    %2172 = vmatpush1.bf16.msra.mxu0 %v2008
    %2173 = vmatprep.subr.bf16.mxu0 %v2005
    %2174 = vmatpush1.bf16.msra.mxu0 %v2004
    %2175 = vmatprep.subr.bf16.mxu0 %v2001
    %2176 = vmatpush1.bf16.msra.mxu0 %v2000
    %2177 = vmatprep.subr.bf16.mxu0 %v1997
    %2178 = vmatpush1.bf16.msra.mxu0 %v1996
    %2179 = vmatprep.subr.bf16.mxu0 %v2057
    %2180 = vmatpush2.bf16.msra.mxu0 %v2056
    %2181 = vmatprep.subr.bf16.mxu0 %v2053
    %2182 = vmatpush2.bf16.msra.mxu0 %v2052
    %2183 = vmatprep.subr.bf16.mxu0 %v2049
    %2184 = vmatpush2.bf16.msra.mxu0 %v2048
    %2185 = vmatprep.subr.bf16.mxu0 %v2045
    %2186 = vmatpush2.bf16.msra.mxu0 %v2044
    %2187 = vmatprep.subr.bf16.mxu0 %v2041
    %2188 = vmatpush2.bf16.msra.mxu0 %v2040
    %2189 = vmatprep.subr.bf16.mxu0 %v2037
    %2190 = vmatpush2.bf16.msra.mxu0 %v2036
    %2191 = vmatprep.subr.bf16.mxu0 %v2033
    %2192 = vmatpush2.bf16.msra.mxu0 %v2032
    %2193 = vmatprep.subr.bf16.mxu0 %v2029
    %2194 = vmatpush2.bf16.msra.mxu0 %v2028
    %2195 = vmatprep.mubr.bf16.mxu0 %v1715
    %2196 = vmatmul.mubr.bf16.gmra.mxu0 %v1714
    %v2197 = vpop.f32.mrf.mxu0
    %v2198 = vadd.f32 %v1793, %v2197
    %v2199 = vpop.f32.mrf.mxu0
    %v2200 = vadd.f32 %v1797, %v2199
    %v2201 = vpop.f32.mrf.mxu0
    %v2202 = vpop.f32.mrf.mxu0
    %2203 = vdwg.mxu0
    %v2204 = vmax.f32 %v2157, 0.0
    %v2205 = vmax.f32 %v2159, 0.0
    %v2206 = vmax.f32 %v2198, 0.0
    %v2207 = vmax.f32 %v2200, 0.0
    %v2208 = vpack.c.bf16 %v2204, %v2204
    %v2209 = vpack.c.bf16 %v2205, %v2205
    %v2210 = vpack.c.bf16 %v2206, %v2206
    %v2211 = vpack.c.bf16 %v2207, %v2207
    %v2212 = vld [vmem:[#allocation8] sm:$0xff]
    %v2213 = vld [vmem:[#allocation8 + $0x8] sm:$0xff]
    %v2214 = vld [vmem:[#allocation8 + $0x10] sm:$0xff]
    %v2215 = vld [vmem:[#allocation8 + $0x18] sm:$0xff]
    %v2216 = vld [vmem:[#allocation8 + $0x20] sm:$0xff]
    %v2217 = vld [vmem:[#allocation8 + $0x28] sm:$0xff]
    %v2218 = vld [vmem:[#allocation8 + $0x30] sm:$0xff]
    %v2219 = vld [vmem:[#allocation8 + $0x38] sm:$0xff]
    %v2220 = vld [vmem:[#allocation8 + $0x40] sm:$0xff]
    %v2221 = vld [vmem:[#allocation8 + $0x48] sm:$0xff]
    %v2222 = vld [vmem:[#allocation8 + $0x50] sm:$0xff]
    %v2223 = vld [vmem:[#allocation8 + $0x58] sm:$0xff]
    %v2224 = vld [vmem:[#allocation8 + $0x60] sm:$0xff]
    %v2225 = vld [vmem:[#allocation8 + $0x68] sm:$0xff]
    %v2226 = vld [vmem:[#allocation8 + $0x70] sm:$0xff]
    %v2227 = vld [vmem:[#allocation8 + $0x78] sm:$0xff]
    %v2228 = vld [vmem:[#allocation8 + $0x80] sm:$0xff]
    %v2229 = vld [vmem:[#allocation8 + $0x88] sm:$0xff]
    %v2230 = vld [vmem:[#allocation8 + $0x90] sm:$0xff]
    %v2231 = vld [vmem:[#allocation8 + $0x98] sm:$0xff]
    %v2232 = vld [vmem:[#allocation8 + $0xa0] sm:$0xff]
    %v2233 = vld [vmem:[#allocation8 + $0xa8] sm:$0xff]
    %v2234 = vld [vmem:[#allocation8 + $0xb0] sm:$0xff]
    %v2235 = vld [vmem:[#allocation8 + $0xb8] sm:$0xff]
    %v2236 = vld [vmem:[#allocation8 + $0xc0] sm:$0xff]
    %v2237 = vld [vmem:[#allocation8 + $0xc8] sm:$0xff]
    %v2238 = vld [vmem:[#allocation8 + $0xd0] sm:$0xff]
    %v2239 = vld [vmem:[#allocation8 + $0xd8] sm:$0xff]
    %v2240 = vld [vmem:[#allocation8 + $0xe0] sm:$0xff]
    %v2241 = vld [vmem:[#allocation8 + $0xe8] sm:$0xff]
    %v2242 = vld [vmem:[#allocation8 + $0xf0] sm:$0xff]
    %v2243 = vld [vmem:[#allocation8 + $0xf8] sm:$0xff]
    %v2244 = vld [vmem:[#allocation8 + $0x100] sm:$0xff]
    %v2245 = vld [vmem:[#allocation8 + $0x108] sm:$0xff]
    %v2246 = vld [vmem:[#allocation8 + $0x110] sm:$0xff]
    %v2247 = vld [vmem:[#allocation8 + $0x118] sm:$0xff]
    %v2248 = vld [vmem:[#allocation8 + $0x120] sm:$0xff]
    %v2249 = vld [vmem:[#allocation8 + $0x128] sm:$0xff]
    %v2250 = vld [vmem:[#allocation8 + $0x130] sm:$0xff]
    %v2251 = vld [vmem:[#allocation8 + $0x138] sm:$0xff]
    %v2252 = vld [vmem:[#allocation8 + $0x140] sm:$0xff]
    %v2253 = vld [vmem:[#allocation8 + $0x148] sm:$0xff]
    %v2254 = vld [vmem:[#allocation8 + $0x150] sm:$0xff]
    %v2255 = vld [vmem:[#allocation8 + $0x158] sm:$0xff]
    %v2256 = vld [vmem:[#allocation8 + $0x160] sm:$0xff]
    %v2257 = vld [vmem:[#allocation8 + $0x168] sm:$0xff]
    %v2258 = vld [vmem:[#allocation8 + $0x170] sm:$0xff]
    %v2259 = vld [vmem:[#allocation8 + $0x178] sm:$0xff]
    %v2260 = vld [vmem:[#allocation8 + $0x180] sm:$0xff]
    %v2261 = vld [vmem:[#allocation8 + $0x188] sm:$0xff]
    %v2262 = vld [vmem:[#allocation8 + $0x190] sm:$0xff]
    %v2263 = vld [vmem:[#allocation8 + $0x198] sm:$0xff]
    %v2264 = vld [vmem:[#allocation8 + $0x1a0] sm:$0xff]
    %v2265 = vld [vmem:[#allocation8 + $0x1a8] sm:$0xff]
    %v2266 = vld [vmem:[#allocation8 + $0x1b0] sm:$0xff]
    %v2267 = vld [vmem:[#allocation8 + $0x1b8] sm:$0xff]
    %v2268 = vld [vmem:[#allocation8 + $0x1c0] sm:$0xff]
    %v2269 = vld [vmem:[#allocation8 + $0x1c8] sm:$0xff]
    %v2270 = vld [vmem:[#allocation8 + $0x1d0] sm:$0xff]
    %v2271 = vld [vmem:[#allocation8 + $0x1d8] sm:$0xff]
    %v2272 = vld [vmem:[#allocation8 + $0x1e0] sm:$0xff]
    %v2273 = vld [vmem:[#allocation8 + $0x1e8] sm:$0xff]
    %v2274 = vld [vmem:[#allocation8 + $0x1f0] sm:$0xff]
    %v2275 = vld [vmem:[#allocation8 + $0x1f8] sm:$0xff]
    %v2276 = vld [vmem:[#allocation8 + $0x200] sm:$0xff]
    %v2277 = vld [vmem:[#allocation8 + $0x208] sm:$0xff]
    %v2278 = vld [vmem:[#allocation8 + $0x210] sm:$0xff]
    %v2279 = vld [vmem:[#allocation8 + $0x218] sm:$0xff]
    %v2280 = vld [vmem:[#allocation8 + $0x220] sm:$0xff]
    %v2281 = vld [vmem:[#allocation8 + $0x228] sm:$0xff]
    %v2282 = vld [vmem:[#allocation8 + $0x230] sm:$0xff]
    %v2283 = vld [vmem:[#allocation8 + $0x238] sm:$0xff]
    %v2284 = vld [vmem:[#allocation8 + $0x240] sm:$0xff]
    %v2285 = vld [vmem:[#allocation8 + $0x248] sm:$0xff]
    %v2286 = vld [vmem:[#allocation8 + $0x250] sm:$0xff]
    %v2287 = vld [vmem:[#allocation8 + $0x258] sm:$0xff]
    %v2288 = vld [vmem:[#allocation8 + $0x260] sm:$0xff]
    %v2289 = vld [vmem:[#allocation8 + $0x268] sm:$0xff]
    %v2290 = vld [vmem:[#allocation8 + $0x270] sm:$0xff]
    %v2291 = vld [vmem:[#allocation8 + $0x278] sm:$0xff]
    %v2292 = vld [vmem:[#allocation8 + $0x280] sm:$0xff]
    %v2293 = vld [vmem:[#allocation8 + $0x288] sm:$0xff]
    %v2294 = vld [vmem:[#allocation8 + $0x290] sm:$0xff]
    %v2295 = vld [vmem:[#allocation8 + $0x298] sm:$0xff]
    %v2296 = vld [vmem:[#allocation8 + $0x2a0] sm:$0xff]
    %v2297 = vld [vmem:[#allocation8 + $0x2a8] sm:$0xff]
    %v2298 = vld [vmem:[#allocation8 + $0x2b0] sm:$0xff]
    %v2299 = vld [vmem:[#allocation8 + $0x2b8] sm:$0xff]
    %v2300 = vld [vmem:[#allocation8 + $0x2c0] sm:$0xff]
    %v2301 = vld [vmem:[#allocation8 + $0x2c8] sm:$0xff]
    %v2302 = vld [vmem:[#allocation8 + $0x2d0] sm:$0xff]
    %v2303 = vld [vmem:[#allocation8 + $0x2d8] sm:$0xff]
    %v2304 = vld [vmem:[#allocation8 + $0x2e0] sm:$0xff]
    %v2305 = vld [vmem:[#allocation8 + $0x2e8] sm:$0xff]
    %v2306 = vld [vmem:[#allocation8 + $0x2f0] sm:$0xff]
    %v2307 = vld [vmem:[#allocation8 + $0x2f8] sm:$0xff]
    %v2308 = vld [vmem:[#allocation8 + $0x300] sm:$0xff]
    %v2309 = vld [vmem:[#allocation8 + $0x308] sm:$0xff]
    %v2310 = vld [vmem:[#allocation8 + $0x310] sm:$0xff]
    %v2311 = vld [vmem:[#allocation8 + $0x318] sm:$0xff]
    %v2312 = vld [vmem:[#allocation8 + $0x320] sm:$0xff]
    %v2313 = vld [vmem:[#allocation8 + $0x328] sm:$0xff]
    %v2314 = vld [vmem:[#allocation8 + $0x330] sm:$0xff]
    %v2315 = vld [vmem:[#allocation8 + $0x338] sm:$0xff]
    %v2316 = vld [vmem:[#allocation8 + $0x340] sm:$0xff]
    %v2317 = vld [vmem:[#allocation8 + $0x348] sm:$0xff]
    %v2318 = vld [vmem:[#allocation8 + $0x350] sm:$0xff]
    %v2319 = vld [vmem:[#allocation8 + $0x358] sm:$0xff]
    %v2320 = vld [vmem:[#allocation8 + $0x360] sm:$0xff]
    %v2321 = vld [vmem:[#allocation8 + $0x368] sm:$0xff]
    %v2322 = vld [vmem:[#allocation8 + $0x370] sm:$0xff]
    %v2323 = vld [vmem:[#allocation8 + $0x378] sm:$0xff]
    %v2324 = vld [vmem:[#allocation8 + $0x380] sm:$0xff]
    %v2325 = vld [vmem:[#allocation8 + $0x388] sm:$0xff]
    %v2326 = vld [vmem:[#allocation8 + $0x390] sm:$0xff]
    %v2327 = vld [vmem:[#allocation8 + $0x398] sm:$0xff]
    %v2328 = vld [vmem:[#allocation8 + $0x3a0] sm:$0xff]
    %v2329 = vld [vmem:[#allocation8 + $0x3a8] sm:$0xff]
    %v2330 = vld [vmem:[#allocation8 + $0x3b0] sm:$0xff]
    %v2331 = vld [vmem:[#allocation8 + $0x3b8] sm:$0xff]
    %v2332 = vld [vmem:[#allocation8 + $0x3c0] sm:$0xff]
    %v2333 = vld [vmem:[#allocation8 + $0x3c8] sm:$0xff]
    %v2334 = vld [vmem:[#allocation8 + $0x3d0] sm:$0xff]
    %v2335 = vld [vmem:[#allocation8 + $0x3d8] sm:$0xff]
    %v2336 = vld [vmem:[#allocation8 + $0x3e0] sm:$0xff]
    %v2337 = vld [vmem:[#allocation8 + $0x3e8] sm:$0xff]
    %v2338 = vld [vmem:[#allocation8 + $0x3f0] sm:$0xff]
    %v2339 = vld [vmem:[#allocation8 + $0x3f8] sm:$0xff]
    %v2340 = vunpack.c.l.s8.bf16 %v2212
    %v2341 = vunpack.c.l.s8.bf16 %v2213
    %v2342 = vunpack.c.l.s8.bf16 %v2214
    %v2343 = vunpack.c.l.s8.bf16 %v2215
    %v2344 = vunpack.c.l.s8.bf16 %v2216
    %v2345 = vunpack.c.l.s8.bf16 %v2217
    %v2346 = vunpack.c.l.s8.bf16 %v2218
    %v2347 = vunpack.c.l.s8.bf16 %v2219
    %v2348 = vunpack.c.h.s8.bf16 %v2212
    %v2349 = vunpack.c.h.s8.bf16 %v2213
    %v2350 = vunpack.c.h.s8.bf16 %v2214
    %v2351 = vunpack.c.h.s8.bf16 %v2215
    %v2352 = vunpack.c.h.s8.bf16 %v2216
    %v2353 = vunpack.c.h.s8.bf16 %v2217
    %v2354 = vunpack.c.h.s8.bf16 %v2218
    %v2355 = vunpack.c.h.s8.bf16 %v2219
    %v2356 = vunpack.c.l.s8.bf16 %v2220
    %v2357 = vunpack.c.l.s8.bf16 %v2221
    %v2358 = vunpack.c.l.s8.bf16 %v2222
    %v2359 = vunpack.c.l.s8.bf16 %v2223
    %v2360 = vunpack.c.l.s8.bf16 %v2224
    %v2361 = vunpack.c.l.s8.bf16 %v2225
    %v2362 = vunpack.c.l.s8.bf16 %v2226
    %v2363 = vunpack.c.l.s8.bf16 %v2227
    %v2364 = vunpack.c.h.s8.bf16 %v2220
    %v2365 = vunpack.c.h.s8.bf16 %v2221
    %v2366 = vunpack.c.h.s8.bf16 %v2222
    %v2367 = vunpack.c.h.s8.bf16 %v2223
    %v2368 = vunpack.c.h.s8.bf16 %v2224
    %v2369 = vunpack.c.h.s8.bf16 %v2225
    %v2370 = vunpack.c.h.s8.bf16 %v2226
    %v2371 = vunpack.c.h.s8.bf16 %v2227
    %v2372 = vunpack.c.l.s8.bf16 %v2228
    %v2373 = vunpack.c.l.s8.bf16 %v2229
    %v2374 = vunpack.c.l.s8.bf16 %v2230
    %v2375 = vunpack.c.l.s8.bf16 %v2231
    %v2376 = vunpack.c.l.s8.bf16 %v2232
    %v2377 = vunpack.c.l.s8.bf16 %v2233
    %v2378 = vunpack.c.l.s8.bf16 %v2234
    %v2379 = vunpack.c.l.s8.bf16 %v2235
    %v2380 = vunpack.c.h.s8.bf16 %v2228
    %v2381 = vunpack.c.h.s8.bf16 %v2229
    %v2382 = vunpack.c.h.s8.bf16 %v2230
    %v2383 = vunpack.c.h.s8.bf16 %v2231
    %v2384 = vunpack.c.h.s8.bf16 %v2232
    %v2385 = vunpack.c.h.s8.bf16 %v2233
    %v2386 = vunpack.c.h.s8.bf16 %v2234
    %v2387 = vunpack.c.h.s8.bf16 %v2235
    %v2388 = vunpack.c.l.s8.bf16 %v2236
    %v2389 = vunpack.c.l.s8.bf16 %v2237
    %v2390 = vunpack.c.l.s8.bf16 %v2238
    %v2391 = vunpack.c.l.s8.bf16 %v2239
    %v2392 = vunpack.c.l.s8.bf16 %v2240
    %v2393 = vunpack.c.l.s8.bf16 %v2241
    %v2394 = vunpack.c.l.s8.bf16 %v2242
    %v2395 = vunpack.c.l.s8.bf16 %v2243
    %v2396 = vunpack.c.h.s8.bf16 %v2236
    %v2397 = vunpack.c.h.s8.bf16 %v2237
    %v2398 = vunpack.c.h.s8.bf16 %v2238
    %v2399 = vunpack.c.h.s8.bf16 %v2239
    %v2400 = vunpack.c.h.s8.bf16 %v2240
    %v2401 = vunpack.c.h.s8.bf16 %v2241
    %v2402 = vunpack.c.h.s8.bf16 %v2242
    %v2403 = vunpack.c.h.s8.bf16 %v2243
    %v2404 = vunpack.c.l.s8.bf16 %v2244
    %v2405 = vunpack.c.l.s8.bf16 %v2245
    %v2406 = vunpack.c.l.s8.bf16 %v2246
    %v2407 = vunpack.c.l.s8.bf16 %v2247
    %v2408 = vunpack.c.l.s8.bf16 %v2248
    %v2409 = vunpack.c.l.s8.bf16 %v2249
    %v2410 = vunpack.c.l.s8.bf16 %v2250
    %v2411 = vunpack.c.l.s8.bf16 %v2251
    %v2412 = vunpack.c.h.s8.bf16 %v2244
    %v2413 = vunpack.c.h.s8.bf16 %v2245
    %v2414 = vunpack.c.h.s8.bf16 %v2246
    %v2415 = vunpack.c.h.s8.bf16 %v2247
    %v2416 = vunpack.c.h.s8.bf16 %v2248
    %v2417 = vunpack.c.h.s8.bf16 %v2249
    %v2418 = vunpack.c.h.s8.bf16 %v2250
    %v2419 = vunpack.c.h.s8.bf16 %v2251
    %v2420 = vunpack.c.l.s8.bf16 %v2252
    %v2421 = vunpack.c.l.s8.bf16 %v2253
    %v2422 = vunpack.c.l.s8.bf16 %v2254
    %v2423 = vunpack.c.l.s8.bf16 %v2255
    %v2424 = vunpack.c.l.s8.bf16 %v2256
    %v2425 = vunpack.c.l.s8.bf16 %v2257
    %v2426 = vunpack.c.l.s8.bf16 %v2258
    %v2427 = vunpack.c.l.s8.bf16 %v2259
    %v2428 = vunpack.c.h.s8.bf16 %v2252
    %v2429 = vunpack.c.h.s8.bf16 %v2253
    %v2430 = vunpack.c.h.s8.bf16 %v2254
    %v2431 = vunpack.c.h.s8.bf16 %v2255
    %v2432 = vunpack.c.h.s8.bf16 %v2256
    %v2433 = vunpack.c.h.s8.bf16 %v2257
    %v2434 = vunpack.c.h.s8.bf16 %v2258
    %v2435 = vunpack.c.h.s8.bf16 %v2259
    %v2436 = vunpack.c.l.s8.bf16 %v2260
    %v2437 = vunpack.c.l.s8.bf16 %v2261
    %v2438 = vunpack.c.l.s8.bf16 %v2262
    %v2439 = vunpack.c.l.s8.bf16 %v2263
    %v2440 = vunpack.c.l.s8.bf16 %v2264
    %v2441 = vunpack.c.l.s8.bf16 %v2265
    %v2442 = vunpack.c.l.s8.bf16 %v2266
    %v2443 = vunpack.c.l.s8.bf16 %v2267
    %v2444 = vunpack.c.h.s8.bf16 %v2260
    %v2445 = vunpack.c.h.s8.bf16 %v2261
    %v2446 = vunpack.c.h.s8.bf16 %v2262
    %v2447 = vunpack.c.h.s8.bf16 %v2263
    %v2448 = vunpack.c.h.s8.bf16 %v2264
    %v2449 = vunpack.c.h.s8.bf16 %v2265
    %v2450 = vunpack.c.h.s8.bf16 %v2266
    %v2451 = vunpack.c.h.s8.bf16 %v2267
    %v2452 = vunpack.c.l.s8.bf16 %v2268
    %v2453 = vunpack.c.l.s8.bf16 %v2269
    %v2454 = vunpack.c.l.s8.bf16 %v2270
    %v2455 = vunpack.c.l.s8.bf16 %v2271
    %v2456 = vunpack.c.l.s8.bf16 %v2272
    %v2457 = vunpack.c.l.s8.bf16 %v2273
    %v2458 = vunpack.c.l.s8.bf16 %v2274
    %v2459 = vunpack.c.l.s8.bf16 %v2275
    %v2460 = vunpack.c.h.s8.bf16 %v2268
    %v2461 = vunpack.c.h.s8.bf16 %v2269
    %v2462 = vunpack.c.h.s8.bf16 %v2270
    %v2463 = vunpack.c.h.s8.bf16 %v2271
    %v2464 = vunpack.c.h.s8.bf16 %v2272
    %v2465 = vunpack.c.h.s8.bf16 %v2273
    %v2466 = vunpack.c.h.s8.bf16 %v2274
    %v2467 = vunpack.c.h.s8.bf16 %v2275
    %v2468 = vunpack.c.l.s8.bf16 %v2276
    %v2469 = vunpack.c.l.s8.bf16 %v2277
    %v2470 = vunpack.c.l.s8.bf16 %v2278
    %v2471 = vunpack.c.l.s8.bf16 %v2279
    %v2472 = vunpack.c.l.s8.bf16 %v2280
    %v2473 = vunpack.c.l.s8.bf16 %v2281
    %v2474 = vunpack.c.l.s8.bf16 %v2282
    %v2475 = vunpack.c.l.s8.bf16 %v2283
    %v2476 = vunpack.c.h.s8.bf16 %v2276
    %v2477 = vunpack.c.h.s8.bf16 %v2277
    %v2478 = vunpack.c.h.s8.bf16 %v2278
    %v2479 = vunpack.c.h.s8.bf16 %v2279
    %v2480 = vunpack.c.h.s8.bf16 %v2280
    %v2481 = vunpack.c.h.s8.bf16 %v2281
    %v2482 = vunpack.c.h.s8.bf16 %v2282
    %v2483 = vunpack.c.h.s8.bf16 %v2283
    %v2484 = vunpack.c.l.s8.bf16 %v2284
    %v2485 = vunpack.c.l.s8.bf16 %v2285
    %v2486 = vunpack.c.l.s8.bf16 %v2286
    %v2487 = vunpack.c.l.s8.bf16 %v2287
    %v2488 = vunpack.c.l.s8.bf16 %v2288
    %v2489 = vunpack.c.l.s8.bf16 %v2289
    %v2490 = vunpack.c.l.s8.bf16 %v2290
    %v2491 = vunpack.c.l.s8.bf16 %v2291
    %v2492 = vunpack.c.h.s8.bf16 %v2284
    %v2493 = vunpack.c.h.s8.bf16 %v2285
    %v2494 = vunpack.c.h.s8.bf16 %v2286
    %v2495 = vunpack.c.h.s8.bf16 %v2287
    %v2496 = vunpack.c.h.s8.bf16 %v2288
    %v2497 = vunpack.c.h.s8.bf16 %v2289
    %v2498 = vunpack.c.h.s8.bf16 %v2290
    %v2499 = vunpack.c.h.s8.bf16 %v2291
    %v2500 = vunpack.c.l.s8.bf16 %v2292
    %v2501 = vunpack.c.l.s8.bf16 %v2293
    %v2502 = vunpack.c.l.s8.bf16 %v2294
    %v2503 = vunpack.c.l.s8.bf16 %v2295
    %v2504 = vunpack.c.l.s8.bf16 %v2296
    %v2505 = vunpack.c.l.s8.bf16 %v2297
    %v2506 = vunpack.c.l.s8.bf16 %v2298
    %v2507 = vunpack.c.l.s8.bf16 %v2299
    %v2508 = vunpack.c.h.s8.bf16 %v2292
    %v2509 = vunpack.c.h.s8.bf16 %v2293
    %v2510 = vunpack.c.h.s8.bf16 %v2294
    %v2511 = vunpack.c.h.s8.bf16 %v2295
    %v2512 = vunpack.c.h.s8.bf16 %v2296
    %v2513 = vunpack.c.h.s8.bf16 %v2297
    %v2514 = vunpack.c.h.s8.bf16 %v2298
    %v2515 = vunpack.c.h.s8.bf16 %v2299
    %v2516 = vunpack.c.l.s8.bf16 %v2300
    %v2517 = vunpack.c.l.s8.bf16 %v2301
    %v2518 = vunpack.c.l.s8.bf16 %v2302
    %v2519 = vunpack.c.l.s8.bf16 %v2303
    %v2520 = vunpack.c.l.s8.bf16 %v2304
    %v2521 = vunpack.c.l.s8.bf16 %v2305
    %v2522 = vunpack.c.l.s8.bf16 %v2306
    %v2523 = vunpack.c.l.s8.bf16 %v2307
    %v2524 = vunpack.c.h.s8.bf16 %v2300
    %v2525 = vunpack.c.h.s8.bf16 %v2301
    %v2526 = vunpack.c.h.s8.bf16 %v2302
    %v2527 = vunpack.c.h.s8.bf16 %v2303
    %v2528 = vunpack.c.h.s8.bf16 %v2304
    %v2529 = vunpack.c.h.s8.bf16 %v2305
    %v2530 = vunpack.c.h.s8.bf16 %v2306
    %v2531 = vunpack.c.h.s8.bf16 %v2307
    %v2532 = vunpack.c.l.s8.bf16 %v2308
    %v2533 = vunpack.c.l.s8.bf16 %v2309
    %v2534 = vunpack.c.l.s8.bf16 %v2310
    %v2535 = vunpack.c.l.s8.bf16 %v2311
    %v2536 = vunpack.c.l.s8.bf16 %v2312
    %v2537 = vunpack.c.l.s8.bf16 %v2313
    %v2538 = vunpack.c.l.s8.bf16 %v2314
    %v2539 = vunpack.c.l.s8.bf16 %v2315
    %v2540 = vunpack.c.h.s8.bf16 %v2308
    %v2541 = vunpack.c.h.s8.bf16 %v2309
    %v2542 = vunpack.c.h.s8.bf16 %v2310
    %v2543 = vunpack.c.h.s8.bf16 %v2311
    %v2544 = vunpack.c.h.s8.bf16 %v2312
    %v2545 = vunpack.c.h.s8.bf16 %v2313
    %v2546 = vunpack.c.h.s8.bf16 %v2314
    %v2547 = vunpack.c.h.s8.bf16 %v2315
    %v2548 = vunpack.c.l.s8.bf16 %v2316
    %v2549 = vunpack.c.l.s8.bf16 %v2317
    %v2550 = vunpack.c.l.s8.bf16 %v2318
    %v2551 = vunpack.c.l.s8.bf16 %v2319
    %v2552 = vunpack.c.l.s8.bf16 %v2320
    %v2553 = vunpack.c.l.s8.bf16 %v2321
    %v2554 = vunpack.c.l.s8.bf16 %v2322
    %v2555 = vunpack.c.l.s8.bf16 %v2323
    %v2556 = vunpack.c.h.s8.bf16 %v2316
    %v2557 = vunpack.c.h.s8.bf16 %v2317
    %v2558 = vunpack.c.h.s8.bf16 %v2318
    %v2559 = vunpack.c.h.s8.bf16 %v2319
    %v2560 = vunpack.c.h.s8.bf16 %v2320
    %v2561 = vunpack.c.h.s8.bf16 %v2321
    %v2562 = vunpack.c.h.s8.bf16 %v2322
    %v2563 = vunpack.c.h.s8.bf16 %v2323
    %v2564 = vunpack.c.l.s8.bf16 %v2324
    %v2565 = vunpack.c.l.s8.bf16 %v2325
    %v2566 = vunpack.c.l.s8.bf16 %v2326
    %v2567 = vunpack.c.l.s8.bf16 %v2327
    %v2568 = vunpack.c.l.s8.bf16 %v2328
    %v2569 = vunpack.c.l.s8.bf16 %v2329
    %v2570 = vunpack.c.l.s8.bf16 %v2330
    %v2571 = vunpack.c.l.s8.bf16 %v2331
    %v2572 = vunpack.c.h.s8.bf16 %v2324
    %v2573 = vunpack.c.h.s8.bf16 %v2325
    %v2574 = vunpack.c.h.s8.bf16 %v2326
    %v2575 = vunpack.c.h.s8.bf16 %v2327
    %v2576 = vunpack.c.h.s8.bf16 %v2328
    %v2577 = vunpack.c.h.s8.bf16 %v2329
    %v2578 = vunpack.c.h.s8.bf16 %v2330
    %v2579 = vunpack.c.h.s8.bf16 %v2331
    %v2580 = vunpack.c.l.s8.bf16 %v2332
    %v2581 = vunpack.c.l.s8.bf16 %v2333
    %v2582 = vunpack.c.l.s8.bf16 %v2334
    %v2583 = vunpack.c.l.s8.bf16 %v2335
    %v2584 = vunpack.c.l.s8.bf16 %v2336
    %v2585 = vunpack.c.l.s8.bf16 %v2337
    %v2586 = vunpack.c.l.s8.bf16 %v2338
    %v2587 = vunpack.c.l.s8.bf16 %v2339
    %v2588 = vunpack.c.h.s8.bf16 %v2332
    %v2589 = vunpack.c.h.s8.bf16 %v2333
    %v2590 = vunpack.c.h.s8.bf16 %v2334
    %v2591 = vunpack.c.h.s8.bf16 %v2335
    %v2592 = vunpack.c.h.s8.bf16 %v2336
    %v2593 = vunpack.c.h.s8.bf16 %v2337
    %v2594 = vunpack.c.h.s8.bf16 %v2338
    %v2595 = vunpack.c.h.s8.bf16 %v2339
    %v2596 = vld [vmem:[%s15] sm:$0xff]
    %v2597 = vld [vmem:[%s14] sm:$0xff]
    %2598 = vmatprep.subr.bf16.mxu0 %v2397
    %2599 = vmatpush1.bf16.msra.mxu0 %v2396
    %2600 = vmatprep.subr.bf16.mxu0 %v2389
    %2601 = vmatpush1.bf16.msra.mxu0 %v2388
    %2602 = vmatprep.subr.bf16.mxu0 %v2381
    %2603 = vmatpush1.bf16.msra.mxu0 %v2380
    %2604 = vmatprep.subr.bf16.mxu0 %v2373
    %2605 = vmatpush1.bf16.msra.mxu0 %v2372
    %2606 = vmatprep.subr.bf16.mxu0 %v2365
    %2607 = vmatpush1.bf16.msra.mxu0 %v2364
    %2608 = vmatprep.subr.bf16.mxu0 %v2357
    %2609 = vmatpush1.bf16.msra.mxu0 %v2356
    %2610 = vmatprep.subr.bf16.mxu0 %v2349
    %2611 = vmatpush1.bf16.msra.mxu0 %v2348
    %2612 = vmatprep.subr.bf16.mxu0 %v2341
    %2613 = vmatpush1.bf16.msra.mxu0 %v2340
    %2614 = vmatprep.subr.bf16.mxu0 %v2461
    %2615 = vmatpush2.bf16.msra.mxu0 %v2460
    %2616 = vmatprep.subr.bf16.mxu0 %v2453
    %2617 = vmatpush2.bf16.msra.mxu0 %v2452
    %2618 = vmatprep.subr.bf16.mxu0 %v2445
    %2619 = vmatpush2.bf16.msra.mxu0 %v2444
    %2620 = vmatprep.subr.bf16.mxu0 %v2437
    %2621 = vmatpush2.bf16.msra.mxu0 %v2436
    %2622 = vmatprep.subr.bf16.mxu0 %v2429
    %2623 = vmatpush2.bf16.msra.mxu0 %v2428
    %2624 = vmatprep.subr.bf16.mxu0 %v2421
    %2625 = vmatpush2.bf16.msra.mxu0 %v2420
    %2626 = vmatprep.subr.bf16.mxu0 %v2413
    %2627 = vmatpush2.bf16.msra.mxu0 %v2412
    %2628 = vmatprep.subr.bf16.mxu0 %v2405
    %2629 = vmatpush2.bf16.msra.mxu0 %v2404
    %2630 = vmatprep.mubr.bf16.mxu0 %v2209
    %2631 = vmatmul.mubr.bf16.gmra.mxu0 %v2208
    %v2632 = vpop.f32.mrf.mxu0
    %v2633 = vadd.f32 0.0, %v2632
    %v2634 = vpop.f32.mrf.mxu0
    %v2635 = vadd.f32 0.0, %v2634
    %v2636 = vpop.f32.mrf.mxu0
    %v2637 = vpop.f32.mrf.mxu0
    %2638 = vdwg.mxu0
    %2639 = vmatprep.subr.bf16.mxu0 %v2525
    %2640 = vmatpush1.bf16.msra.mxu0 %v2524
    %2641 = vmatprep.subr.bf16.mxu0 %v2517
    %2642 = vmatpush1.bf16.msra.mxu0 %v2516
    %2643 = vmatprep.subr.bf16.mxu0 %v2509
    %2644 = vmatpush1.bf16.msra.mxu0 %v2508
    %2645 = vmatprep.subr.bf16.mxu0 %v2501
    %2646 = vmatpush1.bf16.msra.mxu0 %v2500
    %2647 = vmatprep.subr.bf16.mxu0 %v2493
    %2648 = vmatpush1.bf16.msra.mxu0 %v2492
    %2649 = vmatprep.subr.bf16.mxu0 %v2485
    %2650 = vmatpush1.bf16.msra.mxu0 %v2484
    %2651 = vmatprep.subr.bf16.mxu0 %v2477
    %2652 = vmatpush1.bf16.msra.mxu0 %v2476
    %2653 = vmatprep.subr.bf16.mxu0 %v2469
    %2654 = vmatpush1.bf16.msra.mxu0 %v2468
    %2655 = vmatprep.subr.bf16.mxu0 %v2589
    %2656 = vmatpush2.bf16.msra.mxu0 %v2588
    %2657 = vmatprep.subr.bf16.mxu0 %v2581
    %2658 = vmatpush2.bf16.msra.mxu0 %v2580
    %2659 = vmatprep.subr.bf16.mxu0 %v2573
    %2660 = vmatpush2.bf16.msra.mxu0 %v2572
    %2661 = vmatprep.subr.bf16.mxu0 %v2565
    %2662 = vmatpush2.bf16.msra.mxu0 %v2564
    %2663 = vmatprep.subr.bf16.mxu0 %v2557
    %2664 = vmatpush2.bf16.msra.mxu0 %v2556
    %2665 = vmatprep.subr.bf16.mxu0 %v2549
    %2666 = vmatpush2.bf16.msra.mxu0 %v2548
    %2667 = vmatprep.subr.bf16.mxu0 %v2541
    %2668 = vmatpush2.bf16.msra.mxu0 %v2540
    %2669 = vmatprep.subr.bf16.mxu0 %v2533
    %2670 = vmatpush2.bf16.msra.mxu0 %v2532
    %2671 = vmatprep.mubr.bf16.mxu0 %v2211
    %2672 = vmatmul.mubr.bf16.gmra.mxu0 %v2210
    %v2673 = vpop.f32.mrf.mxu0
    %v2674 = vadd.f32 %v2633, %v2673
    %v2675 = vpop.f32.mrf.mxu0
    %v2676 = vadd.f32 %v2635, %v2675
    %v2677 = vpop.f32.mrf.mxu0
    %v2678 = vpop.f32.mrf.mxu0
    %2679 = vdwg.mxu0
    %2680 = vmatprep.subr.bf16.mxu0 %v2399
    %2681 = vmatpush1.bf16.msra.mxu0 %v2398
    %2682 = vmatprep.subr.bf16.mxu0 %v2391
    %2683 = vmatpush1.bf16.msra.mxu0 %v2390
    %2684 = vmatprep.subr.bf16.mxu0 %v2383
    %2685 = vmatpush1.bf16.msra.mxu0 %v2382
    %2686 = vmatprep.subr.bf16.mxu0 %v2375
    %2687 = vmatpush1.bf16.msra.mxu0 %v2374
    %2688 = vmatprep.subr.bf16.mxu0 %v2367
    %2689 = vmatpush1.bf16.msra.mxu0 %v2366
    %2690 = vmatprep.subr.bf16.mxu0 %v2359
    %2691 = vmatpush1.bf16.msra.mxu0 %v2358
    %2692 = vmatprep.subr.bf16.mxu0 %v2351
    %2693 = vmatpush1.bf16.msra.mxu0 %v2350
    %2694 = vmatprep.subr.bf16.mxu0 %v2343
    %2695 = vmatpush1.bf16.msra.mxu0 %v2342
    %2696 = vmatprep.subr.bf16.mxu0 %v2463
    %2697 = vmatpush2.bf16.msra.mxu0 %v2462
    %2698 = vmatprep.subr.bf16.mxu0 %v2455
    %2699 = vmatpush2.bf16.msra.mxu0 %v2454
    %2700 = vmatprep.subr.bf16.mxu0 %v2447
    %2701 = vmatpush2.bf16.msra.mxu0 %v2446
    %2702 = vmatprep.subr.bf16.mxu0 %v2439
    %2703 = vmatpush2.bf16.msra.mxu0 %v2438
    %2704 = vmatprep.subr.bf16.mxu0 %v2431
    %2705 = vmatpush2.bf16.msra.mxu0 %v2430
    %2706 = vmatprep.subr.bf16.mxu0 %v2423
    %2707 = vmatpush2.bf16.msra.mxu0 %v2422
    %2708 = vmatprep.subr.bf16.mxu0 %v2415
    %2709 = vmatpush2.bf16.msra.mxu0 %v2414
    %2710 = vmatprep.subr.bf16.mxu0 %v2407
    %2711 = vmatpush2.bf16.msra.mxu0 %v2406
    %2712 = vmatprep.mubr.bf16.mxu0 %v2209
    %2713 = vmatmul.mubr.bf16.gmra.mxu0 %v2208
    %v2714 = vpop.f32.mrf.mxu0
    %v2715 = vadd.f32 0.0, %v2714
    %v2716 = vpop.f32.mrf.mxu0
    %v2717 = vadd.f32 0.0, %v2716
    %v2718 = vpop.f32.mrf.mxu0
    %v2719 = vpop.f32.mrf.mxu0
    %2720 = vdwg.mxu0
    %2721 = vmatprep.subr.bf16.mxu0 %v2527
    %2722 = vmatpush1.bf16.msra.mxu0 %v2526
    %2723 = vmatprep.subr.bf16.mxu0 %v2519
    %2724 = vmatpush1.bf16.msra.mxu0 %v2518
    %2725 = vmatprep.subr.bf16.mxu0 %v2511
    %2726 = vmatpush1.bf16.msra.mxu0 %v2510
    %2727 = vmatprep.subr.bf16.mxu0 %v2503
    %2728 = vmatpush1.bf16.msra.mxu0 %v2502
    %2729 = vmatprep.subr.bf16.mxu0 %v2495
    %2730 = vmatpush1.bf16.msra.mxu0 %v2494
    %2731 = vmatprep.subr.bf16.mxu0 %v2487
    %2732 = vmatpush1.bf16.msra.mxu0 %v2486
    %2733 = vmatprep.subr.bf16.mxu0 %v2479
    %2734 = vmatpush1.bf16.msra.mxu0 %v2478
    %2735 = vmatprep.subr.bf16.mxu0 %v2471
    %2736 = vmatpush1.bf16.msra.mxu0 %v2470
    %2737 = vmatprep.subr.bf16.mxu0 %v2591
    %2738 = vmatpush2.bf16.msra.mxu0 %v2590
    %2739 = vmatprep.subr.bf16.mxu0 %v2583
    %2740 = vmatpush2.bf16.msra.mxu0 %v2582
    %2741 = vmatprep.subr.bf16.mxu0 %v2575
    %2742 = vmatpush2.bf16.msra.mxu0 %v2574
    %2743 = vmatprep.subr.bf16.mxu0 %v2567
    %2744 = vmatpush2.bf16.msra.mxu0 %v2566
    %2745 = vmatprep.subr.bf16.mxu0 %v2559
    %2746 = vmatpush2.bf16.msra.mxu0 %v2558
    %2747 = vmatprep.subr.bf16.mxu0 %v2551
    %2748 = vmatpush2.bf16.msra.mxu0 %v2550
    %2749 = vmatprep.subr.bf16.mxu0 %v2543
    %2750 = vmatpush2.bf16.msra.mxu0 %v2542
    %2751 = vmatprep.subr.bf16.mxu0 %v2535
    %2752 = vmatpush2.bf16.msra.mxu0 %v2534
    %2753 = vmatprep.mubr.bf16.mxu0 %v2211
    %2754 = vmatmul.mubr.bf16.gmra.mxu0 %v2210
    %v2755 = vpop.f32.mrf.mxu0
    %v2756 = vadd.f32 %v2715, %v2755
    %v2757 = vpop.f32.mrf.mxu0
    %v2758 = vadd.f32 %v2717, %v2757
    %v2759 = vpop.f32.mrf.mxu0
    %v2760 = vpop.f32.mrf.mxu0
    %2761 = vdwg.mxu0
    %2762 = vmatprep.subr.bf16.mxu0 %v2401
    %2763 = vmatpush1.bf16.msra.mxu0 %v2400
    %2764 = vmatprep.subr.bf16.mxu0 %v2393
    %2765 = vmatpush1.bf16.msra.mxu0 %v2392
    %2766 = vmatprep.subr.bf16.mxu0 %v2385
    %2767 = vmatpush1.bf16.msra.mxu0 %v2384
    %2768 = vmatprep.subr.bf16.mxu0 %v2377
    %2769 = vmatpush1.bf16.msra.mxu0 %v2376
    %2770 = vmatprep.subr.bf16.mxu0 %v2369
    %2771 = vmatpush1.bf16.msra.mxu0 %v2368
    %2772 = vmatprep.subr.bf16.mxu0 %v2361
    %2773 = vmatpush1.bf16.msra.mxu0 %v2360
    %2774 = vmatprep.subr.bf16.mxu0 %v2353
    %2775 = vmatpush1.bf16.msra.mxu0 %v2352
    %2776 = vmatprep.subr.bf16.mxu0 %v2345
    %2777 = vmatpush1.bf16.msra.mxu0 %v2344
    %2778 = vmatprep.subr.bf16.mxu0 %v2465
    %2779 = vmatpush2.bf16.msra.mxu0 %v2464
    %2780 = vmatprep.subr.bf16.mxu0 %v2457
    %2781 = vmatpush2.bf16.msra.mxu0 %v2456
    %2782 = vmatprep.subr.bf16.mxu0 %v2449
    %2783 = vmatpush2.bf16.msra.mxu0 %v2448
    %2784 = vmatprep.subr.bf16.mxu0 %v2441
    %2785 = vmatpush2.bf16.msra.mxu0 %v2440
    %2786 = vmatprep.subr.bf16.mxu0 %v2433
    %2787 = vmatpush2.bf16.msra.mxu0 %v2432
    %2788 = vmatprep.subr.bf16.mxu0 %v2425
    %2789 = vmatpush2.bf16.msra.mxu0 %v2424
    %2790 = vmatprep.subr.bf16.mxu0 %v2417
    %2791 = vmatpush2.bf16.msra.mxu0 %v2416
    %2792 = vmatprep.subr.bf16.mxu0 %v2409
    %2793 = vmatpush2.bf16.msra.mxu0 %v2408
    %2794 = vmatprep.mubr.bf16.mxu0 %v2209
    %2795 = vmatmul.mubr.bf16.gmra.mxu0 %v2208
    %v2796 = vpop.f32.mrf.mxu0
    %v2797 = vadd.f32 0.0, %v2796
    %v2798 = vpop.f32.mrf.mxu0
    %v2799 = vadd.f32 0.0, %v2798
    %v2800 = vpop.f32.mrf.mxu0
    %v2801 = vpop.f32.mrf.mxu0
    %2802 = vdwg.mxu0
    %2803 = vmatprep.subr.bf16.mxu0 %v2529
    %2804 = vmatpush1.bf16.msra.mxu0 %v2528
    %2805 = vmatprep.subr.bf16.mxu0 %v2521
    %2806 = vmatpush1.bf16.msra.mxu0 %v2520
    %2807 = vmatprep.subr.bf16.mxu0 %v2513
    %2808 = vmatpush1.bf16.msra.mxu0 %v2512
    %2809 = vmatprep.subr.bf16.mxu0 %v2505
    %2810 = vmatpush1.bf16.msra.mxu0 %v2504
    %2811 = vmatprep.subr.bf16.mxu0 %v2497
    %2812 = vmatpush1.bf16.msra.mxu0 %v2496
    %2813 = vmatprep.subr.bf16.mxu0 %v2489
    %2814 = vmatpush1.bf16.msra.mxu0 %v2488
    %2815 = vmatprep.subr.bf16.mxu0 %v2481
    %2816 = vmatpush1.bf16.msra.mxu0 %v2480
    %2817 = vmatprep.subr.bf16.mxu0 %v2473
    %2818 = vmatpush1.bf16.msra.mxu0 %v2472
    %2819 = vmatprep.subr.bf16.mxu0 %v2593
    %2820 = vmatpush2.bf16.msra.mxu0 %v2592
    %2821 = vmatprep.subr.bf16.mxu0 %v2585
    %2822 = vmatpush2.bf16.msra.mxu0 %v2584
    %2823 = vmatprep.subr.bf16.mxu0 %v2577
    %2824 = vmatpush2.bf16.msra.mxu0 %v2576
    %2825 = vmatprep.subr.bf16.mxu0 %v2569
    %2826 = vmatpush2.bf16.msra.mxu0 %v2568
    %2827 = vmatprep.subr.bf16.mxu0 %v2561
    %2828 = vmatpush2.bf16.msra.mxu0 %v2560
    %2829 = vmatprep.subr.bf16.mxu0 %v2553
    %2830 = vmatpush2.bf16.msra.mxu0 %v2552
    %2831 = vmatprep.subr.bf16.mxu0 %v2545
    %2832 = vmatpush2.bf16.msra.mxu0 %v2544
    %2833 = vmatprep.subr.bf16.mxu0 %v2537
    %2834 = vmatpush2.bf16.msra.mxu0 %v2536
    %2835 = vmatprep.mubr.bf16.mxu0 %v2211
    %2836 = vmatmul.mubr.bf16.gmra.mxu0 %v2210
    %v2837 = vpop.f32.mrf.mxu0
    %v2838 = vadd.f32 %v2797, %v2837
    %v2839 = vpop.f32.mrf.mxu0
    %v2840 = vadd.f32 %v2799, %v2839
    %v2841 = vpop.f32.mrf.mxu0
    %v2842 = vpop.f32.mrf.mxu0
    %2843 = vdwg.mxu0
    %2844 = vmatprep.subr.bf16.mxu0 %v2403
    %2845 = vmatpush1.bf16.msra.mxu0 %v2402
    %2846 = vmatprep.subr.bf16.mxu0 %v2395
    %2847 = vmatpush1.bf16.msra.mxu0 %v2394
    %2848 = vmatprep.subr.bf16.mxu0 %v2387
    %2849 = vmatpush1.bf16.msra.mxu0 %v2386
    %2850 = vmatprep.subr.bf16.mxu0 %v2379
    %2851 = vmatpush1.bf16.msra.mxu0 %v2378
    %2852 = vmatprep.subr.bf16.mxu0 %v2371
    %2853 = vmatpush1.bf16.msra.mxu0 %v2370
    %2854 = vmatprep.subr.bf16.mxu0 %v2363
    %2855 = vmatpush1.bf16.msra.mxu0 %v2362
    %2856 = vmatprep.subr.bf16.mxu0 %v2355
    %2857 = vmatpush1.bf16.msra.mxu0 %v2354
    %2858 = vmatprep.subr.bf16.mxu0 %v2347
    %2859 = vmatpush1.bf16.msra.mxu0 %v2346
    %2860 = vmatprep.subr.bf16.mxu0 %v2467
    %2861 = vmatpush2.bf16.msra.mxu0 %v2466
    %2862 = vmatprep.subr.bf16.mxu0 %v2459
    %2863 = vmatpush2.bf16.msra.mxu0 %v2458
    %2864 = vmatprep.subr.bf16.mxu0 %v2451
    %2865 = vmatpush2.bf16.msra.mxu0 %v2450
    %2866 = vmatprep.subr.bf16.mxu0 %v2443
    %2867 = vmatpush2.bf16.msra.mxu0 %v2442
    %2868 = vmatprep.subr.bf16.mxu0 %v2435
    %2869 = vmatpush2.bf16.msra.mxu0 %v2434
    %2870 = vmatprep.subr.bf16.mxu0 %v2427
    %2871 = vmatpush2.bf16.msra.mxu0 %v2426
    %2872 = vmatprep.subr.bf16.mxu0 %v2419
    %2873 = vmatpush2.bf16.msra.mxu0 %v2418
    %2874 = vmatprep.subr.bf16.mxu0 %v2411
    %2875 = vmatpush2.bf16.msra.mxu0 %v2410
    %2876 = vmatprep.mubr.bf16.mxu0 %v2209
    %2877 = vmatmul.mubr.bf16.gmra.mxu0 %v2208
    %v2878 = vpop.f32.mrf.mxu0
    %v2879 = vadd.f32 0.0, %v2878
    %v2880 = vpop.f32.mrf.mxu0
    %v2881 = vadd.f32 0.0, %v2880
    %v2882 = vpop.f32.mrf.mxu0
    %v2883 = vpop.f32.mrf.mxu0
    %2884 = vdwg.mxu0
    %2885 = vmatprep.subr.bf16.mxu0 %v2531
    %2886 = vmatpush1.bf16.msra.mxu0 %v2530
    %2887 = vmatprep.subr.bf16.mxu0 %v2523
    %2888 = vmatpush1.bf16.msra.mxu0 %v2522
    %2889 = vmatprep.subr.bf16.mxu0 %v2515
    %2890 = vmatpush1.bf16.msra.mxu0 %v2514
    %2891 = vmatprep.subr.bf16.mxu0 %v2507
    %2892 = vmatpush1.bf16.msra.mxu0 %v2506
    %2893 = vmatprep.subr.bf16.mxu0 %v2499
    %2894 = vmatpush1.bf16.msra.mxu0 %v2498
    %2895 = vmatprep.subr.bf16.mxu0 %v2491
    %2896 = vmatpush1.bf16.msra.mxu0 %v2490
    %2897 = vmatprep.subr.bf16.mxu0 %v2483
    %2898 = vmatpush1.bf16.msra.mxu0 %v2482
    %2899 = vmatprep.subr.bf16.mxu0 %v2475
    %2900 = vmatpush1.bf16.msra.mxu0 %v2474
    %2901 = vmatprep.subr.bf16.mxu0 %v2595
    %2902 = vmatpush2.bf16.msra.mxu0 %v2594
    %2903 = vmatprep.subr.bf16.mxu0 %v2587
    %2904 = vmatpush2.bf16.msra.mxu0 %v2586
    %2905 = vmatprep.subr.bf16.mxu0 %v2579
    %2906 = vmatpush2.bf16.msra.mxu0 %v2578
    %2907 = vmatprep.subr.bf16.mxu0 %v2571
    %2908 = vmatpush2.bf16.msra.mxu0 %v2570
    %2909 = vmatprep.subr.bf16.mxu0 %v2563
    %2910 = vmatpush2.bf16.msra.mxu0 %v2562
    %2911 = vmatprep.subr.bf16.mxu0 %v2555
    %2912 = vmatpush2.bf16.msra.mxu0 %v2554
    %2913 = vmatprep.subr.bf16.mxu0 %v2547
    %2914 = vmatpush2.bf16.msra.mxu0 %v2546
    %2915 = vmatprep.subr.bf16.mxu0 %v2539
    %2916 = vmatpush2.bf16.msra.mxu0 %v2538
    %2917 = vmatprep.mubr.bf16.mxu0 %v2211
    %2918 = vmatmul.mubr.bf16.gmra.mxu0 %v2210
    %v2919 = vpop.f32.mrf.mxu0
    %v2920 = vadd.f32 %v2879, %v2919
    %v2921 = vpop.f32.mrf.mxu0
    %v2922 = vadd.f32 %v2881, %v2921
    %v2923 = vpop.f32.mrf.mxu0
    %v2924 = vpop.f32.mrf.mxu0
    %2925 = vdwg.mxu0
    %v2927 = vlaneseq
    %v2928 = vshrl.u32 %v2927, 7
    %v2929 = vsub.s32 0, %v2928
    %v2930 = vrot.slane %v2597, %v2929
    %v2931 = vlaneseq
    %v2932 = vshrl.u32 %v2931, 7
    %v2933 = vsub.s32 1, %v2932
    %v2934 = vrot.slane %v2597, %v2933
    %v2935 = vlaneseq
    %v2936 = vshrl.u32 %v2935, 7
    %v2937 = vsub.s32 2, %v2936
    %v2938 = vrot.slane %v2597, %v2937
    %v2939 = vlaneseq
    %v2940 = vshrl.u32 %v2939, 7
    %v2941 = vsub.s32 3, %v2940
    %v2942 = vrot.slane %v2597, %v2941
    %v2943 = vlaneseq
    %v2944 = vshrl.u32 %v2943, 7
    %v2945 = vsub.s32 4, %v2944
    %v2946 = vrot.slane %v2597, %v2945
    %v2947 = vlaneseq
    %v2948 = vshrl.u32 %v2947, 7
    %v2949 = vsub.s32 5, %v2948
    %v2950 = vrot.slane %v2597, %v2949
    %v2951 = vlaneseq
    %v2952 = vshrl.u32 %v2951, 7
    %v2953 = vsub.s32 6, %v2952
    %v2954 = vrot.slane %v2597, %v2953
    %v2955 = vlaneseq
    %v2956 = vshrl.u32 %v2955, 7
    %v2957 = vsub.s32 7, %v2956
    %v2958 = vrot.slane %v2597, %v2957
    %v2967 = vmul.f32 %v2674, %v2930
    %v2968 = vmul.f32 %v2676, %v2934
    %v2969 = vmul.f32 %v2756, %v2938
    %v2970 = vmul.f32 %v2758, %v2942
    %v2971 = vmul.f32 %v2838, %v2946
    %v2972 = vmul.f32 %v2840, %v2950
    %v2973 = vmul.f32 %v2920, %v2954
    %v2974 = vmul.f32 %v2922, %v2958
    %v2976 = vlaneseq
    %v2977 = vshrl.u32 %v2976, 7
    %v2978 = vsub.s32 0, %v2977
    %v2979 = vrot.slane %v2596, %v2978
    %v2980 = vlaneseq
    %v2981 = vshrl.u32 %v2980, 7
    %v2982 = vsub.s32 1, %v2981
    %v2983 = vrot.slane %v2596, %v2982
    %v2984 = vlaneseq
    %v2985 = vshrl.u32 %v2984, 7
    %v2986 = vsub.s32 2, %v2985
    %v2987 = vrot.slane %v2596, %v2986
    %v2988 = vlaneseq
    %v2989 = vshrl.u32 %v2988, 7
    %v2990 = vsub.s32 3, %v2989
    %v2991 = vrot.slane %v2596, %v2990
    %v2992 = vlaneseq
    %v2993 = vshrl.u32 %v2992, 7
    %v2994 = vsub.s32 4, %v2993
    %v2995 = vrot.slane %v2596, %v2994
    %v2996 = vlaneseq
    %v2997 = vshrl.u32 %v2996, 7
    %v2998 = vsub.s32 5, %v2997
    %v2999 = vrot.slane %v2596, %v2998
    %v3000 = vlaneseq
    %v3001 = vshrl.u32 %v3000, 7
    %v3002 = vsub.s32 6, %v3001
    %v3003 = vrot.slane %v2596, %v3002
    %v3004 = vlaneseq
    %v3005 = vshrl.u32 %v3004, 7
    %v3006 = vsub.s32 7, %v3005
    %v3007 = vrot.slane %v2596, %v3006
    %v3016 = vadd.f32 %v2967, %v2979
    %v3017 = vadd.f32 %v2968, %v2983
    %v3018 = vadd.f32 %v2969, %v2987
    %v3019 = vadd.f32 %v2970, %v2991
    %v3020 = vadd.f32 %v2971, %v2995
    %v3021 = vadd.f32 %v2972, %v2999
    %v3022 = vadd.f32 %v2973, %v3003
    %v3023 = vadd.f32 %v2974, %v3007
    %v3024 = vxor.u32 %v3016, 2147483648
    %v3025 = vxor.u32 %v3017, 2147483648
    %v3026 = vxor.u32 %v3018, 2147483648
    %v3027 = vxor.u32 %v3019, 2147483648
    %v3028 = vxor.u32 %v3020, 2147483648
    %v3029 = vxor.u32 %v3021, 2147483648
    %v3030 = vxor.u32 %v3022, 2147483648
    %v3031 = vxor.u32 %v3023, 2147483648
    %v3032 = vmul.f32 %v3024, 1.442695
    %v3033 = vpow.pop %v3032
    %v3034 = vmul.f32 %v3025, 1.442695
    %v3035 = vpow.pop %v3034
    %v3036 = vmul.f32 %v3026, 1.442695
    %v3037 = vpow.pop %v3036
    %v3038 = vmul.f32 %v3027, 1.442695
    %v3039 = vpow.pop %v3038
    %v3040 = vmul.f32 %v3028, 1.442695
    %v3041 = vpow.pop %v3040
    %v3042 = vmul.f32 %v3029, 1.442695
    %v3043 = vpow.pop %v3042
    %v3044 = vmul.f32 %v3030, 1.442695
    %v3045 = vpow.pop %v3044
    %v3046 = vmul.f32 %v3031, 1.442695
    %v3047 = vpow.pop %v3046
    %v3048 = vadd.f32 %v3033, 1.0
    %v3049 = vadd.f32 %v3035, 1.0
    %v3050 = vadd.f32 %v3037, 1.0
    %v3051 = vadd.f32 %v3039, 1.0
    %v3052 = vadd.f32 %v3041, 1.0
    %v3053 = vadd.f32 %v3043, 1.0
    %v3054 = vadd.f32 %v3045, 1.0
    %v3055 = vadd.f32 %v3047, 1.0
    %v3056 = vrcp.pop %v3048
    %v3057 = vmul.f32 1.0, %v3056
    %v3058 = vrcp.pop %v3049
    %v3059 = vmul.f32 1.0, %v3058
    %v3060 = vrcp.pop %v3050
    %v3061 = vmul.f32 1.0, %v3060
    %v3062 = vrcp.pop %v3051
    %v3063 = vmul.f32 1.0, %v3062
    %v3064 = vrcp.pop %v3052
    %v3065 = vmul.f32 1.0, %v3064
    %v3066 = vrcp.pop %v3053
    %v3067 = vmul.f32 1.0, %v3066
    %v3068 = vrcp.pop %v3054
    %v3069 = vmul.f32 1.0, %v3068
    %v3070 = vrcp.pop %v3055
    %v3071 = vmul.f32 1.0, %v3070
    %v3072 = vld [vmem:[%s16] sm:$0xf]
    %v3073 = vld [vmem:[%s16 + $0x4] sm:$0xf]
    %v3074 = vld [vmem:[%s16 + $0x8] sm:$0xf]
    %v3075 = vld [vmem:[%s16 + $0xc] sm:$0xf]
    %v3076 = vld [vmem:[%s17] sm:$0x1]
    %v3078 = vlaneseq
    %v3079 = vshrl.u32 %v3078, 7
    %v3080 = vsub.s32 0, %v3079
    %v3081 = vrot.slane %v3076, %v3080
    %v3087 = vunpack.c.l.b16 %v3072
    %v3088 = vunpack.c.l.b16 %v3073
    %v3089 = vunpack.c.l.b16 %v3074
    %v3090 = vunpack.c.l.b16 %v3075
    %v3091 = vpack.c.b16 %v3088, %v3087
    %v3092 = vpack.c.b16 %v3090, %v3089
    %v3096 = vsel %vm1667, %v1630, 0
    %3098 = vmatprep.subr.bf16.mxu0 0
    %3099 = vmatpush1.bf16.msra.mxu0 0
    %3100 = vmatprep.subr.bf16.mxu0 0
    %3101 = vmatpush1.bf16.msra.mxu0 0
    %3102 = vmatprep.subr.bf16.mxu0 0
    %3103 = vmatpush1.bf16.msra.mxu0 0
    %3104 = vmatprep.subr.bf16.mxu0 0
    %3105 = vmatpush1.bf16.msra.mxu0 0
    %3106 = vmatprep.subr.bf16.mxu0 0
    %3107 = vmatpush1.bf16.msra.mxu0 0
    %3108 = vmatprep.subr.bf16.mxu0 0
    %3109 = vmatpush1.bf16.msra.mxu0 0
    %3110 = vmatprep.subr.bf16.mxu0 0
    %3111 = vmatpush1.bf16.msra.mxu0 %v3092
    %3112 = vmatprep.subr.bf16.mxu0 0
    %3113 = vmatpush1.bf16.msra.mxu0 %v3091
    %3114 = vmatprep.subr.bf16.mxu0 0
    %3115 = vmatpush2.bf16.msra.mxu0 0
    %3116 = vmatprep.subr.bf16.mxu0 0
    %3117 = vmatpush2.bf16.msra.mxu0 0
    %3118 = vmatprep.subr.bf16.mxu0 0
    %3119 = vmatpush2.bf16.msra.mxu0 0
    %3120 = vmatprep.subr.bf16.mxu0 0
    %3121 = vmatpush2.bf16.msra.mxu0 0
    %3122 = vmatprep.subr.bf16.mxu0 0
    %3123 = vmatpush2.bf16.msra.mxu0 0
    %3124 = vmatprep.subr.bf16.mxu0 0
    %3125 = vmatpush2.bf16.msra.mxu0 0
    %3126 = vmatprep.subr.bf16.mxu0 0
    %3127 = vmatpush2.bf16.msra.mxu0 0
    %3128 = vmatprep.subr.bf16.mxu0 0
    %3129 = vmatpush2.bf16.msra.mxu0 0
    %3130 = vmatprep.mubr.bf16.mxu0 0
    %3131 = vmatmul.mubr.bf16.gmra.mxu0 %v3096
    %v3132 = vpop.f32.mrf.mxu0
    %v3133 = vadd.f32 %v3081, %v3132
    %v3134 = vpop.f32.mrf.mxu0
    %v3135 = vpop.f32.mrf.mxu0
    %v3136 = vpop.f32.mrf.mxu0
    %3137 = vdwg.mxu0
    %v3138 = vmax.f32 %v3133, 0.0
    %v3139 = vpack.c.bf16 %v3138, %v3138
    %v3140 = vld [vmem:[%s18] sm:$0xf]
    %v3141 = vld [vmem:[%s18 + $0x4] sm:$0xf]
    %v3142 = vld [vmem:[%s18 + $0x8] sm:$0xf]
    %v3143 = vld [vmem:[%s18 + $0xc] sm:$0xf]
    %v3144 = vld [vmem:[%s18 + $0x10] sm:$0xf]
    %v3145 = vld [vmem:[%s18 + $0x14] sm:$0xf]
    %v3146 = vld [vmem:[%s18 + $0x18] sm:$0xf]
    %v3147 = vld [vmem:[%s18 + $0x1c] sm:$0xf]
    %v3148 = vld [vmem:[%s19] sm:$0x1]
    %v3150 = vlaneseq
    %v3151 = vshrl.u32 %v3150, 7
    %v3152 = vsub.s32 0, %v3151
    %v3153 = vrot.slane %v3148, %v3152
    %v3163 = vunpack.c.l.b16 %v3140
    %v3164 = vunpack.c.l.b16 %v3141
    %v3165 = vunpack.c.l.b16 %v3142
    %v3166 = vunpack.c.l.b16 %v3143
    %v3167 = vunpack.c.l.b16 %v3144
    %v3168 = vunpack.c.l.b16 %v3145
    %v3169 = vunpack.c.l.b16 %v3146
    %v3170 = vunpack.c.l.b16 %v3147
    %v3171 = vpack.c.b16 %v3164, %v3163
    %v3172 = vpack.c.b16 %v3166, %v3165
    %v3173 = vpack.c.b16 %v3168, %v3167
    %v3174 = vpack.c.b16 %v3170, %v3169
    %vm3179 = vcmask 523264
    %v3181 = vsel %vm3179, %v3139, 0
    %3183 = vmatprep.subr.bf16.mxu0 0
    %3184 = vmatpush1.bf16.msra.mxu0 0
    %3185 = vmatprep.subr.bf16.mxu0 0
    %3186 = vmatpush1.bf16.msra.mxu0 0
    %3187 = vmatprep.subr.bf16.mxu0 0
    %3188 = vmatpush1.bf16.msra.mxu0 0
    %3189 = vmatprep.subr.bf16.mxu0 0
    %3190 = vmatpush1.bf16.msra.mxu0 0
    %3191 = vmatprep.subr.bf16.mxu0 0
    %3192 = vmatpush1.bf16.msra.mxu0 %v3174
    %3193 = vmatprep.subr.bf16.mxu0 0
    %3194 = vmatpush1.bf16.msra.mxu0 %v3173
    %3195 = vmatprep.subr.bf16.mxu0 0
    %3196 = vmatpush1.bf16.msra.mxu0 %v3172
    %3197 = vmatprep.subr.bf16.mxu0 0
    %3198 = vmatpush1.bf16.msra.mxu0 %v3171
    %3199 = vmatprep.subr.bf16.mxu0 0
    %3200 = vmatpush2.bf16.msra.mxu0 0
    %3201 = vmatprep.subr.bf16.mxu0 0
    %3202 = vmatpush2.bf16.msra.mxu0 0
    %3203 = vmatprep.subr.bf16.mxu0 0
    %3204 = vmatpush2.bf16.msra.mxu0 0
    %3205 = vmatprep.subr.bf16.mxu0 0
    %3206 = vmatpush2.bf16.msra.mxu0 0
    %3207 = vmatprep.subr.bf16.mxu0 0
    %3208 = vmatpush2.bf16.msra.mxu0 0
    %3209 = vmatprep.subr.bf16.mxu0 0
    %3210 = vmatpush2.bf16.msra.mxu0 0
    %3211 = vmatprep.subr.bf16.mxu0 0
    %3212 = vmatpush2.bf16.msra.mxu0 0
    %3213 = vmatprep.subr.bf16.mxu0 0
    %3214 = vmatpush2.bf16.msra.mxu0 0
    %3215 = vmatprep.mubr.bf16.mxu0 0
    %3216 = vmatmul.mubr.bf16.gmra.mxu0 %v3181
    %v3217 = vpop.f32.mrf.mxu0
    %v3218 = vadd.f32 %v3153, %v3217
    %v3219 = vpop.f32.mrf.mxu0
    %v3220 = vpop.f32.mrf.mxu0
    %v3221 = vpop.f32.mrf.mxu0
    %3222 = vdwg.mxu0
    %v3223 = vxor.u32 %v3218, 2147483648
    %v3224 = vmul.f32 %v3223, 1.442695
    %v3225 = vpow.pop %v3224
    %v3226 = vadd.f32 %v3225, 1.0
    %v3227 = vrcp.pop %v3226
    %v3228 = vmul.f32 1.0, %v3227
    %v3237 = vcombine.low %v3057, %v3059
    %v3238 = vcombine.low %v3061, %v3063
    %v3240 = vunpack.c.l.s4 1983009808
    %v3241 = vunpack.c.0.s8 %v3240
    %v3242 = vlaneseq
    %v3243 = vshrl.u32 %v3242, 7
    %v3244 = vsub.s32 %v3241, %v3243
    %v3245 = vrot.slane %v3237, %v3244
    %v3247 = vunpack.c.l.s4 1983009808
    %v3248 = vunpack.c.0.s8 %v3247
    %v3249 = vlaneseq
    %v3250 = vshrl.u32 %v3249, 7
    %v3251 = vsub.s32 %v3248, %v3250
    %v3252 = vrot.slane %v3238, %v3251
    %v3253 = vcombine.low %v3245, %v3252
    %v3254 = vcombine.low %v3065, %v3067
    %v3255 = vcombine.low %v3069, %v3071
    %v3257 = vunpack.c.l.s4 1983009808
    %v3258 = vunpack.c.0.s8 %v3257
    %v3259 = vlaneseq
    %v3260 = vshrl.u32 %v3259, 7
    %v3261 = vsub.s32 %v3258, %v3260
    %v3262 = vrot.slane %v3254, %v3261
    %v3264 = vunpack.c.l.s4 1983009808
    %v3265 = vunpack.c.0.s8 %v3264
    %v3266 = vlaneseq
    %v3267 = vshrl.u32 %v3266, 7
    %v3268 = vsub.s32 %v3265, %v3267
    %v3269 = vrot.slane %v3255, %v3268
    %v3270 = vcombine.low %v3262, %v3269
    %3273 = vst [vmem:[%s20] sm:$0xff] %v3253
    %3274 = vst [vmem:[%s20 + $0x8] sm:$0xff] %v3270
    %3275 = vst [vmem:[#allocation10] sm:$0x3] %v3228
    %vm3276 = vcmask 517120
    %3277 = vst.msk [vmem:[%s22] sm:$0x3] %vm3276, %v1609
    // Predicated region
    $region98: #{dvcca_forward.1} parent=1 // pred_check
      _
    $region99: #{dvcca_forward.1} parent=1 // pred_check_branch
      %3279 = sbr.rel (0) target = $region101
    $region100: #{dvcca_forward.1} parent=1 // pred_region
      _
    $region101: #{dvcca_forward.1} parent=1 // pred_fallthru
      _
    // Predicated region
    $region102: #{dvcca_forward.1} parent=1 // pred_check
      _
    $region103: #{dvcca_forward.1} parent=1 // pred_check_branch
      %3281 = sbr.rel (0) target = $region105
    $region104: #{dvcca_forward.1} parent=1 // pred_region
      %s3283 = ssub.s32 32, 32
      %3284 = vsyncadd [#allocation4], %s3283
      %s3286 = sshll.u32 [#allocation10], 4
      %s3287 = int_to_ptr.vmem [resolvable:$true] %s3286
      %3289 = dma.vmem_to_hbm [thread:$0]  %s3287, 32, %s21, [#allocation4]
    $region105: #{dvcca_forward.1} parent=1 // pred_fallthru
      _
    // Predicated region
    $region106: #{dvcca_forward.1} parent=1 // pred_check
      _
    $region107: #{dvcca_forward.1} parent=1 // pred_check_branch
      %3291 = sbr.rel (0) target = $region109
    $region108: #{dvcca_forward.1} parent=1 // pred_region
      _
    $region109: #{dvcca_forward.1} parent=1 // pred_fallthru
      _
    // Predicated region
    $region110: #{dvcca_forward.1} parent=1 // pred_check
      _
    $region111: #{dvcca_forward.1} parent=1 // pred_check_branch
      %3293 = sbr.rel (0) target = $region113
    $region112: #{dvcca_forward.1} parent=1 // pred_region
      _
    $region113: #{dvcca_forward.1} parent=1 // pred_fallthru
      _
    // Predicated region
    $region114: #{dvcca_forward.1} parent=1 // pred_check
      _
    $region115: #{dvcca_forward.1} parent=1 // pred_check_branch
      %3295 = sbr.rel (0) target = $region117
    $region116: #{dvcca_forward.1} parent=1 // pred_region
      %3296 = dma.done [#allocation4], 32
    $region117: #{dvcca_forward.1} parent=1 // pred_fallthru
      _
    // Predicated region
    $region118: #{dvcca_forward.1} parent=1 // pred_check
      _
    $region119: #{dvcca_forward.1} parent=1 // pred_check_branch
      %3298 = sbr.rel (0) target = $region121
    $region120: #{dvcca_forward.1} parent=1 // pred_region
      _
    $region121: #{dvcca_forward.1} parent=1 // pred_fallthru
      _
    %3299 = vsyncpa [#allocation3], 1
    %3300 = vsyncpa [#allocation6], 1
    %3301 = vsyncpa [#allocation9], 1
    %3302 = vsyncpa [#allocation4], 1

</llo_original>
